<compile_context>
chip_gen: v6e
topology: v6e:2x2x1
jax: 0.10.0
libtpu: 0.0.40
codegen_flags: <defaults>
</compile_context>

<pallas_src>
import functools
import math

import jax
import jax.numpy as jnp
from jax.experimental import pallas as pl
from jax.experimental.pallas import tpu as pltpu


# ----------------------------- fused kernel -------------------------------- #

def _det_encoder_kernel(x_ref, y_ref, xt_ref,
                        w_din_ref, w1y_ref, w2_ref, b_misc_ref,
                        attn_w_ref, attn_vec_ref,
                        o_ref, *, num_layers, batch, n_ctx, n_tgt, latent_dim):
    f32 = jnp.float32

    x = x_ref[...]     # (B*Nc, Din)
    y = y_ref[...]     # (B*Nc, C)
    xt = xt_ref[...]   # (B*Nt, Din)

    # ---- set encoder MLP(set_dim, D, D, 2); concat(x, y) folded into 2 dots,
    #      computed batch-flattened.
    h = (jnp.dot(x, w_din_ref[0], preferred_element_type=f32)
         + jnp.dot(y, w1y_ref[...], preferred_element_type=f32)
         + b_misc_ref[0])
    h = jnp.maximum(h, 0.0)
    s_all = jnp.dot(h, w2_ref[...], preferred_element_type=f32) + b_misc_ref[1]

    # ---- context / target projections (single linear layers), flattened.
    xc_all = jnp.dot(x, w_din_ref[1], preferred_element_type=f32) + b_misc_ref[2]
    xq_all = jnp.dot(xt, w_din_ref[2], preferred_element_type=f32) + b_misc_ref[3]

    def attention(k_in, v_in, q_in, stack, l):
        # attn_w_ref:   (2, L, 3, D, D) = [Wq*scale, Wk, Wv@Wo]
        # attn_vec_ref: (2, L, 5, D)    = [bq*scale, bk, bv@Wo+bo, gamma, beta]
        q = (jnp.dot(q_in, attn_w_ref[stack, l, 0], preferred_element_type=f32)
             + attn_vec_ref[stack, l, 0:1])
        k = (jnp.dot(k_in, attn_w_ref[stack, l, 1], preferred_element_type=f32)
             + attn_vec_ref[stack, l, 1:2])
        vp = (jnp.dot(v_in, attn_w_ref[stack, l, 2], preferred_element_type=f32)
              + attn_vec_ref[stack, l, 2:3])
        # (Nq, Nk) without materializing k.T; softmax scale already in Wq/bq.
        scores = jax.lax.dot_general(q, k, (((1,), (1,)), ((), ())),
                                     preferred_element_type=f32)
        scores = scores - jnp.max(scores, axis=-1, keepdims=True)
        p = jnp.exp(scores)
        p = p * pl.reciprocal(jnp.sum(p, axis=-1, keepdims=True), approx=True)
        out = jnp.dot(p, vp, preferred_element_type=f32)
        # residual to the query input + LayerNorm(eps=1e-5)
        res = out + q_in
        mu = jnp.mean(res, axis=-1, keepdims=True)
        var = jnp.mean((res - mu) ** 2, axis=-1, keepdims=True)
        return ((res - mu) * jax.lax.rsqrt(var + 1e-5)
                * attn_vec_ref[stack, l, 3:4] + attn_vec_ref[stack, l, 4:5])

    outs = []
    for b in range(batch):                       # unrolled (B is tiny, static)
        s = s_all[b * n_ctx:(b + 1) * n_ctx]     # (Nc, D)
        for l in range(num_layers):              # self-attention stack
            s = attention(s, s, s, 0, l)
        xc = xc_all[b * n_ctx:(b + 1) * n_ctx]   # (Nc, D)
        xq = xq_all[b * n_tgt:(b + 1) * n_tgt]   # (Nt, D)
        for l in range(num_layers):              # cross-attention stack
            xq = attention(xc, s, xq, 1, l)
        outs.append(xq)

    o_ref[...] = jnp.concatenate(outs, axis=0)   # (B*Nt, D), single store


# ------------------------------ wrapper ------------------------------------ #

def det_encoder_forward(packed, x, y, x_target, *, num_layers=2):
    B, Nc, Din = x.shape
    C = y.shape[-1]
    Nt = x_target.shape[1]
    D = packed["w2"].shape[1]

    # Batch-flatten on the host (free reshapes) so the kernel is purely 2-D.
    x2 = x.reshape(B * Nc, Din)
    y2 = y.reshape(B * Nc, C)
    xt2 = x_target.reshape(B * Nt, Din)

    kernel = functools.partial(_det_encoder_kernel, num_layers=num_layers,
                               batch=B, n_ctx=Nc, n_tgt=Nt, latent_dim=D)

    args = (x2, y2, xt2,
            packed["w_din"], packed["w1y"], packed["w2"], packed["b_misc"],
            packed["attn_w"], packed["attn_vec"])

    vmem = pl.BlockSpec(memory_space=pltpu.MemorySpace.VMEM)
    out = pl.pallas_call(
        kernel,
        out_shape=jax.ShapeDtypeStruct((B * Nt, D), jnp.float32),
        in_specs=[vmem] * len(args),
        out_specs=vmem,
    )(*args)
    return out.reshape(B, Nt, D)


# ---------------------------- parameter init -------------------------------- #

def _init_linear(key, din, dout):
    kw, kb = jax.random.split(key)
    lim = 1.0 / math.sqrt(float(din))
    w = jax.random.uniform(kw, (din, dout), jnp.float32, -lim, lim)
    b = jax.random.uniform(kb, (1, dout), jnp.float32, -lim, lim)
    return w, b


def _init_attention_stack(key, dim, num_layers):
    ws, vs = [], []
    for _ in range(num_layers):
        key, k0, k1, k2, k3 = jax.random.split(key, 5)
        wq, bq = _init_linear(k0, dim, dim)
        wk, bk = _init_linear(k1, dim, dim)
        wv, bv = _init_linear(k2, dim, dim)
        wo, bo = _init_linear(k3, dim, dim)
        ws.append(jnp.stack([wq, wk, wv, wo]))                       # (4, D, D)
        vs.append(jnp.stack([bq[0], bk[0], bv[0], bo[0],
                             jnp.ones((dim,), jnp.float32),
                             jnp.zeros((dim,), jnp.float32)]))       # (6, D)
    return jnp.stack(ws), jnp.stack(vs)   # (L, 4, D, D), (L, 6, D)


def init_det_encoder(key, input_dim, num_classes, latent_dim, num_layers=2):
    """Original (unfolded, PyTorch-layout) parameters; used by the reference."""
    set_dim = input_dim + num_classes  # label_embedder=False
    keys = jax.random.split(key, 5)
    params = {}
    k1, k2 = jax.random.split(keys[0])
    params["set_enc_w1"], params["set_enc_b1"] = _init_linear(k1, set_dim, latent_dim)
    params["set_enc_w2"], params["set_enc_b2"] = _init_linear(k2, latent_dim, latent_dim)
    params["ctx_w"], params["ctx_b"] = _init_linear(keys[1], input_dim, latent_dim)
    params["tgt_w"], params["tgt_b"] = _init_linear(keys[2], input_dim, latent_dim)
    params["sa_w"], params["sa_v"] = _init_attention_stack(keys[3], latent_dim, num_layers)
    params["xa_w"], params["xa_v"] = _init_attention_stack(keys[4], latent_dim, num_layers)
    return params


def pack_params(params, input_dim, latent_dim):
    """One-time (init-time) packing & algebraic folding for the fused kernel."""
    scale = 1.0 / math.sqrt(float(latent_dim))
    w1 = params["set_enc_w1"]
    w1x, w1y = w1[:input_dim], w1[input_dim:]

    def fold(w_stack, v_stack):
        # w_stack: (L,4,D,D)=[Wq,Wk,Wv,Wo]; v_stack: (L,6,D)=[bq,bk,bv,bo,g,b]
        wq = w_stack[:, 0] * scale
        bq = v_stack[:, 0] * scale
        wk = w_stack[:, 1]
        bk = v_stack[:, 1]
        wvo = jnp.einsum("lij,ljk->lik", w_stack[:, 2], w_stack[:, 3])
        bvo = jnp.einsum("lj,ljk->lk", v_stack[:, 2], w_stack[:, 3]) + v_stack[:, 3]
        w = jnp.stack([wq, wk, wvo], axis=1)                       # (L, 3, D, D)
        vec = jnp.stack([bq, bk, bvo, v_stack[:, 4], v_stack[:, 5]], axis=1)  # (L,5,D)
        return w, vec

    sa_w, sa_vec = fold(params["sa_w"], params["sa_v"])
    xa_w, xa_vec = fold(params["xa_w"], params["xa_v"])

    return {
        "w_din": jnp.stack([w1x, params["ctx_w"], params["tgt_w"]]),   # (3, Din, D)
        "w1y": w1y,                                                    # (C, D)
        "w2": params["set_enc_w2"],                                    # (D, D)
        "b_misc": jnp.stack([params["set_enc_b1"], params["set_enc_b2"],
                             params["ctx_b"], params["tgt_b"]]),       # (4, 1, D)
        "attn_w": jnp.stack([sa_w, xa_w]),                             # (2, L, 3, D, D)
        "attn_vec": jnp.stack([sa_vec, xa_vec]),                       # (2, L, 5, D)
    }


# ----------------------- pure-JAX reference (check) ------------------------- #

def _ref_forward(params, x, y, x_target, num_layers=2):
    d = jnp.concatenate([x, y], axis=-1)
    h = jnp.maximum(d @ params["set_enc_w1"] + params["set_enc_b1"], 0.0)
    s = h @ params["set_enc_w2"] + params["set_enc_b2"]

    def attn(k_in, v_in, q_in, w, vec):
        q = q_in @ w[0] + vec[0]
        k = k_in @ w[1] + vec[1]
        v = v_in @ w[2] + vec[2]
        sc = jnp.einsum("bqd,bkd->bqk", q, k) / math.sqrt(q.shape[-1])
        p = jax.nn.softmax(sc, axis=-1)
        out = jnp.einsum("bqk,bkd->bqd", p, v) @ w[3] + vec[3]
        res = out + q_in
        mu = res.mean(-1, keepdims=True)
        var = ((res - mu) ** 2).mean(-1, keepdims=True)
        return (res - mu) * jax.lax.rsqrt(var + 1e-5) * vec[4] + vec[5]

    for l in range(num_layers):
        s = attn(s, s, s, params["sa_w"][l], params["sa_v"][l])
    xc = x @ params["ctx_w"] + params["ctx_b"]
    xt = x_target @ params["tgt_w"] + params["tgt_b"]
    for l in range(num_layers):
        xt = attn(xc, s, xt, params["xa_w"][l], params["xa_v"][l])
    return xt


# -------------------------------- main -------------------------------------- #

if __name__ == "__main__":
    B, N_CTX, N_TGT = 2, 8, 8
    INPUT_DIM, NUM_CLASSES, LATENT, NUM_LAYERS = 4, 3, 32, 2

    key = jax.random.PRNGKey(0)
    k_params, k_x, k_y, k_xt = jax.random.split(key, 4)

    params = init_det_encoder(k_params, INPUT_DIM, NUM_CLASSES, LATENT, NUM_LAYERS)
    packed = pack_params(params, INPUT_DIM, LATENT)

    x = jax.random.normal(k_x, (B, N_CTX, INPUT_DIM), jnp.float32)
    labels = jax.random.randint(k_y, (B, N_CTX), 0, NUM_CLASSES)
    y = jax.nn.one_hot(labels, NUM_CLASSES, dtype=jnp.float32)
    x_target = jax.random.normal(k_xt, (B, N_TGT, INPUT_DIM), jnp.float32)

    out = det_encoder_forward(packed, x, y, x_target, num_layers=NUM_LAYERS)
    out = jax.block_until_ready(out)
    assert out.shape == (B, N_TGT, LATENT), out.shape

    ref = _ref_forward(params, x, y, x_target, NUM_LAYERS)
    max_err = float(jnp.max(jnp.abs(out - ref)))
    assert max_err < 1e-2, f"max abs err vs reference: {max_err}"
    print("KERNEL_OK")
</pallas_src>

<mosaic_0001>
module attributes {stable_mosaic.version = 11 : i64} {
  func.func @_det_encoder_kernel(%arg0: memref<16x4xf32, #tpu.memory_space<vmem>>, %arg1: memref<16x3xf32, #tpu.memory_space<vmem>>, %arg2: memref<16x4xf32, #tpu.memory_space<vmem>>, %arg3: memref<3x4x32xf32, #tpu.memory_space<vmem>>, %arg4: memref<3x32xf32, #tpu.memory_space<vmem>>, %arg5: memref<32x32xf32, #tpu.memory_space<vmem>>, %arg6: memref<4x1x32xf32, #tpu.memory_space<vmem>>, %arg7: memref<2x2x3x32x32xf32, #tpu.memory_space<vmem>>, %arg8: memref<2x2x5x32xf32, #tpu.memory_space<vmem>>, %arg9: memref<16x32xf32, #tpu.memory_space<vmem>>) attributes {dimension_semantics = [], scalar_prefetch = 0 : i64, scratch_operands = 0 : i64, tpu.core_type = #tpu.core_type<tc>} {
    %c0 = arith.constant 0 : index
    %c0_0 = arith.constant 0 : index
    %0 = vector.load %arg0[%c0, %c0_0] : memref<16x4xf32, #tpu.memory_space<vmem>>, vector<16x4xf32>
    %c0_1 = arith.constant 0 : index
    %c0_2 = arith.constant 0 : index
    %1 = vector.load %arg1[%c0_1, %c0_2] : memref<16x3xf32, #tpu.memory_space<vmem>>, vector<16x3xf32>
    %c0_3 = arith.constant 0 : index
    %c0_4 = arith.constant 0 : index
    %2 = vector.load %arg2[%c0_3, %c0_4] : memref<16x4xf32, #tpu.memory_space<vmem>>, vector<16x4xf32>
    %c0_5 = arith.constant 0 : index
    %c0_6 = arith.constant 0 : index
    %c0_7 = arith.constant 0 : index
    %3 = vector.load %arg3[%c0_5, %c0_6, %c0_7] : memref<3x4x32xf32, #tpu.memory_space<vmem>>, vector<1x4x32xf32>
    %4 = vector.shape_cast %3 : vector<1x4x32xf32> to vector<4x32xf32>
    %cst = arith.constant dense<0.000000e+00> : vector<16x32xf32>
    %5 = tpu.matmul %0, %4, %cst {dimension_numbers = #tpu.dot_dimension_numbers<[1], [0], [0], [1], [0, 0, 1, 1], [], []>} : vector<16x4xf32>, vector<4x32xf32>, vector<16x32xf32> -> vector<16x32xf32>
    %c0_8 = arith.constant 0 : index
    %c0_9 = arith.constant 0 : index
    %6 = vector.load %arg4[%c0_8, %c0_9] : memref<3x32xf32, #tpu.memory_space<vmem>>, vector<3x32xf32>
    %cst_10 = arith.constant dense<0.000000e+00> : vector<16x32xf32>
    %7 = tpu.matmul %1, %6, %cst_10 {dimension_numbers = #tpu.dot_dimension_numbers<[1], [0], [0], [1], [0, 0, 1, 1], [], []>} : vector<16x3xf32>, vector<3x32xf32>, vector<16x32xf32> -> vector<16x32xf32>
    %8 = arith.addf %5, %7 : vector<16x32xf32>
    %c0_11 = arith.constant 0 : index
    %c0_12 = arith.constant 0 : index
    %c0_13 = arith.constant 0 : index
    %9 = vector.load %arg6[%c0_11, %c0_12, %c0_13] : memref<4x1x32xf32, #tpu.memory_space<vmem>>, vector<1x1x32xf32>
    %10 = vector.shape_cast %9 : vector<1x1x32xf32> to vector<1x32xf32>
    %11 = vector.broadcast %10 : vector<1x32xf32> to vector<16x32xf32>
    %12 = arith.addf %8, %11 : vector<16x32xf32>
    %cst_14 = arith.constant 0.000000e+00 : f32
    %13 = vector.broadcast %cst_14 : f32 to vector<16x32xf32>
    %14 = arith.maximumf %12, %13 : vector<16x32xf32>
    %c0_15 = arith.constant 0 : index
    %c0_16 = arith.constant 0 : index
    %15 = vector.load %arg5[%c0_15, %c0_16] : memref<32x32xf32, #tpu.memory_space<vmem>>, vector<32x32xf32>
    %cst_17 = arith.constant dense<0.000000e+00> : vector<16x32xf32>
    %16 = tpu.matmul %14, %15, %cst_17 {dimension_numbers = #tpu.dot_dimension_numbers<[1], [0], [0], [1], [0, 0, 1, 1], [], []>} : vector<16x32xf32>, vector<32x32xf32>, vector<16x32xf32> -> vector<16x32xf32>
    %c1 = arith.constant 1 : index
    %c0_18 = arith.constant 0 : index
    %c0_19 = arith.constant 0 : index
    %17 = vector.load %arg6[%c1, %c0_18, %c0_19] : memref<4x1x32xf32, #tpu.memory_space<vmem>>, vector<1x1x32xf32>
    %18 = vector.shape_cast %17 : vector<1x1x32xf32> to vector<1x32xf32>
    %19 = vector.broadcast %18 : vector<1x32xf32> to vector<16x32xf32>
    %20 = arith.addf %16, %19 : vector<16x32xf32>
    %c1_20 = arith.constant 1 : index
    %c0_21 = arith.constant 0 : index
    %c0_22 = arith.constant 0 : index
    %21 = vector.load %arg3[%c1_20, %c0_21, %c0_22] : memref<3x4x32xf32, #tpu.memory_space<vmem>>, vector<1x4x32xf32>
    %22 = vector.shape_cast %21 : vector<1x4x32xf32> to vector<4x32xf32>
    %cst_23 = arith.constant dense<0.000000e+00> : vector<16x32xf32>
    %23 = tpu.matmul %0, %22, %cst_23 {dimension_numbers = #tpu.dot_dimension_numbers<[1], [0], [0], [1], [0, 0, 1, 1], [], []>} : vector<16x4xf32>, vector<4x32xf32>, vector<16x32xf32> -> vector<16x32xf32>
    %c2 = arith.constant 2 : index
    %c0_24 = arith.constant 0 : index
    %c0_25 = arith.constant 0 : index
    %24 = vector.load %arg6[%c2, %c0_24, %c0_25] : memref<4x1x32xf32, #tpu.memory_space<vmem>>, vector<1x1x32xf32>
    %25 = vector.shape_cast %24 : vector<1x1x32xf32> to vector<1x32xf32>
    %26 = vector.broadcast %25 : vector<1x32xf32> to vector<16x32xf32>
    %27 = arith.addf %23, %26 : vector<16x32xf32>
    %c2_26 = arith.constant 2 : index
    %c0_27 = arith.constant 0 : index
    %c0_28 = arith.constant 0 : index
    %28 = vector.load %arg3[%c2_26, %c0_27, %c0_28] : memref<3x4x32xf32, #tpu.memory_space<vmem>>, vector<1x4x32xf32>
    %29 = vector.shape_cast %28 : vector<1x4x32xf32> to vector<4x32xf32>
    %cst_29 = arith.constant dense<0.000000e+00> : vector<16x32xf32>
    %30 = tpu.matmul %2, %29, %cst_29 {dimension_numbers = #tpu.dot_dimension_numbers<[1], [0], [0], [1], [0, 0, 1, 1], [], []>} : vector<16x4xf32>, vector<4x32xf32>, vector<16x32xf32> -> vector<16x32xf32>
    %c3 = arith.constant 3 : index
    %c0_30 = arith.constant 0 : index
    %c0_31 = arith.constant 0 : index
    %31 = vector.load %arg6[%c3, %c0_30, %c0_31] : memref<4x1x32xf32, #tpu.memory_space<vmem>>, vector<1x1x32xf32>
    %32 = vector.shape_cast %31 : vector<1x1x32xf32> to vector<1x32xf32>
    %33 = vector.broadcast %32 : vector<1x32xf32> to vector<16x32xf32>
    %34 = arith.addf %30, %33 : vector<16x32xf32>
    %35 = vector.extract_strided_slice %20 {offsets = [0, 0], sizes = [8, 32], strides = [1, 1]} : vector<16x32xf32> to vector<8x32xf32>
    %c0_32 = arith.constant 0 : index
    %c0_33 = arith.constant 0 : index
    %c0_34 = arith.constant 0 : index
    %c0_35 = arith.constant 0 : index
    %c0_36 = arith.constant 0 : index
    %36 = vector.load %arg7[%c0_32, %c0_33, %c0_34, %c0_35, %c0_36] : memref<2x2x3x32x32xf32, #tpu.memory_space<vmem>>, vector<1x1x1x32x32xf32>
    %37 = vector.shape_cast %36 : vector<1x1x1x32x32xf32> to vector<32x32xf32>
    %cst_37 = arith.constant dense<0.000000e+00> : vector<8x32xf32>
    %38 = tpu.matmul %35, %37, %cst_37 {dimension_numbers = #tpu.dot_dimension_numbers<[1], [0], [0], [1], [0, 0, 1, 1], [], []>} : vector<8x32xf32>, vector<32x32xf32>, vector<8x32xf32> -> vector<8x32xf32>
    %c0_38 = arith.constant 0 : index
    %c0_39 = arith.constant 0 : index
    %c0_40 = arith.constant 0 : index
    %c0_41 = arith.constant 0 : index
    %39 = vector.load %arg8[%c0_38, %c0_39, %c0_40, %c0_41] : memref<2x2x5x32xf32, #tpu.memory_space<vmem>>, vector<1x1x1x32xf32>
    %40 = vector.shape_cast %39 : vector<1x1x1x32xf32> to vector<1x32xf32>
    %41 = vector.broadcast %40 : vector<1x32xf32> to vector<8x32xf32>
    %42 = arith.addf %38, %41 : vector<8x32xf32>
    %c0_42 = arith.constant 0 : index
    %c0_43 = arith.constant 0 : index
    %c1_44 = arith.constant 1 : index
    %c0_45 = arith.constant 0 : index
    %c0_46 = arith.constant 0 : index
    %43 = vector.load %arg7[%c0_42, %c0_43, %c1_44, %c0_45, %c0_46] : memref<2x2x3x32x32xf32, #tpu.memory_space<vmem>>, vector<1x1x1x32x32xf32>
    %44 = vector.shape_cast %43 : vector<1x1x1x32x32xf32> to vector<32x32xf32>
    %cst_47 = arith.constant dense<0.000000e+00> : vector<8x32xf32>
    %45 = tpu.matmul %35, %44, %cst_47 {dimension_numbers = #tpu.dot_dimension_numbers<[1], [0], [0], [1], [0, 0, 1, 1], [], []>} : vector<8x32xf32>, vector<32x32xf32>, vector<8x32xf32> -> vector<8x32xf32>
    %c0_48 = arith.constant 0 : index
    %c0_49 = arith.constant 0 : index
    %c1_50 = arith.constant 1 : index
    %c0_51 = arith.constant 0 : index
    %46 = vector.load %arg8[%c0_48, %c0_49, %c1_50, %c0_51] : memref<2x2x5x32xf32, #tpu.memory_space<vmem>>, vector<1x1x1x32xf32>
    %47 = vector.shape_cast %46 : vector<1x1x1x32xf32> to vector<1x32xf32>
    %48 = vector.broadcast %47 : vector<1x32xf32> to vector<8x32xf32>
    %49 = arith.addf %45, %48 : vector<8x32xf32>
    %c0_52 = arith.constant 0 : index
    %c0_53 = arith.constant 0 : index
    %c2_54 = arith.constant 2 : index
    %c0_55 = arith.constant 0 : index
    %c0_56 = arith.constant 0 : index
    %50 = vector.load %arg7[%c0_52, %c0_53, %c2_54, %c0_55, %c0_56] : memref<2x2x3x32x32xf32, #tpu.memory_space<vmem>>, vector<1x1x1x32x32xf32>
    %51 = vector.shape_cast %50 : vector<1x1x1x32x32xf32> to vector<32x32xf32>
    %cst_57 = arith.constant dense<0.000000e+00> : vector<8x32xf32>
    %52 = tpu.matmul %35, %51, %cst_57 {dimension_numbers = #tpu.dot_dimension_numbers<[1], [0], [0], [1], [0, 0, 1, 1], [], []>} : vector<8x32xf32>, vector<32x32xf32>, vector<8x32xf32> -> vector<8x32xf32>
    %c0_58 = arith.constant 0 : index
    %c0_59 = arith.constant 0 : index
    %c2_60 = arith.constant 2 : index
    %c0_61 = arith.constant 0 : index
    %53 = vector.load %arg8[%c0_58, %c0_59, %c2_60, %c0_61] : memref<2x2x5x32xf32, #tpu.memory_space<vmem>>, vector<1x1x1x32xf32>
    %54 = vector.shape_cast %53 : vector<1x1x1x32xf32> to vector<1x32xf32>
    %55 = vector.broadcast %54 : vector<1x32xf32> to vector<8x32xf32>
    %56 = arith.addf %52, %55 : vector<8x32xf32>
    %cst_62 = arith.constant dense<0.000000e+00> : vector<8x8xf32>
    %57 = tpu.matmul %42, %49, %cst_62 {dimension_numbers = #tpu.dot_dimension_numbers<[1], [1], [0], [0], [0, 0, 1, 0], [], []>} : vector<8x32xf32>, vector<8x32xf32>, vector<8x8xf32> -> vector<8x8xf32>
    %cst_63 = arith.constant dense<0xFF800000> : vector<8xf32>
    %58 = vector.multi_reduction <maximumf>, %57, %cst_63 [1] : vector<8x8xf32> to vector<8xf32>
    %59 = vector.shape_cast %58 : vector<8xf32> to vector<8x1xf32>
    %60 = vector.broadcast %59 : vector<8x1xf32> to vector<8x8xf32>
    %61 = arith.subf %57, %60 : vector<8x8xf32>
    %62 = math.exp %61 : vector<8x8xf32>
    %cst_64 = arith.constant dense<0.000000e+00> : vector<8xf32>
    %63 = vector.multi_reduction <add>, %62, %cst_64 [1] : vector<8x8xf32> to vector<8xf32>
    %64 = vector.shape_cast %63 : vector<8xf32> to vector<8x1xf32>
    %65 = tpu.reciprocal %64 {approx = true} : vector<8x1xf32> -> vector<8x1xf32>
    %66 = vector.broadcast %65 : vector<8x1xf32> to vector<8x8xf32>
    %67 = arith.mulf %62, %66 : vector<8x8xf32>
    %cst_65 = arith.constant dense<0.000000e+00> : vector<8x32xf32>
    %68 = tpu.matmul %67, %56, %cst_65 {dimension_numbers = #tpu.dot_dimension_numbers<[1], [0], [0], [1], [0, 0, 1, 1], [], []>} : vector<8x8xf32>, vector<8x32xf32>, vector<8x32xf32> -> vector<8x32xf32>
    %69 = arith.addf %68, %35 : vector<8x32xf32>
    %cst_66 = arith.constant dense<0.000000e+00> : vector<8xf32>
    %70 = vector.multi_reduction <add>, %69, %cst_66 [1] : vector<8x32xf32> to vector<8xf32>
    %71 = vector.shape_cast %70 : vector<8xf32> to vector<8x1xf32>
    %cst_67 = arith.constant 3.200000e+01 : f32
    %72 = vector.broadcast %cst_67 : f32 to vector<8x1xf32>
    %73 = arith.divf %71, %72 : vector<8x1xf32>
    %74 = vector.broadcast %73 : vector<8x1xf32> to vector<8x32xf32>
    %75 = arith.subf %69, %74 : vector<8x32xf32>
    %76 = arith.mulf %75, %75 : vector<8x32xf32>
    %cst_68 = arith.constant dense<0.000000e+00> : vector<8xf32>
    %77 = vector.multi_reduction <add>, %76, %cst_68 [1] : vector<8x32xf32> to vector<8xf32>
    %78 = vector.shape_cast %77 : vector<8xf32> to vector<8x1xf32>
    %cst_69 = arith.constant 3.200000e+01 : f32
    %79 = vector.broadcast %cst_69 : f32 to vector<8x1xf32>
    %80 = arith.divf %78, %79 : vector<8x1xf32>
    %81 = vector.broadcast %73 : vector<8x1xf32> to vector<8x32xf32>
    %82 = arith.subf %69, %81 : vector<8x32xf32>
    %cst_70 = arith.constant 9.99999974E-6 : f32
    %83 = vector.broadcast %cst_70 : f32 to vector<8x1xf32>
    %84 = arith.addf %80, %83 : vector<8x1xf32>
    %85 = math.rsqrt %84 : vector<8x1xf32>
    %86 = vector.broadcast %85 : vector<8x1xf32> to vector<8x32xf32>
    %87 = arith.mulf %82, %86 : vector<8x32xf32>
    %c0_71 = arith.constant 0 : index
    %c0_72 = arith.constant 0 : index
    %c3_73 = arith.constant 3 : index
    %c0_74 = arith.constant 0 : index
    %88 = vector.load %arg8[%c0_71, %c0_72, %c3_73, %c0_74] : memref<2x2x5x32xf32, #tpu.memory_space<vmem>>, vector<1x1x1x32xf32>
    %89 = vector.shape_cast %88 : vector<1x1x1x32xf32> to vector<1x32xf32>
    %90 = vector.broadcast %89 : vector<1x32xf32> to vector<8x32xf32>
    %91 = arith.mulf %87, %90 : vector<8x32xf32>
    %c0_75 = arith.constant 0 : index
    %c0_76 = arith.constant 0 : index
    %c4 = arith.constant 4 : index
    %c0_77 = arith.constant 0 : index
    %92 = vector.load %arg8[%c0_75, %c0_76, %c4, %c0_77] : memref<2x2x5x32xf32, #tpu.memory_space<vmem>>, vector<1x1x1x32xf32>
    %93 = vector.shape_cast %92 : vector<1x1x1x32xf32> to vector<1x32xf32>
    %94 = vector.broadcast %93 : vector<1x32xf32> to vector<8x32xf32>
    %95 = arith.addf %91, %94 : vector<8x32xf32>
    %c0_78 = arith.constant 0 : index
    %c1_79 = arith.constant 1 : index
    %c0_80 = arith.constant 0 : index
    %c0_81 = arith.constant 0 : index
    %c0_82 = arith.constant 0 : index
    %96 = vector.load %arg7[%c0_78, %c1_79, %c0_80, %c0_81, %c0_82] : memref<2x2x3x32x32xf32, #tpu.memory_space<vmem>>, vector<1x1x1x32x32xf32>
    %97 = vector.shape_cast %96 : vector<1x1x1x32x32xf32> to vector<32x32xf32>
    %cst_83 = arith.constant dense<0.000000e+00> : vector<8x32xf32>
    %98 = tpu.matmul %95, %97, %cst_83 {dimension_numbers = #tpu.dot_dimension_numbers<[1], [0], [0], [1], [0, 0, 1, 1], [], []>} : vector<8x32xf32>, vector<32x32xf32>, vector<8x32xf32> -> vector<8x32xf32>
    %c0_84 = arith.constant 0 : index
    %c1_85 = arith.constant 1 : index
    %c0_86 = arith.constant 0 : index
    %c0_87 = arith.constant 0 : index
    %99 = vector.load %arg8[%c0_84, %c1_85, %c0_86, %c0_87] : memref<2x2x5x32xf32, #tpu.memory_space<vmem>>, vector<1x1x1x32xf32>
    %100 = vector.shape_cast %99 : vector<1x1x1x32xf32> to vector<1x32xf32>
    %101 = vector.broadcast %100 : vector<1x32xf32> to vector<8x32xf32>
    %102 = arith.addf %98, %101 : vector<8x32xf32>
    %c0_88 = arith.constant 0 : index
    %c1_89 = arith.constant 1 : index
    %c1_90 = arith.constant 1 : index
    %c0_91 = arith.constant 0 : index
    %c0_92 = arith.constant 0 : index
    %103 = vector.load %arg7[%c0_88, %c1_89, %c1_90, %c0_91, %c0_92] : memref<2x2x3x32x32xf32, #tpu.memory_space<vmem>>, vector<1x1x1x32x32xf32>
    %104 = vector.shape_cast %103 : vector<1x1x1x32x32xf32> to vector<32x32xf32>
    %cst_93 = arith.constant dense<0.000000e+00> : vector<8x32xf32>
    %105 = tpu.matmul %95, %104, %cst_93 {dimension_numbers = #tpu.dot_dimension_numbers<[1], [0], [0], [1], [0, 0, 1, 1], [], []>} : vector<8x32xf32>, vector<32x32xf32>, vector<8x32xf32> -> vector<8x32xf32>
    %c0_94 = arith.constant 0 : index
    %c1_95 = arith.constant 1 : index
    %c1_96 = arith.constant 1 : index
    %c0_97 = arith.constant 0 : index
    %106 = vector.load %arg8[%c0_94, %c1_95, %c1_96, %c0_97] : memref<2x2x5x32xf32, #tpu.memory_space<vmem>>, vector<1x1x1x32xf32>
    %107 = vector.shape_cast %106 : vector<1x1x1x32xf32> to vector<1x32xf32>
    %108 = vector.broadcast %107 : vector<1x32xf32> to vector<8x32xf32>
    %109 = arith.addf %105, %108 : vector<8x32xf32>
    %c0_98 = arith.constant 0 : index
    %c1_99 = arith.constant 1 : index
    %c2_100 = arith.constant 2 : index
    %c0_101 = arith.constant 0 : index
    %c0_102 = arith.constant 0 : index
    %110 = vector.load %arg7[%c0_98, %c1_99, %c2_100, %c0_101, %c0_102] : memref<2x2x3x32x32xf32, #tpu.memory_space<vmem>>, vector<1x1x1x32x32xf32>
    %111 = vector.shape_cast %110 : vector<1x1x1x32x32xf32> to vector<32x32xf32>
    %cst_103 = arith.constant dense<0.000000e+00> : vector<8x32xf32>
    %112 = tpu.matmul %95, %111, %cst_103 {dimension_numbers = #tpu.dot_dimension_numbers<[1], [0], [0], [1], [0, 0, 1, 1], [], []>} : vector<8x32xf32>, vector<32x32xf32>, vector<8x32xf32> -> vector<8x32xf32>
    %c0_104 = arith.constant 0 : index
    %c1_105 = arith.constant 1 : index
    %c2_106 = arith.constant 2 : index
    %c0_107 = arith.constant 0 : index
    %113 = vector.load %arg8[%c0_104, %c1_105, %c2_106, %c0_107] : memref<2x2x5x32xf32, #tpu.memory_space<vmem>>, vector<1x1x1x32xf32>
    %114 = vector.shape_cast %113 : vector<1x1x1x32xf32> to vector<1x32xf32>
    %115 = vector.broadcast %114 : vector<1x32xf32> to vector<8x32xf32>
    %116 = arith.addf %112, %115 : vector<8x32xf32>
    %cst_108 = arith.constant dense<0.000000e+00> : vector<8x8xf32>
    %117 = tpu.matmul %102, %109, %cst_108 {dimension_numbers = #tpu.dot_dimension_numbers<[1], [1], [0], [0], [0, 0, 1, 0], [], []>} : vector<8x32xf32>, vector<8x32xf32>, vector<8x8xf32> -> vector<8x8xf32>
    %cst_109 = arith.constant dense<0xFF800000> : vector<8xf32>
    %118 = vector.multi_reduction <maximumf>, %117, %cst_109 [1] : vector<8x8xf32> to vector<8xf32>
    %119 = vector.shape_cast %118 : vector<8xf32> to vector<8x1xf32>
    %120 = vector.broadcast %119 : vector<8x1xf32> to vector<8x8xf32>
    %121 = arith.subf %117, %120 : vector<8x8xf32>
    %122 = math.exp %121 : vector<8x8xf32>
    %cst_110 = arith.constant dense<0.000000e+00> : vector<8xf32>
    %123 = vector.multi_reduction <add>, %122, %cst_110 [1] : vector<8x8xf32> to vector<8xf32>
    %124 = vector.shape_cast %123 : vector<8xf32> to vector<8x1xf32>
    %125 = tpu.reciprocal %124 {approx = true} : vector<8x1xf32> -> vector<8x1xf32>
    %126 = vector.broadcast %125 : vector<8x1xf32> to vector<8x8xf32>
    %127 = arith.mulf %122, %126 : vector<8x8xf32>
    %cst_111 = arith.constant dense<0.000000e+00> : vector<8x32xf32>
    %128 = tpu.matmul %127, %116, %cst_111 {dimension_numbers = #tpu.dot_dimension_numbers<[1], [0], [0], [1], [0, 0, 1, 1], [], []>} : vector<8x8xf32>, vector<8x32xf32>, vector<8x32xf32> -> vector<8x32xf32>
    %129 = arith.addf %128, %95 : vector<8x32xf32>
    %cst_112 = arith.constant dense<0.000000e+00> : vector<8xf32>
    %130 = vector.multi_reduction <add>, %129, %cst_112 [1] : vector<8x32xf32> to vector<8xf32>
    %131 = vector.shape_cast %130 : vector<8xf32> to vector<8x1xf32>
    %cst_113 = arith.constant 3.200000e+01 : f32
    %132 = vector.broadcast %cst_113 : f32 to vector<8x1xf32>
    %133 = arith.divf %131, %132 : vector<8x1xf32>
    %134 = vector.broadcast %133 : vector<8x1xf32> to vector<8x32xf32>
    %135 = arith.subf %129, %134 : vector<8x32xf32>
    %136 = arith.mulf %135, %135 : vector<8x32xf32>
    %cst_114 = arith.constant dense<0.000000e+00> : vector<8xf32>
    %137 = vector.multi_reduction <add>, %136, %cst_114 [1] : vector<8x32xf32> to vector<8xf32>
    %138 = vector.shape_cast %137 : vector<8xf32> to vector<8x1xf32>
    %cst_115 = arith.constant 3.200000e+01 : f32
    %139 = vector.broadcast %cst_115 : f32 to vector<8x1xf32>
    %140 = arith.divf %138, %139 : vector<8x1xf32>
    %141 = vector.broadcast %133 : vector<8x1xf32> to vector<8x32xf32>
    %142 = arith.subf %129, %141 : vector<8x32xf32>
    %cst_116 = arith.constant 9.99999974E-6 : f32
    %143 = vector.broadcast %cst_116 : f32 to vector<8x1xf32>
    %144 = arith.addf %140, %143 : vector<8x1xf32>
    %145 = math.rsqrt %144 : vector<8x1xf32>
    %146 = vector.broadcast %145 : vector<8x1xf32> to vector<8x32xf32>
    %147 = arith.mulf %142, %146 : vector<8x32xf32>
    %c0_117 = arith.constant 0 : index
    %c1_118 = arith.constant 1 : index
    %c3_119 = arith.constant 3 : index
    %c0_120 = arith.constant 0 : index
    %148 = vector.load %arg8[%c0_117, %c1_118, %c3_119, %c0_120] : memref<2x2x5x32xf32, #tpu.memory_space<vmem>>, vector<1x1x1x32xf32>
    %149 = vector.shape_cast %148 : vector<1x1x1x32xf32> to vector<1x32xf32>
    %150 = vector.broadcast %149 : vector<1x32xf32> to vector<8x32xf32>
    %151 = arith.mulf %147, %150 : vector<8x32xf32>
    %c0_121 = arith.constant 0 : index
    %c1_122 = arith.constant 1 : index
    %c4_123 = arith.constant 4 : index
    %c0_124 = arith.constant 0 : index
    %152 = vector.load %arg8[%c0_121, %c1_122, %c4_123, %c0_124] : memref<2x2x5x32xf32, #tpu.memory_space<vmem>>, vector<1x1x1x32xf32>
    %153 = vector.shape_cast %152 : vector<1x1x1x32xf32> to vector<1x32xf32>
    %154 = vector.broadcast %153 : vector<1x32xf32> to vector<8x32xf32>
    %155 = arith.addf %151, %154 : vector<8x32xf32>
    %156 = vector.extract_strided_slice %27 {offsets = [0, 0], sizes = [8, 32], strides = [1, 1]} : vector<16x32xf32> to vector<8x32xf32>
    %157 = vector.extract_strided_slice %34 {offsets = [0, 0], sizes = [8, 32], strides = [1, 1]} : vector<16x32xf32> to vector<8x32xf32>
    %c1_125 = arith.constant 1 : index
    %c0_126 = arith.constant 0 : index
    %c0_127 = arith.constant 0 : index
    %c0_128 = arith.constant 0 : index
    %c0_129 = arith.constant 0 : index
    %158 = vector.load %arg7[%c1_125, %c0_126, %c0_127, %c0_128, %c0_129] : memref<2x2x3x32x32xf32, #tpu.memory_space<vmem>>, vector<1x1x1x32x32xf32>
    %159 = vector.shape_cast %158 : vector<1x1x1x32x32xf32> to vector<32x32xf32>
    %cst_130 = arith.constant dense<0.000000e+00> : vector<8x32xf32>
    %160 = tpu.matmul %157, %159, %cst_130 {dimension_numbers = #tpu.dot_dimension_numbers<[1], [0], [0], [1], [0, 0, 1, 1], [], []>} : vector<8x32xf32>, vector<32x32xf32>, vector<8x32xf32> -> vector<8x32xf32>
    %c1_131 = arith.constant 1 : index
    %c0_132 = arith.constant 0 : index
    %c0_133 = arith.constant 0 : index
    %c0_134 = arith.constant 0 : index
    %161 = vector.load %arg8[%c1_131, %c0_132, %c0_133, %c0_134] : memref<2x2x5x32xf32, #tpu.memory_space<vmem>>, vector<1x1x1x32xf32>
    %162 = vector.shape_cast %161 : vector<1x1x1x32xf32> to vector<1x32xf32>
    %163 = vector.broadcast %162 : vector<1x32xf32> to vector<8x32xf32>
    %164 = arith.addf %160, %163 : vector<8x32xf32>
    %c1_135 = arith.constant 1 : index
    %c0_136 = arith.constant 0 : index
    %c1_137 = arith.constant 1 : index
    %c0_138 = arith.constant 0 : index
    %c0_139 = arith.constant 0 : index
    %165 = vector.load %arg7[%c1_135, %c0_136, %c1_137, %c0_138, %c0_139] : memref<2x2x3x32x32xf32, #tpu.memory_space<vmem>>, vector<1x1x1x32x32xf32>
    %166 = vector.shape_cast %165 : vector<1x1x1x32x32xf32> to vector<32x32xf32>
    %cst_140 = arith.constant dense<0.000000e+00> : vector<8x32xf32>
    %167 = tpu.matmul %156, %166, %cst_140 {dimension_numbers = #tpu.dot_dimension_numbers<[1], [0], [0], [1], [0, 0, 1, 1], [], []>} : vector<8x32xf32>, vector<32x32xf32>, vector<8x32xf32> -> vector<8x32xf32>
    %c1_141 = arith.constant 1 : index
    %c0_142 = arith.constant 0 : index
    %c1_143 = arith.constant 1 : index
    %c0_144 = arith.constant 0 : index
    %168 = vector.load %arg8[%c1_141, %c0_142, %c1_143, %c0_144] : memref<2x2x5x32xf32, #tpu.memory_space<vmem>>, vector<1x1x1x32xf32>
    %169 = vector.shape_cast %168 : vector<1x1x1x32xf32> to vector<1x32xf32>
    %170 = vector.broadcast %169 : vector<1x32xf32> to vector<8x32xf32>
    %171 = arith.addf %167, %170 : vector<8x32xf32>
    %c1_145 = arith.constant 1 : index
    %c0_146 = arith.constant 0 : index
    %c2_147 = arith.constant 2 : index
    %c0_148 = arith.constant 0 : index
    %c0_149 = arith.constant 0 : index
    %172 = vector.load %arg7[%c1_145, %c0_146, %c2_147, %c0_148, %c0_149] : memref<2x2x3x32x32xf32, #tpu.memory_space<vmem>>, vector<1x1x1x32x32xf32>
    %173 = vector.shape_cast %172 : vector<1x1x1x32x32xf32> to vector<32x32xf32>
    %cst_150 = arith.constant dense<0.000000e+00> : vector<8x32xf32>
    %174 = tpu.matmul %155, %173, %cst_150 {dimension_numbers = #tpu.dot_dimension_numbers<[1], [0], [0], [1], [0, 0, 1, 1], [], []>} : vector<8x32xf32>, vector<32x32xf32>, vector<8x32xf32> -> vector<8x32xf32>
    %c1_151 = arith.constant 1 : index
    %c0_152 = arith.constant 0 : index
    %c2_153 = arith.constant 2 : index
    %c0_154 = arith.constant 0 : index
    %175 = vector.load %arg8[%c1_151, %c0_152, %c2_153, %c0_154] : memref<2x2x5x32xf32, #tpu.memory_space<vmem>>, vector<1x1x1x32xf32>
    %176 = vector.shape_cast %175 : vector<1x1x1x32xf32> to vector<1x32xf32>
    %177 = vector.broadcast %176 : vector<1x32xf32> to vector<8x32xf32>
    %178 = arith.addf %174, %177 : vector<8x32xf32>
    %cst_155 = arith.constant dense<0.000000e+00> : vector<8x8xf32>
    %179 = tpu.matmul %164, %171, %cst_155 {dimension_numbers = #tpu.dot_dimension_numbers<[1], [1], [0], [0], [0, 0, 1, 0], [], []>} : vector<8x32xf32>, vector<8x32xf32>, vector<8x8xf32> -> vector<8x8xf32>
    %cst_156 = arith.constant dense<0xFF800000> : vector<8xf32>
    %180 = vector.multi_reduction <maximumf>, %179, %cst_156 [1] : vector<8x8xf32> to vector<8xf32>
    %181 = vector.shape_cast %180 : vector<8xf32> to vector<8x1xf32>
    %182 = vector.broadcast %181 : vector<8x1xf32> to vector<8x8xf32>
    %183 = arith.subf %179, %182 : vector<8x8xf32>
    %184 = math.exp %183 : vector<8x8xf32>
    %cst_157 = arith.constant dense<0.000000e+00> : vector<8xf32>
    %185 = vector.multi_reduction <add>, %184, %cst_157 [1] : vector<8x8xf32> to vector<8xf32>
    %186 = vector.shape_cast %185 : vector<8xf32> to vector<8x1xf32>
    %187 = tpu.reciprocal %186 {approx = true} : vector<8x1xf32> -> vector<8x1xf32>
    %188 = vector.broadcast %187 : vector<8x1xf32> to vector<8x8xf32>
    %189 = arith.mulf %184, %188 : vector<8x8xf32>
    %cst_158 = arith.constant dense<0.000000e+00> : vector<8x32xf32>
    %190 = tpu.matmul %189, %178, %cst_158 {dimension_numbers = #tpu.dot_dimension_numbers<[1], [0], [0], [1], [0, 0, 1, 1], [], []>} : vector<8x8xf32>, vector<8x32xf32>, vector<8x32xf32> -> vector<8x32xf32>
    %191 = arith.addf %190, %157 : vector<8x32xf32>
    %cst_159 = arith.constant dense<0.000000e+00> : vector<8xf32>
    %192 = vector.multi_reduction <add>, %191, %cst_159 [1] : vector<8x32xf32> to vector<8xf32>
    %193 = vector.shape_cast %192 : vector<8xf32> to vector<8x1xf32>
    %cst_160 = arith.constant 3.200000e+01 : f32
    %194 = vector.broadcast %cst_160 : f32 to vector<8x1xf32>
    %195 = arith.divf %193, %194 : vector<8x1xf32>
    %196 = vector.broadcast %195 : vector<8x1xf32> to vector<8x32xf32>
    %197 = arith.subf %191, %196 : vector<8x32xf32>
    %198 = arith.mulf %197, %197 : vector<8x32xf32>
    %cst_161 = arith.constant dense<0.000000e+00> : vector<8xf32>
    %199 = vector.multi_reduction <add>, %198, %cst_161 [1] : vector<8x32xf32> to vector<8xf32>
    %200 = vector.shape_cast %199 : vector<8xf32> to vector<8x1xf32>
    %cst_162 = arith.constant 3.200000e+01 : f32
    %201 = vector.broadcast %cst_162 : f32 to vector<8x1xf32>
    %202 = arith.divf %200, %201 : vector<8x1xf32>
    %203 = vector.broadcast %195 : vector<8x1xf32> to vector<8x32xf32>
    %204 = arith.subf %191, %203 : vector<8x32xf32>
    %cst_163 = arith.constant 9.99999974E-6 : f32
    %205 = vector.broadcast %cst_163 : f32 to vector<8x1xf32>
    %206 = arith.addf %202, %205 : vector<8x1xf32>
    %207 = math.rsqrt %206 : vector<8x1xf32>
    %208 = vector.broadcast %207 : vector<8x1xf32> to vector<8x32xf32>
    %209 = arith.mulf %204, %208 : vector<8x32xf32>
    %c1_164 = arith.constant 1 : index
    %c0_165 = arith.constant 0 : index
    %c3_166 = arith.constant 3 : index
    %c0_167 = arith.constant 0 : index
    %210 = vector.load %arg8[%c1_164, %c0_165, %c3_166, %c0_167] : memref<2x2x5x32xf32, #tpu.memory_space<vmem>>, vector<1x1x1x32xf32>
    %211 = vector.shape_cast %210 : vector<1x1x1x32xf32> to vector<1x32xf32>
    %212 = vector.broadcast %211 : vector<1x32xf32> to vector<8x32xf32>
    %213 = arith.mulf %209, %212 : vector<8x32xf32>
    %c1_168 = arith.constant 1 : index
    %c0_169 = arith.constant 0 : index
    %c4_170 = arith.constant 4 : index
    %c0_171 = arith.constant 0 : index
    %214 = vector.load %arg8[%c1_168, %c0_169, %c4_170, %c0_171] : memref<2x2x5x32xf32, #tpu.memory_space<vmem>>, vector<1x1x1x32xf32>
    %215 = vector.shape_cast %214 : vector<1x1x1x32xf32> to vector<1x32xf32>
    %216 = vector.broadcast %215 : vector<1x32xf32> to vector<8x32xf32>
    %217 = arith.addf %213, %216 : vector<8x32xf32>
    %c1_172 = arith.constant 1 : index
    %c1_173 = arith.constant 1 : index
    %c0_174 = arith.constant 0 : index
    %c0_175 = arith.constant 0 : index
    %c0_176 = arith.constant 0 : index
    %218 = vector.load %arg7[%c1_172, %c1_173, %c0_174, %c0_175, %c0_176] : memref<2x2x3x32x32xf32, #tpu.memory_space<vmem>>, vector<1x1x1x32x32xf32>
    %219 = vector.shape_cast %218 : vector<1x1x1x32x32xf32> to vector<32x32xf32>
    %cst_177 = arith.constant dense<0.000000e+00> : vector<8x32xf32>
    %220 = tpu.matmul %217, %219, %cst_177 {dimension_numbers = #tpu.dot_dimension_numbers<[1], [0], [0], [1], [0, 0, 1, 1], [], []>} : vector<8x32xf32>, vector<32x32xf32>, vector<8x32xf32> -> vector<8x32xf32>
    %c1_178 = arith.constant 1 : index
    %c1_179 = arith.constant 1 : index
    %c0_180 = arith.constant 0 : index
    %c0_181 = arith.constant 0 : index
    %221 = vector.load %arg8[%c1_178, %c1_179, %c0_180, %c0_181] : memref<2x2x5x32xf32, #tpu.memory_space<vmem>>, vector<1x1x1x32xf32>
    %222 = vector.shape_cast %221 : vector<1x1x1x32xf32> to vector<1x32xf32>
    %223 = vector.broadcast %222 : vector<1x32xf32> to vector<8x32xf32>
    %224 = arith.addf %220, %223 : vector<8x32xf32>
    %c1_182 = arith.constant 1 : index
    %c1_183 = arith.constant 1 : index
    %c1_184 = arith.constant 1 : index
    %c0_185 = arith.constant 0 : index
    %c0_186 = arith.constant 0 : index
    %225 = vector.load %arg7[%c1_182, %c1_183, %c1_184, %c0_185, %c0_186] : memref<2x2x3x32x32xf32, #tpu.memory_space<vmem>>, vector<1x1x1x32x32xf32>
    %226 = vector.shape_cast %225 : vector<1x1x1x32x32xf32> to vector<32x32xf32>
    %cst_187 = arith.constant dense<0.000000e+00> : vector<8x32xf32>
    %227 = tpu.matmul %156, %226, %cst_187 {dimension_numbers = #tpu.dot_dimension_numbers<[1], [0], [0], [1], [0, 0, 1, 1], [], []>} : vector<8x32xf32>, vector<32x32xf32>, vector<8x32xf32> -> vector<8x32xf32>
    %c1_188 = arith.constant 1 : index
    %c1_189 = arith.constant 1 : index
    %c1_190 = arith.constant 1 : index
    %c0_191 = arith.constant 0 : index
    %228 = vector.load %arg8[%c1_188, %c1_189, %c1_190, %c0_191] : memref<2x2x5x32xf32, #tpu.memory_space<vmem>>, vector<1x1x1x32xf32>
    %229 = vector.shape_cast %228 : vector<1x1x1x32xf32> to vector<1x32xf32>
    %230 = vector.broadcast %229 : vector<1x32xf32> to vector<8x32xf32>
    %231 = arith.addf %227, %230 : vector<8x32xf32>
    %c1_192 = arith.constant 1 : index
    %c1_193 = arith.constant 1 : index
    %c2_194 = arith.constant 2 : index
    %c0_195 = arith.constant 0 : index
    %c0_196 = arith.constant 0 : index
    %232 = vector.load %arg7[%c1_192, %c1_193, %c2_194, %c0_195, %c0_196] : memref<2x2x3x32x32xf32, #tpu.memory_space<vmem>>, vector<1x1x1x32x32xf32>
    %233 = vector.shape_cast %232 : vector<1x1x1x32x32xf32> to vector<32x32xf32>
    %cst_197 = arith.constant dense<0.000000e+00> : vector<8x32xf32>
    %234 = tpu.matmul %155, %233, %cst_197 {dimension_numbers = #tpu.dot_dimension_numbers<[1], [0], [0], [1], [0, 0, 1, 1], [], []>} : vector<8x32xf32>, vector<32x32xf32>, vector<8x32xf32> -> vector<8x32xf32>
    %c1_198 = arith.constant 1 : index
    %c1_199 = arith.constant 1 : index
    %c2_200 = arith.constant 2 : index
    %c0_201 = arith.constant 0 : index
    %235 = vector.load %arg8[%c1_198, %c1_199, %c2_200, %c0_201] : memref<2x2x5x32xf32, #tpu.memory_space<vmem>>, vector<1x1x1x32xf32>
    %236 = vector.shape_cast %235 : vector<1x1x1x32xf32> to vector<1x32xf32>
    %237 = vector.broadcast %236 : vector<1x32xf32> to vector<8x32xf32>
    %238 = arith.addf %234, %237 : vector<8x32xf32>
    %cst_202 = arith.constant dense<0.000000e+00> : vector<8x8xf32>
    %239 = tpu.matmul %224, %231, %cst_202 {dimension_numbers = #tpu.dot_dimension_numbers<[1], [1], [0], [0], [0, 0, 1, 0], [], []>} : vector<8x32xf32>, vector<8x32xf32>, vector<8x8xf32> -> vector<8x8xf32>
    %cst_203 = arith.constant dense<0xFF800000> : vector<8xf32>
    %240 = vector.multi_reduction <maximumf>, %239, %cst_203 [1] : vector<8x8xf32> to vector<8xf32>
    %241 = vector.shape_cast %240 : vector<8xf32> to vector<8x1xf32>
    %242 = vector.broadcast %241 : vector<8x1xf32> to vector<8x8xf32>
    %243 = arith.subf %239, %242 : vector<8x8xf32>
    %244 = math.exp %243 : vector<8x8xf32>
    %cst_204 = arith.constant dense<0.000000e+00> : vector<8xf32>
    %245 = vector.multi_reduction <add>, %244, %cst_204 [1] : vector<8x8xf32> to vector<8xf32>
    %246 = vector.shape_cast %245 : vector<8xf32> to vector<8x1xf32>
    %247 = tpu.reciprocal %246 {approx = true} : vector<8x1xf32> -> vector<8x1xf32>
    %248 = vector.broadcast %247 : vector<8x1xf32> to vector<8x8xf32>
    %249 = arith.mulf %244, %248 : vector<8x8xf32>
    %cst_205 = arith.constant dense<0.000000e+00> : vector<8x32xf32>
    %250 = tpu.matmul %249, %238, %cst_205 {dimension_numbers = #tpu.dot_dimension_numbers<[1], [0], [0], [1], [0, 0, 1, 1], [], []>} : vector<8x8xf32>, vector<8x32xf32>, vector<8x32xf32> -> vector<8x32xf32>
    %251 = arith.addf %250, %217 : vector<8x32xf32>
    %cst_206 = arith.constant dense<0.000000e+00> : vector<8xf32>
    %252 = vector.multi_reduction <add>, %251, %cst_206 [1] : vector<8x32xf32> to vector<8xf32>
    %253 = vector.shape_cast %252 : vector<8xf32> to vector<8x1xf32>
    %cst_207 = arith.constant 3.200000e+01 : f32
    %254 = vector.broadcast %cst_207 : f32 to vector<8x1xf32>
    %255 = arith.divf %253, %254 : vector<8x1xf32>
    %256 = vector.broadcast %255 : vector<8x1xf32> to vector<8x32xf32>
    %257 = arith.subf %251, %256 : vector<8x32xf32>
    %258 = arith.mulf %257, %257 : vector<8x32xf32>
    %cst_208 = arith.constant dense<0.000000e+00> : vector<8xf32>
    %259 = vector.multi_reduction <add>, %258, %cst_208 [1] : vector<8x32xf32> to vector<8xf32>
    %260 = vector.shape_cast %259 : vector<8xf32> to vector<8x1xf32>
    %cst_209 = arith.constant 3.200000e+01 : f32
    %261 = vector.broadcast %cst_209 : f32 to vector<8x1xf32>
    %262 = arith.divf %260, %261 : vector<8x1xf32>
    %263 = vector.broadcast %255 : vector<8x1xf32> to vector<8x32xf32>
    %264 = arith.subf %251, %263 : vector<8x32xf32>
    %cst_210 = arith.constant 9.99999974E-6 : f32
    %265 = vector.broadcast %cst_210 : f32 to vector<8x1xf32>
    %266 = arith.addf %262, %265 : vector<8x1xf32>
    %267 = math.rsqrt %266 : vector<8x1xf32>
    %268 = vector.broadcast %267 : vector<8x1xf32> to vector<8x32xf32>
    %269 = arith.mulf %264, %268 : vector<8x32xf32>
    %c1_211 = arith.constant 1 : index
    %c1_212 = arith.constant 1 : index
    %c3_213 = arith.constant 3 : index
    %c0_214 = arith.constant 0 : index
    %270 = vector.load %arg8[%c1_211, %c1_212, %c3_213, %c0_214] : memref<2x2x5x32xf32, #tpu.memory_space<vmem>>, vector<1x1x1x32xf32>
    %271 = vector.shape_cast %270 : vector<1x1x1x32xf32> to vector<1x32xf32>
    %272 = vector.broadcast %271 : vector<1x32xf32> to vector<8x32xf32>
    %273 = arith.mulf %269, %272 : vector<8x32xf32>
    %c1_215 = arith.constant 1 : index
    %c1_216 = arith.constant 1 : index
    %c4_217 = arith.constant 4 : index
    %c0_218 = arith.constant 0 : index
    %274 = vector.load %arg8[%c1_215, %c1_216, %c4_217, %c0_218] : memref<2x2x5x32xf32, #tpu.memory_space<vmem>>, vector<1x1x1x32xf32>
    %275 = vector.shape_cast %274 : vector<1x1x1x32xf32> to vector<1x32xf32>
    %276 = vector.broadcast %275 : vector<1x32xf32> to vector<8x32xf32>
    %277 = arith.addf %273, %276 : vector<8x32xf32>
    %278 = vector.extract_strided_slice %20 {offsets = [8, 0], sizes = [8, 32], strides = [1, 1]} : vector<16x32xf32> to vector<8x32xf32>
    %c0_219 = arith.constant 0 : index
    %c0_220 = arith.constant 0 : index
    %c0_221 = arith.constant 0 : index
    %c0_222 = arith.constant 0 : index
    %c0_223 = arith.constant 0 : index
    %279 = vector.load %arg7[%c0_219, %c0_220, %c0_221, %c0_222, %c0_223] : memref<2x2x3x32x32xf32, #tpu.memory_space<vmem>>, vector<1x1x1x32x32xf32>
    %280 = vector.shape_cast %279 : vector<1x1x1x32x32xf32> to vector<32x32xf32>
    %cst_224 = arith.constant dense<0.000000e+00> : vector<8x32xf32>
    %281 = tpu.matmul %278, %280, %cst_224 {dimension_numbers = #tpu.dot_dimension_numbers<[1], [0], [0], [1], [0, 0, 1, 1], [], []>} : vector<8x32xf32>, vector<32x32xf32>, vector<8x32xf32> -> vector<8x32xf32>
    %c0_225 = arith.constant 0 : index
    %c0_226 = arith.constant 0 : index
    %c0_227 = arith.constant 0 : index
    %c0_228 = arith.constant 0 : index
    %282 = vector.load %arg8[%c0_225, %c0_226, %c0_227, %c0_228] : memref<2x2x5x32xf32, #tpu.memory_space<vmem>>, vector<1x1x1x32xf32>
    %283 = vector.shape_cast %282 : vector<1x1x1x32xf32> to vector<1x32xf32>
    %284 = vector.broadcast %283 : vector<1x32xf32> to vector<8x32xf32>
    %285 = arith.addf %281, %284 : vector<8x32xf32>
    %c0_229 = arith.constant 0 : index
    %c0_230 = arith.constant 0 : index
    %c1_231 = arith.constant 1 : index
    %c0_232 = arith.constant 0 : index
    %c0_233 = arith.constant 0 : index
    %286 = vector.load %arg7[%c0_229, %c0_230, %c1_231, %c0_232, %c0_233] : memref<2x2x3x32x32xf32, #tpu.memory_space<vmem>>, vector<1x1x1x32x32xf32>
    %287 = vector.shape_cast %286 : vector<1x1x1x32x32xf32> to vector<32x32xf32>
    %cst_234 = arith.constant dense<0.000000e+00> : vector<8x32xf32>
    %288 = tpu.matmul %278, %287, %cst_234 {dimension_numbers = #tpu.dot_dimension_numbers<[1], [0], [0], [1], [0, 0, 1, 1], [], []>} : vector<8x32xf32>, vector<32x32xf32>, vector<8x32xf32> -> vector<8x32xf32>
    %c0_235 = arith.constant 0 : index
    %c0_236 = arith.constant 0 : index
    %c1_237 = arith.constant 1 : index
    %c0_238 = arith.constant 0 : index
    %289 = vector.load %arg8[%c0_235, %c0_236, %c1_237, %c0_238] : memref<2x2x5x32xf32, #tpu.memory_space<vmem>>, vector<1x1x1x32xf32>
    %290 = vector.shape_cast %289 : vector<1x1x1x32xf32> to vector<1x32xf32>
    %291 = vector.broadcast %290 : vector<1x32xf32> to vector<8x32xf32>
    %292 = arith.addf %288, %291 : vector<8x32xf32>
    %c0_239 = arith.constant 0 : index
    %c0_240 = arith.constant 0 : index
    %c2_241 = arith.constant 2 : index
    %c0_242 = arith.constant 0 : index
    %c0_243 = arith.constant 0 : index
    %293 = vector.load %arg7[%c0_239, %c0_240, %c2_241, %c0_242, %c0_243] : memref<2x2x3x32x32xf32, #tpu.memory_space<vmem>>, vector<1x1x1x32x32xf32>
    %294 = vector.shape_cast %293 : vector<1x1x1x32x32xf32> to vector<32x32xf32>
    %cst_244 = arith.constant dense<0.000000e+00> : vector<8x32xf32>
    %295 = tpu.matmul %278, %294, %cst_244 {dimension_numbers = #tpu.dot_dimension_numbers<[1], [0], [0], [1], [0, 0, 1, 1], [], []>} : vector<8x32xf32>, vector<32x32xf32>, vector<8x32xf32> -> vector<8x32xf32>
    %c0_245 = arith.constant 0 : index
    %c0_246 = arith.constant 0 : index
    %c2_247 = arith.constant 2 : index
    %c0_248 = arith.constant 0 : index
    %296 = vector.load %arg8[%c0_245, %c0_246, %c2_247, %c0_248] : memref<2x2x5x32xf32, #tpu.memory_space<vmem>>, vector<1x1x1x32xf32>
    %297 = vector.shape_cast %296 : vector<1x1x1x32xf32> to vector<1x32xf32>
    %298 = vector.broadcast %297 : vector<1x32xf32> to vector<8x32xf32>
    %299 = arith.addf %295, %298 : vector<8x32xf32>
    %cst_249 = arith.constant dense<0.000000e+00> : vector<8x8xf32>
    %300 = tpu.matmul %285, %292, %cst_249 {dimension_numbers = #tpu.dot_dimension_numbers<[1], [1], [0], [0], [0, 0, 1, 0], [], []>} : vector<8x32xf32>, vector<8x32xf32>, vector<8x8xf32> -> vector<8x8xf32>
    %cst_250 = arith.constant dense<0xFF800000> : vector<8xf32>
    %301 = vector.multi_reduction <maximumf>, %300, %cst_250 [1] : vector<8x8xf32> to vector<8xf32>
    %302 = vector.shape_cast %301 : vector<8xf32> to vector<8x1xf32>
    %303 = vector.broadcast %302 : vector<8x1xf32> to vector<8x8xf32>
    %304 = arith.subf %300, %303 : vector<8x8xf32>
    %305 = math.exp %304 : vector<8x8xf32>
    %cst_251 = arith.constant dense<0.000000e+00> : vector<8xf32>
    %306 = vector.multi_reduction <add>, %305, %cst_251 [1] : vector<8x8xf32> to vector<8xf32>
    %307 = vector.shape_cast %306 : vector<8xf32> to vector<8x1xf32>
    %308 = tpu.reciprocal %307 {approx = true} : vector<8x1xf32> -> vector<8x1xf32>
    %309 = vector.broadcast %308 : vector<8x1xf32> to vector<8x8xf32>
    %310 = arith.mulf %305, %309 : vector<8x8xf32>
    %cst_252 = arith.constant dense<0.000000e+00> : vector<8x32xf32>
    %311 = tpu.matmul %310, %299, %cst_252 {dimension_numbers = #tpu.dot_dimension_numbers<[1], [0], [0], [1], [0, 0, 1, 1], [], []>} : vector<8x8xf32>, vector<8x32xf32>, vector<8x32xf32> -> vector<8x32xf32>
    %312 = arith.addf %311, %278 : vector<8x32xf32>
    %cst_253 = arith.constant dense<0.000000e+00> : vector<8xf32>
    %313 = vector.multi_reduction <add>, %312, %cst_253 [1] : vector<8x32xf32> to vector<8xf32>
    %314 = vector.shape_cast %313 : vector<8xf32> to vector<8x1xf32>
    %cst_254 = arith.constant 3.200000e+01 : f32
    %315 = vector.broadcast %cst_254 : f32 to vector<8x1xf32>
    %316 = arith.divf %314, %315 : vector<8x1xf32>
    %317 = vector.broadcast %316 : vector<8x1xf32> to vector<8x32xf32>
    %318 = arith.subf %312, %317 : vector<8x32xf32>
    %319 = arith.mulf %318, %318 : vector<8x32xf32>
    %cst_255 = arith.constant dense<0.000000e+00> : vector<8xf32>
    %320 = vector.multi_reduction <add>, %319, %cst_255 [1] : vector<8x32xf32> to vector<8xf32>
    %321 = vector.shape_cast %320 : vector<8xf32> to vector<8x1xf32>
    %cst_256 = arith.constant 3.200000e+01 : f32
    %322 = vector.broadcast %cst_256 : f32 to vector<8x1xf32>
    %323 = arith.divf %321, %322 : vector<8x1xf32>
    %324 = vector.broadcast %316 : vector<8x1xf32> to vector<8x32xf32>
    %325 = arith.subf %312, %324 : vector<8x32xf32>
    %cst_257 = arith.constant 9.99999974E-6 : f32
    %326 = vector.broadcast %cst_257 : f32 to vector<8x1xf32>
    %327 = arith.addf %323, %326 : vector<8x1xf32>
    %328 = math.rsqrt %327 : vector<8x1xf32>
    %329 = vector.broadcast %328 : vector<8x1xf32> to vector<8x32xf32>
    %330 = arith.mulf %325, %329 : vector<8x32xf32>
    %c0_258 = arith.constant 0 : index
    %c0_259 = arith.constant 0 : index
    %c3_260 = arith.constant 3 : index
    %c0_261 = arith.constant 0 : index
    %331 = vector.load %arg8[%c0_258, %c0_259, %c3_260, %c0_261] : memref<2x2x5x32xf32, #tpu.memory_space<vmem>>, vector<1x1x1x32xf32>
    %332 = vector.shape_cast %331 : vector<1x1x1x32xf32> to vector<1x32xf32>
    %333 = vector.broadcast %332 : vector<1x32xf32> to vector<8x32xf32>
    %334 = arith.mulf %330, %333 : vector<8x32xf32>
    %c0_262 = arith.constant 0 : index
    %c0_263 = arith.constant 0 : index
    %c4_264 = arith.constant 4 : index
    %c0_265 = arith.constant 0 : index
    %335 = vector.load %arg8[%c0_262, %c0_263, %c4_264, %c0_265] : memref<2x2x5x32xf32, #tpu.memory_space<vmem>>, vector<1x1x1x32xf32>
    %336 = vector.shape_cast %335 : vector<1x1x1x32xf32> to vector<1x32xf32>
    %337 = vector.broadcast %336 : vector<1x32xf32> to vector<8x32xf32>
    %338 = arith.addf %334, %337 : vector<8x32xf32>
    %c0_266 = arith.constant 0 : index
    %c1_267 = arith.constant 1 : index
    %c0_268 = arith.constant 0 : index
    %c0_269 = arith.constant 0 : index
    %c0_270 = arith.constant 0 : index
    %339 = vector.load %arg7[%c0_266, %c1_267, %c0_268, %c0_269, %c0_270] : memref<2x2x3x32x32xf32, #tpu.memory_space<vmem>>, vector<1x1x1x32x32xf32>
    %340 = vector.shape_cast %339 : vector<1x1x1x32x32xf32> to vector<32x32xf32>
    %cst_271 = arith.constant dense<0.000000e+00> : vector<8x32xf32>
    %341 = tpu.matmul %338, %340, %cst_271 {dimension_numbers = #tpu.dot_dimension_numbers<[1], [0], [0], [1], [0, 0, 1, 1], [], []>} : vector<8x32xf32>, vector<32x32xf32>, vector<8x32xf32> -> vector<8x32xf32>
    %c0_272 = arith.constant 0 : index
    %c1_273 = arith.constant 1 : index
    %c0_274 = arith.constant 0 : index
    %c0_275 = arith.constant 0 : index
    %342 = vector.load %arg8[%c0_272, %c1_273, %c0_274, %c0_275] : memref<2x2x5x32xf32, #tpu.memory_space<vmem>>, vector<1x1x1x32xf32>
    %343 = vector.shape_cast %342 : vector<1x1x1x32xf32> to vector<1x32xf32>
    %344 = vector.broadcast %343 : vector<1x32xf32> to vector<8x32xf32>
    %345 = arith.addf %341, %344 : vector<8x32xf32>
    %c0_276 = arith.constant 0 : index
    %c1_277 = arith.constant 1 : index
    %c1_278 = arith.constant 1 : index
    %c0_279 = arith.constant 0 : index
    %c0_280 = arith.constant 0 : index
    %346 = vector.load %arg7[%c0_276, %c1_277, %c1_278, %c0_279, %c0_280] : memref<2x2x3x32x32xf32, #tpu.memory_space<vmem>>, vector<1x1x1x32x32xf32>
    %347 = vector.shape_cast %346 : vector<1x1x1x32x32xf32> to vector<32x32xf32>
    %cst_281 = arith.constant dense<0.000000e+00> : vector<8x32xf32>
    %348 = tpu.matmul %338, %347, %cst_281 {dimension_numbers = #tpu.dot_dimension_numbers<[1], [0], [0], [1], [0, 0, 1, 1], [], []>} : vector<8x32xf32>, vector<32x32xf32>, vector<8x32xf32> -> vector<8x32xf32>
    %c0_282 = arith.constant 0 : index
    %c1_283 = arith.constant 1 : index
    %c1_284 = arith.constant 1 : index
    %c0_285 = arith.constant 0 : index
    %349 = vector.load %arg8[%c0_282, %c1_283, %c1_284, %c0_285] : memref<2x2x5x32xf32, #tpu.memory_space<vmem>>, vector<1x1x1x32xf32>
    %350 = vector.shape_cast %349 : vector<1x1x1x32xf32> to vector<1x32xf32>
    %351 = vector.broadcast %350 : vector<1x32xf32> to vector<8x32xf32>
    %352 = arith.addf %348, %351 : vector<8x32xf32>
    %c0_286 = arith.constant 0 : index
    %c1_287 = arith.constant 1 : index
    %c2_288 = arith.constant 2 : index
    %c0_289 = arith.constant 0 : index
    %c0_290 = arith.constant 0 : index
    %353 = vector.load %arg7[%c0_286, %c1_287, %c2_288, %c0_289, %c0_290] : memref<2x2x3x32x32xf32, #tpu.memory_space<vmem>>, vector<1x1x1x32x32xf32>
    %354 = vector.shape_cast %353 : vector<1x1x1x32x32xf32> to vector<32x32xf32>
    %cst_291 = arith.constant dense<0.000000e+00> : vector<8x32xf32>
    %355 = tpu.matmul %338, %354, %cst_291 {dimension_numbers = #tpu.dot_dimension_numbers<[1], [0], [0], [1], [0, 0, 1, 1], [], []>} : vector<8x32xf32>, vector<32x32xf32>, vector<8x32xf32> -> vector<8x32xf32>
    %c0_292 = arith.constant 0 : index
    %c1_293 = arith.constant 1 : index
    %c2_294 = arith.constant 2 : index
    %c0_295 = arith.constant 0 : index
    %356 = vector.load %arg8[%c0_292, %c1_293, %c2_294, %c0_295] : memref<2x2x5x32xf32, #tpu.memory_space<vmem>>, vector<1x1x1x32xf32>
    %357 = vector.shape_cast %356 : vector<1x1x1x32xf32> to vector<1x32xf32>
    %358 = vector.broadcast %357 : vector<1x32xf32> to vector<8x32xf32>
    %359 = arith.addf %355, %358 : vector<8x32xf32>
    %cst_296 = arith.constant dense<0.000000e+00> : vector<8x8xf32>
    %360 = tpu.matmul %345, %352, %cst_296 {dimension_numbers = #tpu.dot_dimension_numbers<[1], [1], [0], [0], [0, 0, 1, 0], [], []>} : vector<8x32xf32>, vector<8x32xf32>, vector<8x8xf32> -> vector<8x8xf32>
    %cst_297 = arith.constant dense<0xFF800000> : vector<8xf32>
    %361 = vector.multi_reduction <maximumf>, %360, %cst_297 [1] : vector<8x8xf32> to vector<8xf32>
    %362 = vector.shape_cast %361 : vector<8xf32> to vector<8x1xf32>
    %363 = vector.broadcast %362 : vector<8x1xf32> to vector<8x8xf32>
    %364 = arith.subf %360, %363 : vector<8x8xf32>
    %365 = math.exp %364 : vector<8x8xf32>
    %cst_298 = arith.constant dense<0.000000e+00> : vector<8xf32>
    %366 = vector.multi_reduction <add>, %365, %cst_298 [1] : vector<8x8xf32> to vector<8xf32>
    %367 = vector.shape_cast %366 : vector<8xf32> to vector<8x1xf32>
    %368 = tpu.reciprocal %367 {approx = true} : vector<8x1xf32> -> vector<8x1xf32>
    %369 = vector.broadcast %368 : vector<8x1xf32> to vector<8x8xf32>
    %370 = arith.mulf %365, %369 : vector<8x8xf32>
    %cst_299 = arith.constant dense<0.000000e+00> : vector<8x32xf32>
    %371 = tpu.matmul %370, %359, %cst_299 {dimension_numbers = #tpu.dot_dimension_numbers<[1], [0], [0], [1], [0, 0, 1, 1], [], []>} : vector<8x8xf32>, vector<8x32xf32>, vector<8x32xf32> -> vector<8x32xf32>
    %372 = arith.addf %371, %338 : vector<8x32xf32>
    %cst_300 = arith.constant dense<0.000000e+00> : vector<8xf32>
    %373 = vector.multi_reduction <add>, %372, %cst_300 [1] : vector<8x32xf32> to vector<8xf32>
    %374 = vector.shape_cast %373 : vector<8xf32> to vector<8x1xf32>
    %cst_301 = arith.constant 3.200000e+01 : f32
    %375 = vector.broadcast %cst_301 : f32 to vector<8x1xf32>
    %376 = arith.divf %374, %375 : vector<8x1xf32>
    %377 = vector.broadcast %376 : vector<8x1xf32> to vector<8x32xf32>
    %378 = arith.subf %372, %377 : vector<8x32xf32>
    %379 = arith.mulf %378, %378 : vector<8x32xf32>
    %cst_302 = arith.constant dense<0.000000e+00> : vector<8xf32>
    %380 = vector.multi_reduction <add>, %379, %cst_302 [1] : vector<8x32xf32> to vector<8xf32>
    %381 = vector.shape_cast %380 : vector<8xf32> to vector<8x1xf32>
    %cst_303 = arith.constant 3.200000e+01 : f32
    %382 = vector.broadcast %cst_303 : f32 to vector<8x1xf32>
    %383 = arith.divf %381, %382 : vector<8x1xf32>
    %384 = vector.broadcast %376 : vector<8x1xf32> to vector<8x32xf32>
    %385 = arith.subf %372, %384 : vector<8x32xf32>
    %cst_304 = arith.constant 9.99999974E-6 : f32
    %386 = vector.broadcast %cst_304 : f32 to vector<8x1xf32>
    %387 = arith.addf %383, %386 : vector<8x1xf32>
    %388 = math.rsqrt %387 : vector<8x1xf32>
    %389 = vector.broadcast %388 : vector<8x1xf32> to vector<8x32xf32>
    %390 = arith.mulf %385, %389 : vector<8x32xf32>
    %c0_305 = arith.constant 0 : index
    %c1_306 = arith.constant 1 : index
    %c3_307 = arith.constant 3 : index
    %c0_308 = arith.constant 0 : index
    %391 = vector.load %arg8[%c0_305, %c1_306, %c3_307, %c0_308] : memref<2x2x5x32xf32, #tpu.memory_space<vmem>>, vector<1x1x1x32xf32>
    %392 = vector.shape_cast %391 : vector<1x1x1x32xf32> to vector<1x32xf32>
    %393 = vector.broadcast %392 : vector<1x32xf32> to vector<8x32xf32>
    %394 = arith.mulf %390, %393 : vector<8x32xf32>
    %c0_309 = arith.constant 0 : index
    %c1_310 = arith.constant 1 : index
    %c4_311 = arith.constant 4 : index
    %c0_312 = arith.constant 0 : index
    %395 = vector.load %arg8[%c0_309, %c1_310, %c4_311, %c0_312] : memref<2x2x5x32xf32, #tpu.memory_space<vmem>>, vector<1x1x1x32xf32>
    %396 = vector.shape_cast %395 : vector<1x1x1x32xf32> to vector<1x32xf32>
    %397 = vector.broadcast %396 : vector<1x32xf32> to vector<8x32xf32>
    %398 = arith.addf %394, %397 : vector<8x32xf32>
    %399 = vector.extract_strided_slice %27 {offsets = [8, 0], sizes = [8, 32], strides = [1, 1]} : vector<16x32xf32> to vector<8x32xf32>
    %400 = vector.extract_strided_slice %34 {offsets = [8, 0], sizes = [8, 32], strides = [1, 1]} : vector<16x32xf32> to vector<8x32xf32>
    %c1_313 = arith.constant 1 : index
    %c0_314 = arith.constant 0 : index
    %c0_315 = arith.constant 0 : index
    %c0_316 = arith.constant 0 : index
    %c0_317 = arith.constant 0 : index
    %401 = vector.load %arg7[%c1_313, %c0_314, %c0_315, %c0_316, %c0_317] : memref<2x2x3x32x32xf32, #tpu.memory_space<vmem>>, vector<1x1x1x32x32xf32>
    %402 = vector.shape_cast %401 : vector<1x1x1x32x32xf32> to vector<32x32xf32>
    %cst_318 = arith.constant dense<0.000000e+00> : vector<8x32xf32>
    %403 = tpu.matmul %400, %402, %cst_318 {dimension_numbers = #tpu.dot_dimension_numbers<[1], [0], [0], [1], [0, 0, 1, 1], [], []>} : vector<8x32xf32>, vector<32x32xf32>, vector<8x32xf32> -> vector<8x32xf32>
    %c1_319 = arith.constant 1 : index
    %c0_320 = arith.constant 0 : index
    %c0_321 = arith.constant 0 : index
    %c0_322 = arith.constant 0 : index
    %404 = vector.load %arg8[%c1_319, %c0_320, %c0_321, %c0_322] : memref<2x2x5x32xf32, #tpu.memory_space<vmem>>, vector<1x1x1x32xf32>
    %405 = vector.shape_cast %404 : vector<1x1x1x32xf32> to vector<1x32xf32>
    %406 = vector.broadcast %405 : vector<1x32xf32> to vector<8x32xf32>
    %407 = arith.addf %403, %406 : vector<8x32xf32>
    %c1_323 = arith.constant 1 : index
    %c0_324 = arith.constant 0 : index
    %c1_325 = arith.constant 1 : index
    %c0_326 = arith.constant 0 : index
    %c0_327 = arith.constant 0 : index
    %408 = vector.load %arg7[%c1_323, %c0_324, %c1_325, %c0_326, %c0_327] : memref<2x2x3x32x32xf32, #tpu.memory_space<vmem>>, vector<1x1x1x32x32xf32>
    %409 = vector.shape_cast %408 : vector<1x1x1x32x32xf32> to vector<32x32xf32>
    %cst_328 = arith.constant dense<0.000000e+00> : vector<8x32xf32>
    %410 = tpu.matmul %399, %409, %cst_328 {dimension_numbers = #tpu.dot_dimension_numbers<[1], [0], [0], [1], [0, 0, 1, 1], [], []>} : vector<8x32xf32>, vector<32x32xf32>, vector<8x32xf32> -> vector<8x32xf32>
    %c1_329 = arith.constant 1 : index
    %c0_330 = arith.constant 0 : index
    %c1_331 = arith.constant 1 : index
    %c0_332 = arith.constant 0 : index
    %411 = vector.load %arg8[%c1_329, %c0_330, %c1_331, %c0_332] : memref<2x2x5x32xf32, #tpu.memory_space<vmem>>, vector<1x1x1x32xf32>
    %412 = vector.shape_cast %411 : vector<1x1x1x32xf32> to vector<1x32xf32>
    %413 = vector.broadcast %412 : vector<1x32xf32> to vector<8x32xf32>
    %414 = arith.addf %410, %413 : vector<8x32xf32>
    %c1_333 = arith.constant 1 : index
    %c0_334 = arith.constant 0 : index
    %c2_335 = arith.constant 2 : index
    %c0_336 = arith.constant 0 : index
    %c0_337 = arith.constant 0 : index
    %415 = vector.load %arg7[%c1_333, %c0_334, %c2_335, %c0_336, %c0_337] : memref<2x2x3x32x32xf32, #tpu.memory_space<vmem>>, vector<1x1x1x32x32xf32>
    %416 = vector.shape_cast %415 : vector<1x1x1x32x32xf32> to vector<32x32xf32>
    %cst_338 = arith.constant dense<0.000000e+00> : vector<8x32xf32>
    %417 = tpu.matmul %398, %416, %cst_338 {dimension_numbers = #tpu.dot_dimension_numbers<[1], [0], [0], [1], [0, 0, 1, 1], [], []>} : vector<8x32xf32>, vector<32x32xf32>, vector<8x32xf32> -> vector<8x32xf32>
    %c1_339 = arith.constant 1 : index
    %c0_340 = arith.constant 0 : index
    %c2_341 = arith.constant 2 : index
    %c0_342 = arith.constant 0 : index
    %418 = vector.load %arg8[%c1_339, %c0_340, %c2_341, %c0_342] : memref<2x2x5x32xf32, #tpu.memory_space<vmem>>, vector<1x1x1x32xf32>
    %419 = vector.shape_cast %418 : vector<1x1x1x32xf32> to vector<1x32xf32>
    %420 = vector.broadcast %419 : vector<1x32xf32> to vector<8x32xf32>
    %421 = arith.addf %417, %420 : vector<8x32xf32>
    %cst_343 = arith.constant dense<0.000000e+00> : vector<8x8xf32>
    %422 = tpu.matmul %407, %414, %cst_343 {dimension_numbers = #tpu.dot_dimension_numbers<[1], [1], [0], [0], [0, 0, 1, 0], [], []>} : vector<8x32xf32>, vector<8x32xf32>, vector<8x8xf32> -> vector<8x8xf32>
    %cst_344 = arith.constant dense<0xFF800000> : vector<8xf32>
    %423 = vector.multi_reduction <maximumf>, %422, %cst_344 [1] : vector<8x8xf32> to vector<8xf32>
    %424 = vector.shape_cast %423 : vector<8xf32> to vector<8x1xf32>
    %425 = vector.broadcast %424 : vector<8x1xf32> to vector<8x8xf32>
    %426 = arith.subf %422, %425 : vector<8x8xf32>
    %427 = math.exp %426 : vector<8x8xf32>
    %cst_345 = arith.constant dense<0.000000e+00> : vector<8xf32>
    %428 = vector.multi_reduction <add>, %427, %cst_345 [1] : vector<8x8xf32> to vector<8xf32>
    %429 = vector.shape_cast %428 : vector<8xf32> to vector<8x1xf32>
    %430 = tpu.reciprocal %429 {approx = true} : vector<8x1xf32> -> vector<8x1xf32>
    %431 = vector.broadcast %430 : vector<8x1xf32> to vector<8x8xf32>
    %432 = arith.mulf %427, %431 : vector<8x8xf32>
    %cst_346 = arith.constant dense<0.000000e+00> : vector<8x32xf32>
    %433 = tpu.matmul %432, %421, %cst_346 {dimension_numbers = #tpu.dot_dimension_numbers<[1], [0], [0], [1], [0, 0, 1, 1], [], []>} : vector<8x8xf32>, vector<8x32xf32>, vector<8x32xf32> -> vector<8x32xf32>
    %434 = arith.addf %433, %400 : vector<8x32xf32>
    %cst_347 = arith.constant dense<0.000000e+00> : vector<8xf32>
    %435 = vector.multi_reduction <add>, %434, %cst_347 [1] : vector<8x32xf32> to vector<8xf32>
    %436 = vector.shape_cast %435 : vector<8xf32> to vector<8x1xf32>
    %cst_348 = arith.constant 3.200000e+01 : f32
    %437 = vector.broadcast %cst_348 : f32 to vector<8x1xf32>
    %438 = arith.divf %436, %437 : vector<8x1xf32>
    %439 = vector.broadcast %438 : vector<8x1xf32> to vector<8x32xf32>
    %440 = arith.subf %434, %439 : vector<8x32xf32>
    %441 = arith.mulf %440, %440 : vector<8x32xf32>
    %cst_349 = arith.constant dense<0.000000e+00> : vector<8xf32>
    %442 = vector.multi_reduction <add>, %441, %cst_349 [1] : vector<8x32xf32> to vector<8xf32>
    %443 = vector.shape_cast %442 : vector<8xf32> to vector<8x1xf32>
    %cst_350 = arith.constant 3.200000e+01 : f32
    %444 = vector.broadcast %cst_350 : f32 to vector<8x1xf32>
    %445 = arith.divf %443, %444 : vector<8x1xf32>
    %446 = vector.broadcast %438 : vector<8x1xf32> to vector<8x32xf32>
    %447 = arith.subf %434, %446 : vector<8x32xf32>
    %cst_351 = arith.constant 9.99999974E-6 : f32
    %448 = vector.broadcast %cst_351 : f32 to vector<8x1xf32>
    %449 = arith.addf %445, %448 : vector<8x1xf32>
    %450 = math.rsqrt %449 : vector<8x1xf32>
    %451 = vector.broadcast %450 : vector<8x1xf32> to vector<8x32xf32>
    %452 = arith.mulf %447, %451 : vector<8x32xf32>
    %c1_352 = arith.constant 1 : index
    %c0_353 = arith.constant 0 : index
    %c3_354 = arith.constant 3 : index
    %c0_355 = arith.constant 0 : index
    %453 = vector.load %arg8[%c1_352, %c0_353, %c3_354, %c0_355] : memref<2x2x5x32xf32, #tpu.memory_space<vmem>>, vector<1x1x1x32xf32>
    %454 = vector.shape_cast %453 : vector<1x1x1x32xf32> to vector<1x32xf32>
    %455 = vector.broadcast %454 : vector<1x32xf32> to vector<8x32xf32>
    %456 = arith.mulf %452, %455 : vector<8x32xf32>
    %c1_356 = arith.constant 1 : index
    %c0_357 = arith.constant 0 : index
    %c4_358 = arith.constant 4 : index
    %c0_359 = arith.constant 0 : index
    %457 = vector.load %arg8[%c1_356, %c0_357, %c4_358, %c0_359] : memref<2x2x5x32xf32, #tpu.memory_space<vmem>>, vector<1x1x1x32xf32>
    %458 = vector.shape_cast %457 : vector<1x1x1x32xf32> to vector<1x32xf32>
    %459 = vector.broadcast %458 : vector<1x32xf32> to vector<8x32xf32>
    %460 = arith.addf %456, %459 : vector<8x32xf32>
    %c1_360 = arith.constant 1 : index
    %c1_361 = arith.constant 1 : index
    %c0_362 = arith.constant 0 : index
    %c0_363 = arith.constant 0 : index
    %c0_364 = arith.constant 0 : index
    %461 = vector.load %arg7[%c1_360, %c1_361, %c0_362, %c0_363, %c0_364] : memref<2x2x3x32x32xf32, #tpu.memory_space<vmem>>, vector<1x1x1x32x32xf32>
    %462 = vector.shape_cast %461 : vector<1x1x1x32x32xf32> to vector<32x32xf32>
    %cst_365 = arith.constant dense<0.000000e+00> : vector<8x32xf32>
    %463 = tpu.matmul %460, %462, %cst_365 {dimension_numbers = #tpu.dot_dimension_numbers<[1], [0], [0], [1], [0, 0, 1, 1], [], []>} : vector<8x32xf32>, vector<32x32xf32>, vector<8x32xf32> -> vector<8x32xf32>
    %c1_366 = arith.constant 1 : index
    %c1_367 = arith.constant 1 : index
    %c0_368 = arith.constant 0 : index
    %c0_369 = arith.constant 0 : index
    %464 = vector.load %arg8[%c1_366, %c1_367, %c0_368, %c0_369] : memref<2x2x5x32xf32, #tpu.memory_space<vmem>>, vector<1x1x1x32xf32>
    %465 = vector.shape_cast %464 : vector<1x1x1x32xf32> to vector<1x32xf32>
    %466 = vector.broadcast %465 : vector<1x32xf32> to vector<8x32xf32>
    %467 = arith.addf %463, %466 : vector<8x32xf32>
    %c1_370 = arith.constant 1 : index
    %c1_371 = arith.constant 1 : index
    %c1_372 = arith.constant 1 : index
    %c0_373 = arith.constant 0 : index
    %c0_374 = arith.constant 0 : index
    %468 = vector.load %arg7[%c1_370, %c1_371, %c1_372, %c0_373, %c0_374] : memref<2x2x3x32x32xf32, #tpu.memory_space<vmem>>, vector<1x1x1x32x32xf32>
    %469 = vector.shape_cast %468 : vector<1x1x1x32x32xf32> to vector<32x32xf32>
    %cst_375 = arith.constant dense<0.000000e+00> : vector<8x32xf32>
    %470 = tpu.matmul %399, %469, %cst_375 {dimension_numbers = #tpu.dot_dimension_numbers<[1], [0], [0], [1], [0, 0, 1, 1], [], []>} : vector<8x32xf32>, vector<32x32xf32>, vector<8x32xf32> -> vector<8x32xf32>
    %c1_376 = arith.constant 1 : index
    %c1_377 = arith.constant 1 : index
    %c1_378 = arith.constant 1 : index
    %c0_379 = arith.constant 0 : index
    %471 = vector.load %arg8[%c1_376, %c1_377, %c1_378, %c0_379] : memref<2x2x5x32xf32, #tpu.memory_space<vmem>>, vector<1x1x1x32xf32>
    %472 = vector.shape_cast %471 : vector<1x1x1x32xf32> to vector<1x32xf32>
    %473 = vector.broadcast %472 : vector<1x32xf32> to vector<8x32xf32>
    %474 = arith.addf %470, %473 : vector<8x32xf32>
    %c1_380 = arith.constant 1 : index
    %c1_381 = arith.constant 1 : index
    %c2_382 = arith.constant 2 : index
    %c0_383 = arith.constant 0 : index
    %c0_384 = arith.constant 0 : index
    %475 = vector.load %arg7[%c1_380, %c1_381, %c2_382, %c0_383, %c0_384] : memref<2x2x3x32x32xf32, #tpu.memory_space<vmem>>, vector<1x1x1x32x32xf32>
    %476 = vector.shape_cast %475 : vector<1x1x1x32x32xf32> to vector<32x32xf32>
    %cst_385 = arith.constant dense<0.000000e+00> : vector<8x32xf32>
    %477 = tpu.matmul %398, %476, %cst_385 {dimension_numbers = #tpu.dot_dimension_numbers<[1], [0], [0], [1], [0, 0, 1, 1], [], []>} : vector<8x32xf32>, vector<32x32xf32>, vector<8x32xf32> -> vector<8x32xf32>
    %c1_386 = arith.constant 1 : index
    %c1_387 = arith.constant 1 : index
    %c2_388 = arith.constant 2 : index
    %c0_389 = arith.constant 0 : index
    %478 = vector.load %arg8[%c1_386, %c1_387, %c2_388, %c0_389] : memref<2x2x5x32xf32, #tpu.memory_space<vmem>>, vector<1x1x1x32xf32>
    %479 = vector.shape_cast %478 : vector<1x1x1x32xf32> to vector<1x32xf32>
    %480 = vector.broadcast %479 : vector<1x32xf32> to vector<8x32xf32>
    %481 = arith.addf %477, %480 : vector<8x32xf32>
    %cst_390 = arith.constant dense<0.000000e+00> : vector<8x8xf32>
    %482 = tpu.matmul %467, %474, %cst_390 {dimension_numbers = #tpu.dot_dimension_numbers<[1], [1], [0], [0], [0, 0, 1, 0], [], []>} : vector<8x32xf32>, vector<8x32xf32>, vector<8x8xf32> -> vector<8x8xf32>
    %cst_391 = arith.constant dense<0xFF800000> : vector<8xf32>
    %483 = vector.multi_reduction <maximumf>, %482, %cst_391 [1] : vector<8x8xf32> to vector<8xf32>
    %484 = vector.shape_cast %483 : vector<8xf32> to vector<8x1xf32>
    %485 = vector.broadcast %484 : vector<8x1xf32> to vector<8x8xf32>
    %486 = arith.subf %482, %485 : vector<8x8xf32>
    %487 = math.exp %486 : vector<8x8xf32>
    %cst_392 = arith.constant dense<0.000000e+00> : vector<8xf32>
    %488 = vector.multi_reduction <add>, %487, %cst_392 [1] : vector<8x8xf32> to vector<8xf32>
    %489 = vector.shape_cast %488 : vector<8xf32> to vector<8x1xf32>
    %490 = tpu.reciprocal %489 {approx = true} : vector<8x1xf32> -> vector<8x1xf32>
    %491 = vector.broadcast %490 : vector<8x1xf32> to vector<8x8xf32>
    %492 = arith.mulf %487, %491 : vector<8x8xf32>
    %cst_393 = arith.constant dense<0.000000e+00> : vector<8x32xf32>
    %493 = tpu.matmul %492, %481, %cst_393 {dimension_numbers = #tpu.dot_dimension_numbers<[1], [0], [0], [1], [0, 0, 1, 1], [], []>} : vector<8x8xf32>, vector<8x32xf32>, vector<8x32xf32> -> vector<8x32xf32>
    %494 = arith.addf %493, %460 : vector<8x32xf32>
    %cst_394 = arith.constant dense<0.000000e+00> : vector<8xf32>
    %495 = vector.multi_reduction <add>, %494, %cst_394 [1] : vector<8x32xf32> to vector<8xf32>
    %496 = vector.shape_cast %495 : vector<8xf32> to vector<8x1xf32>
    %cst_395 = arith.constant 3.200000e+01 : f32
    %497 = vector.broadcast %cst_395 : f32 to vector<8x1xf32>
    %498 = arith.divf %496, %497 : vector<8x1xf32>
    %499 = vector.broadcast %498 : vector<8x1xf32> to vector<8x32xf32>
    %500 = arith.subf %494, %499 : vector<8x32xf32>
    %501 = arith.mulf %500, %500 : vector<8x32xf32>
    %cst_396 = arith.constant dense<0.000000e+00> : vector<8xf32>
    %502 = vector.multi_reduction <add>, %501, %cst_396 [1] : vector<8x32xf32> to vector<8xf32>
    %503 = vector.shape_cast %502 : vector<8xf32> to vector<8x1xf32>
    %cst_397 = arith.constant 3.200000e+01 : f32
    %504 = vector.broadcast %cst_397 : f32 to vector<8x1xf32>
    %505 = arith.divf %503, %504 : vector<8x1xf32>
    %506 = vector.broadcast %498 : vector<8x1xf32> to vector<8x32xf32>
    %507 = arith.subf %494, %506 : vector<8x32xf32>
    %cst_398 = arith.constant 9.99999974E-6 : f32
    %508 = vector.broadcast %cst_398 : f32 to vector<8x1xf32>
    %509 = arith.addf %505, %508 : vector<8x1xf32>
    %510 = math.rsqrt %509 : vector<8x1xf32>
    %511 = vector.broadcast %510 : vector<8x1xf32> to vector<8x32xf32>
    %512 = arith.mulf %507, %511 : vector<8x32xf32>
    %c1_399 = arith.constant 1 : index
    %c1_400 = arith.constant 1 : index
    %c3_401 = arith.constant 3 : index
    %c0_402 = arith.constant 0 : index
    %513 = vector.load %arg8[%c1_399, %c1_400, %c3_401, %c0_402] : memref<2x2x5x32xf32, #tpu.memory_space<vmem>>, vector<1x1x1x32xf32>
    %514 = vector.shape_cast %513 : vector<1x1x1x32xf32> to vector<1x32xf32>
    %515 = vector.broadcast %514 : vector<1x32xf32> to vector<8x32xf32>
    %516 = arith.mulf %512, %515 : vector<8x32xf32>
    %c1_403 = arith.constant 1 : index
    %c1_404 = arith.constant 1 : index
    %c4_405 = arith.constant 4 : index
    %c0_406 = arith.constant 0 : index
    %517 = vector.load %arg8[%c1_403, %c1_404, %c4_405, %c0_406] : memref<2x2x5x32xf32, #tpu.memory_space<vmem>>, vector<1x1x1x32xf32>
    %518 = vector.shape_cast %517 : vector<1x1x1x32xf32> to vector<1x32xf32>
    %519 = vector.broadcast %518 : vector<1x32xf32> to vector<8x32xf32>
    %520 = arith.addf %516, %519 : vector<8x32xf32>
    %521 = tpu.concatenate %277, %520 in 0 : vector<8x32xf32>, vector<8x32xf32> -> vector<16x32xf32>
    %c0_407 = arith.constant 0 : index
    %c0_408 = arith.constant 0 : index
    %522 = vector.load %arg9[%c0_407, %c0_408] : memref<16x32xf32, #tpu.memory_space<vmem>>, vector<16x32xf32>
    tpu.vector_store %arg9[%c0_407, %c0_408], %521 {strides = array<i32>} : memref<16x32xf32, #tpu.memory_space<vmem>>, vector<16x32xf32>,
    return
  }
}

</mosaic_0001>

<llo_original>
// kernel: tpu_custom_call.1
$region0: #{tpu_custom_call.1}
  #allocation0 [shape = 'u32[]', space=smem, size = 0x4, offset = 0x4, fixed_abs, tag = 'smem constant byte address 0x4 - core index']
  #allocation1 [shape = 'u32[144,128]{1,0:T(1,128)}', space=vmem, size = 0x12000, scoped, tag = 'internal scratch']
  %s0 = inlined_call_operand.vmem [shape: f32[16,4], index: 0, kind: input, shape index: {}]
  %s1 = inlined_call_operand.vmem [shape: f32[16,3], index: 1, kind: input, shape index: {}]
  %s2 = inlined_call_operand.vmem [shape: f32[16,4], index: 2, kind: input, shape index: {}]
  %s3 = inlined_call_operand.vmem [shape: f32[3,4,32], index: 3, kind: input, shape index: {}]
  %s4 = inlined_call_operand.vmem [shape: f32[3,32], index: 4, kind: input, shape index: {}]
  %s5 = inlined_call_operand.vmem [shape: f32[32,32], index: 5, kind: input, shape index: {}]
  %s6 = inlined_call_operand.vmem [shape: f32[4,1,32], index: 6, kind: input, shape index: {}]
  %s7 = inlined_call_operand.hbm [shape: f32[2,2,3,32,32], index: 7, kind: input, shape index: {}]
  %s8 = inlined_call_operand.vmem [shape: f32[2,2,5,32], index: 8, kind: input, shape index: {}]
  %s9 = inlined_call_operand.hbm [shape: f32[16,32], index: 9, kind: output, shape index: {}]
  %s10 = sld [smem:[#allocation0]]
  $region50: #{tpu_custom_call.1} parent=0
    _
  %s12 = ssub.s32 1, %s10
  %s13 = scalar_select 0, %s12, %s10
  $region1: #{tpu_custom_call.1} parent=0
    #allocation2 [shape = 'u8[196608]{0}', space=vmem, size = 0x30000, scoped, tag = 'input window, operand 7, single buffered']
    #allocation3 [shape = 's32[1]{0}', space=sflag, size = 0x4, scoped, tag = 'scoped memory for tpu_custom_call.1']
    #allocation4 [shape = 's32[1]{0}', space=sflag, size = 0x4, scoped, tag = 'scoped memory for tpu_custom_call.1']
    #allocation5 [shape = 'u8[8192]{0}', space=vmem, size = 0x2000, scoped, tag = 'output window, operand 0, single buffered']
    %14 = vsyncpa [#allocation3], 0
    %15 = vsyncpa [#allocation4], 0
    // Predicated region
    $region2: #{tpu_custom_call.1} parent=1 // pred_check
      _
    $region3: #{tpu_custom_call.1} parent=1 // pred_check_branch
      %17 = sbr.rel (0) target = $region5
    $region4: #{tpu_custom_call.1} parent=1 // pred_region
      _
    $region5: #{tpu_custom_call.1} parent=1 // pred_fallthru
      _
    // Predicated region
    $region6: #{tpu_custom_call.1} parent=1 // pred_check
      _
    $region7: #{tpu_custom_call.1} parent=1 // pred_check_branch
      %19 = sbr.rel (0) target = $region9
    $region8: #{tpu_custom_call.1} parent=1 // pred_region
      _
    $region9: #{tpu_custom_call.1} parent=1 // pred_fallthru
      _
    // Predicated region
    $region10: #{tpu_custom_call.1} parent=1 // pred_check
      _
    $region11: #{tpu_custom_call.1} parent=1 // pred_check_branch
      %21 = sbr.rel (0) target = $region13
    $region12: #{tpu_custom_call.1} parent=1 // pred_region
      _
    $region13: #{tpu_custom_call.1} parent=1 // pred_fallthru
      _
    // Predicated region
    $region14: #{tpu_custom_call.1} parent=1 // pred_check
      _
    $region15: #{tpu_custom_call.1} parent=1 // pred_check_branch
      %23 = sbr.rel (0) target = $region17
    $region16: #{tpu_custom_call.1} parent=1 // pred_region
      _
    $region17: #{tpu_custom_call.1} parent=1 // pred_fallthru
      _
    // Predicated region
    $region18: #{tpu_custom_call.1} parent=1 // pred_check
      _
    $region19: #{tpu_custom_call.1} parent=1 // pred_check_branch
      %25 = sbr.rel (0) target = $region21
    $region20: #{tpu_custom_call.1} parent=1 // pred_region
      _
    $region21: #{tpu_custom_call.1} parent=1 // pred_fallthru
      _
    // Predicated region
    $region22: #{tpu_custom_call.1} parent=1 // pred_check
      _
    $region23: #{tpu_custom_call.1} parent=1 // pred_check_branch
      %27 = sbr.rel (0) target = $region25
    $region24: #{tpu_custom_call.1} parent=1 // pred_region
      _
    $region25: #{tpu_custom_call.1} parent=1 // pred_fallthru
      _
    // Predicated region
    $region26: #{tpu_custom_call.1} parent=1 // pred_check
      _
    $region27: #{tpu_custom_call.1} parent=1 // pred_check_branch
      %29 = sbr.rel (0) target = $region29
    $region28: #{tpu_custom_call.1} parent=1 // pred_region
      _
    $region29: #{tpu_custom_call.1} parent=1 // pred_fallthru
      _
    // Predicated region
    $region30: #{tpu_custom_call.1} parent=1 // pred_check
      _
    $region31: #{tpu_custom_call.1} parent=1 // pred_check_branch
      %31 = sbr.rel (0) target = $region33
    $region32: #{tpu_custom_call.1} parent=1 // pred_region
      %s33 = ssub.s32 6144, 6144
      %34 = vsyncadd [#allocation3], %s33
      %s35 = sshll.u32 [#allocation2], 4
      %s36 = int_to_ptr.vmem [resolvable:$true] %s35
      %41 = dma.hbm_to_vmem [thread:$0]  %s7, 6144, %s36, [#allocation3], 128, 128, 8
    $region33: #{tpu_custom_call.1} parent=1 // pred_fallthru
      _
    // Predicated region
    $region34: #{tpu_custom_call.1} parent=1 // pred_check
      _
    $region35: #{tpu_custom_call.1} parent=1 // pred_check_branch
      %43 = sbr.rel (0) target = $region37
    $region36: #{tpu_custom_call.1} parent=1 // pred_region
      _
    $region37: #{tpu_custom_call.1} parent=1 // pred_fallthru
      _
    // Predicated region
    $region38: #{tpu_custom_call.1} parent=1 // pred_check
      _
    $region39: #{tpu_custom_call.1} parent=1 // pred_check_branch
      %45 = sbr.rel (0) target = $region41
    $region40: #{tpu_custom_call.1} parent=1 // pred_region
      %46 = dma.done [#allocation3], 6144
    $region41: #{tpu_custom_call.1} parent=1 // pred_fallthru
      _
    %v47 = vld [vmem:[%s0] sm:$0xff]
    %v48 = vld [vmem:[%s0 + $0x8] sm:$0xff]
    %v49 = vld [vmem:[%s1] sm:$0xff]
    %v50 = vld [vmem:[%s1 + $0x8] sm:$0xff]
    %v51 = vld [vmem:[%s2] sm:$0xff]
    %v52 = vld [vmem:[%s2 + $0x8] sm:$0xff]
    %v53 = vld [vmem:[%s3] sm:$0xf]
    %v54 = vld [vmem:[%s4] sm:$0x7]
    %vm55 = vcmask 23552
    %v57 = vsel %vm55, %v49, 0
    %v60 = vsel %vm55, %v50, 0
    %vm62 = vcmask 1042432
    %v64 = vsel %vm62, %v54, 0
    %66 = vmatprep.subr.mxu0 0.0
    %67 = vmatpush1.msra.mxu0 0.0
    %68 = vmatprep.subr.mxu0 0.0
    %69 = vmatpush1.msra.mxu0 0.0
    %70 = vmatprep.subr.mxu0 0.0
    %71 = vmatpush1.msra.mxu0 0.0
    %72 = vmatprep.subr.mxu0 0.0
    %73 = vmatpush1.msra.mxu0 0.0
    %74 = vmatprep.subr.mxu0 0.0
    %75 = vmatpush1.msra.mxu0 0.0
    %76 = vmatprep.subr.mxu0 0.0
    %77 = vmatpush1.msra.mxu0 0.0
    %78 = vmatprep.subr.mxu0 0.0
    %79 = vmatpush1.msra.mxu0 0.0
    %80 = vmatprep.subr.mxu0 0.0
    %81 = vmatpush1.msra.mxu0 0.0
    %82 = vmatprep.subr.mxu0 0.0
    %83 = vmatpush1.msra.mxu0 0.0
    %84 = vmatprep.subr.mxu0 0.0
    %85 = vmatpush1.msra.mxu0 0.0
    %86 = vmatprep.subr.mxu0 0.0
    %87 = vmatpush1.msra.mxu0 0.0
    %88 = vmatprep.subr.mxu0 0.0
    %89 = vmatpush1.msra.mxu0 0.0
    %90 = vmatprep.subr.mxu0 0.0
    %91 = vmatpush1.msra.mxu0 0.0
    %92 = vmatprep.subr.mxu0 0.0
    %93 = vmatpush1.msra.mxu0 0.0
    %94 = vmatprep.subr.mxu0 0.0
    %95 = vmatpush1.msra.mxu0 0.0
    %96 = vmatprep.subr.mxu0 0.0
    %97 = vmatpush1.msra.mxu0 %v64
    %98 = vmatprep.subr.mxu0 0.0
    %99 = vmatpush2.msra.mxu0 0.0
    %100 = vmatprep.subr.mxu0 0.0
    %101 = vmatpush2.msra.mxu0 0.0
    %102 = vmatprep.subr.mxu0 0.0
    %103 = vmatpush2.msra.mxu0 0.0
    %104 = vmatprep.subr.mxu0 0.0
    %105 = vmatpush2.msra.mxu0 0.0
    %106 = vmatprep.subr.mxu0 0.0
    %107 = vmatpush2.msra.mxu0 0.0
    %108 = vmatprep.subr.mxu0 0.0
    %109 = vmatpush2.msra.mxu0 0.0
    %110 = vmatprep.subr.mxu0 0.0
    %111 = vmatpush2.msra.mxu0 0.0
    %112 = vmatprep.subr.mxu0 0.0
    %113 = vmatpush2.msra.mxu0 0.0
    %114 = vmatprep.subr.mxu0 0.0
    %115 = vmatpush2.msra.mxu0 0.0
    %116 = vmatprep.subr.mxu0 0.0
    %117 = vmatpush2.msra.mxu0 0.0
    %118 = vmatprep.subr.mxu0 0.0
    %119 = vmatpush2.msra.mxu0 0.0
    %120 = vmatprep.subr.mxu0 0.0
    %121 = vmatpush2.msra.mxu0 0.0
    %122 = vmatprep.subr.mxu0 0.0
    %123 = vmatpush2.msra.mxu0 0.0
    %124 = vmatprep.subr.mxu0 0.0
    %125 = vmatpush2.msra.mxu0 0.0
    %126 = vmatprep.subr.mxu0 0.0
    %127 = vmatpush2.msra.mxu0 0.0
    %128 = vmatprep.subr.mxu0 0.0
    %129 = vmatpush2.msra.mxu0 0.0
    %130 = vmatprep.mubr.f32.mxu0 0.0
    %131 = vmatmul.mubr.f32.gmra.mxu0 %v57
    %v132 = vpop.f32.mrf.mxu0
    %v133 = vadd.f32 0.0, %v132
    %v134 = vpop.f32.mrf.mxu0
    %135 = vmatprep.mubr.f32.mxu0 0.0
    %136 = vmatmul.mubr.f32.gmra.mxu0 %v60
    %v137 = vpop.f32.mrf.mxu0
    %v138 = vadd.f32 0.0, %v137
    %v139 = vpop.f32.mrf.mxu0
    %140 = vdwg.mxu0
    %vm141 = vcmask 31744
    %v143 = vsel %vm141, %v47, 0
    %v146 = vsel %vm141, %v48, 0
    %vm148 = vcmask 1043456
    %v150 = vsel %vm148, %v53, 0
    %152 = vmatprep.subr.mxu0 0.0
    %153 = vmatpush1.msra.mxu0 0.0
    %154 = vmatprep.subr.mxu0 0.0
    %155 = vmatpush1.msra.mxu0 0.0
    %156 = vmatprep.subr.mxu0 0.0
    %157 = vmatpush1.msra.mxu0 0.0
    %158 = vmatprep.subr.mxu0 0.0
    %159 = vmatpush1.msra.mxu0 0.0
    %160 = vmatprep.subr.mxu0 0.0
    %161 = vmatpush1.msra.mxu0 0.0
    %162 = vmatprep.subr.mxu0 0.0
    %163 = vmatpush1.msra.mxu0 0.0
    %164 = vmatprep.subr.mxu0 0.0
    %165 = vmatpush1.msra.mxu0 0.0
    %166 = vmatprep.subr.mxu0 0.0
    %167 = vmatpush1.msra.mxu0 0.0
    %168 = vmatprep.subr.mxu0 0.0
    %169 = vmatpush1.msra.mxu0 0.0
    %170 = vmatprep.subr.mxu0 0.0
    %171 = vmatpush1.msra.mxu0 0.0
    %172 = vmatprep.subr.mxu0 0.0
    %173 = vmatpush1.msra.mxu0 0.0
    %174 = vmatprep.subr.mxu0 0.0
    %175 = vmatpush1.msra.mxu0 0.0
    %176 = vmatprep.subr.mxu0 0.0
    %177 = vmatpush1.msra.mxu0 0.0
    %178 = vmatprep.subr.mxu0 0.0
    %179 = vmatpush1.msra.mxu0 0.0
    %180 = vmatprep.subr.mxu0 0.0
    %181 = vmatpush1.msra.mxu0 0.0
    %182 = vmatprep.subr.mxu0 0.0
    %183 = vmatpush1.msra.mxu0 %v150
    %184 = vmatprep.subr.mxu0 0.0
    %185 = vmatpush2.msra.mxu0 0.0
    %186 = vmatprep.subr.mxu0 0.0
    %187 = vmatpush2.msra.mxu0 0.0
    %188 = vmatprep.subr.mxu0 0.0
    %189 = vmatpush2.msra.mxu0 0.0
    %190 = vmatprep.subr.mxu0 0.0
    %191 = vmatpush2.msra.mxu0 0.0
    %192 = vmatprep.subr.mxu0 0.0
    %193 = vmatpush2.msra.mxu0 0.0
    %194 = vmatprep.subr.mxu0 0.0
    %195 = vmatpush2.msra.mxu0 0.0
    %196 = vmatprep.subr.mxu0 0.0
    %197 = vmatpush2.msra.mxu0 0.0
    %198 = vmatprep.subr.mxu0 0.0
    %199 = vmatpush2.msra.mxu0 0.0
    %200 = vmatprep.subr.mxu0 0.0
    %201 = vmatpush2.msra.mxu0 0.0
    %202 = vmatprep.subr.mxu0 0.0
    %203 = vmatpush2.msra.mxu0 0.0
    %204 = vmatprep.subr.mxu0 0.0
    %205 = vmatpush2.msra.mxu0 0.0
    %206 = vmatprep.subr.mxu0 0.0
    %207 = vmatpush2.msra.mxu0 0.0
    %208 = vmatprep.subr.mxu0 0.0
    %209 = vmatpush2.msra.mxu0 0.0
    %210 = vmatprep.subr.mxu0 0.0
    %211 = vmatpush2.msra.mxu0 0.0
    %212 = vmatprep.subr.mxu0 0.0
    %213 = vmatpush2.msra.mxu0 0.0
    %214 = vmatprep.subr.mxu0 0.0
    %215 = vmatpush2.msra.mxu0 0.0
    %216 = vmatprep.mubr.f32.mxu0 0.0
    %217 = vmatmul.mubr.f32.gmra.mxu0 %v143
    %v218 = vpop.f32.mrf.mxu0
    %v219 = vadd.f32 %v133, %v218
    %v220 = vpop.f32.mrf.mxu0
    %221 = vmatprep.mubr.f32.mxu0 0.0
    %222 = vmatmul.mubr.f32.gmra.mxu0 %v146
    %v223 = vpop.f32.mrf.mxu0
    %v224 = vadd.f32 %v138, %v223
    %v225 = vpop.f32.mrf.mxu0
    %226 = vdwg.mxu0
    %v227 = vld [vmem:[%s6] sm:$0x1]
    %v229 = vlaneseq
    %v230 = vshrl.u32 %v229, 7
    %v231 = vsub.s32 0, %v230
    %v232 = vrot.slane %v227, %v231
    %v234 = vadd.f32 %v219, %v232
    %v235 = vadd.f32 %v224, %v232
    %v236 = vmax.f32 %v234, 0.0
    %v237 = vmax.f32 %v235, 0.0
    %v238 = vld [vmem:[%s5] sm:$0xff]
    %v239 = vld [vmem:[%s5 + $0x8] sm:$0xff]
    %v240 = vld [vmem:[%s5 + $0x10] sm:$0xff]
    %v241 = vld [vmem:[%s5 + $0x18] sm:$0xff]
    %s242 = scalar_lea.vmem %s6, 1
    %v243 = vld [vmem:[%s242] sm:$0x1]
    %v245 = vlaneseq
    %v246 = vshrl.u32 %v245, 7
    %v247 = vsub.s32 0, %v246
    %v248 = vrot.slane %v243, %v247
    %vm250 = vcmask 261120
    %v252 = vsel %vm250, %v236, 0
    %v255 = vsel %vm250, %v237, 0
    %257 = vmatprep.subr.mxu0 0.0
    %258 = vmatpush1.msra.mxu0 0.0
    %259 = vmatprep.subr.mxu0 0.0
    %260 = vmatpush1.msra.mxu0 0.0
    %261 = vmatprep.subr.mxu0 0.0
    %262 = vmatpush1.msra.mxu0 0.0
    %263 = vmatprep.subr.mxu0 0.0
    %264 = vmatpush1.msra.mxu0 0.0
    %265 = vmatprep.subr.mxu0 0.0
    %266 = vmatpush1.msra.mxu0 0.0
    %267 = vmatprep.subr.mxu0 0.0
    %268 = vmatpush1.msra.mxu0 0.0
    %269 = vmatprep.subr.mxu0 0.0
    %270 = vmatpush1.msra.mxu0 0.0
    %271 = vmatprep.subr.mxu0 0.0
    %272 = vmatpush1.msra.mxu0 0.0
    %273 = vmatprep.subr.mxu0 0.0
    %274 = vmatpush1.msra.mxu0 0.0
    %275 = vmatprep.subr.mxu0 0.0
    %276 = vmatpush1.msra.mxu0 0.0
    %277 = vmatprep.subr.mxu0 0.0
    %278 = vmatpush1.msra.mxu0 0.0
    %279 = vmatprep.subr.mxu0 0.0
    %280 = vmatpush1.msra.mxu0 0.0
    %281 = vmatprep.subr.mxu0 0.0
    %282 = vmatpush1.msra.mxu0 %v241
    %283 = vmatprep.subr.mxu0 0.0
    %284 = vmatpush1.msra.mxu0 %v240
    %285 = vmatprep.subr.mxu0 0.0
    %286 = vmatpush1.msra.mxu0 %v239
    %287 = vmatprep.subr.mxu0 0.0
    %288 = vmatpush1.msra.mxu0 %v238
    %289 = vmatprep.subr.mxu0 0.0
    %290 = vmatpush2.msra.mxu0 0.0
    %291 = vmatprep.subr.mxu0 0.0
    %292 = vmatpush2.msra.mxu0 0.0
    %293 = vmatprep.subr.mxu0 0.0
    %294 = vmatpush2.msra.mxu0 0.0
    %295 = vmatprep.subr.mxu0 0.0
    %296 = vmatpush2.msra.mxu0 0.0
    %297 = vmatprep.subr.mxu0 0.0
    %298 = vmatpush2.msra.mxu0 0.0
    %299 = vmatprep.subr.mxu0 0.0
    %300 = vmatpush2.msra.mxu0 0.0
    %301 = vmatprep.subr.mxu0 0.0
    %302 = vmatpush2.msra.mxu0 0.0
    %303 = vmatprep.subr.mxu0 0.0
    %304 = vmatpush2.msra.mxu0 0.0
    %305 = vmatprep.subr.mxu0 0.0
    %306 = vmatpush2.msra.mxu0 0.0
    %307 = vmatprep.subr.mxu0 0.0
    %308 = vmatpush2.msra.mxu0 0.0
    %309 = vmatprep.subr.mxu0 0.0
    %310 = vmatpush2.msra.mxu0 0.0
    %311 = vmatprep.subr.mxu0 0.0
    %312 = vmatpush2.msra.mxu0 0.0
    %313 = vmatprep.subr.mxu0 0.0
    %314 = vmatpush2.msra.mxu0 0.0
    %315 = vmatprep.subr.mxu0 0.0
    %316 = vmatpush2.msra.mxu0 0.0
    %317 = vmatprep.subr.mxu0 0.0
    %318 = vmatpush2.msra.mxu0 0.0
    %319 = vmatprep.subr.mxu0 0.0
    %320 = vmatpush2.msra.mxu0 0.0
    %321 = vmatprep.mubr.f32.mxu0 0.0
    %322 = vmatmul.mubr.f32.gmra.mxu0 %v252
    %v323 = vpop.f32.mrf.mxu0
    %v324 = vadd.f32 %v248, %v323
    %v325 = vpop.f32.mrf.mxu0
    %326 = vmatprep.mubr.f32.mxu0 0.0
    %327 = vmatmul.mubr.f32.gmra.mxu0 %v255
    %v328 = vpop.f32.mrf.mxu0
    %v329 = vadd.f32 %v248, %v328
    %v330 = vpop.f32.mrf.mxu0
    %331 = vdwg.mxu0
    %s332 = scalar_lea.vmem %s3, 4
    %v333 = vld [vmem:[%s332] sm:$0xf]
    %s334 = scalar_lea.vmem %s6, 2
    %v335 = vld [vmem:[%s334] sm:$0x1]
    %v337 = vlaneseq
    %v338 = vshrl.u32 %v337, 7
    %v339 = vsub.s32 0, %v338
    %v340 = vrot.slane %v335, %v339
    %v343 = vsel %vm148, %v333, 0
    %345 = vmatprep.subr.mxu0 0.0
    %346 = vmatpush1.msra.mxu0 0.0
    %347 = vmatprep.subr.mxu0 0.0
    %348 = vmatpush1.msra.mxu0 0.0
    %349 = vmatprep.subr.mxu0 0.0
    %350 = vmatpush1.msra.mxu0 0.0
    %351 = vmatprep.subr.mxu0 0.0
    %352 = vmatpush1.msra.mxu0 0.0
    %353 = vmatprep.subr.mxu0 0.0
    %354 = vmatpush1.msra.mxu0 0.0
    %355 = vmatprep.subr.mxu0 0.0
    %356 = vmatpush1.msra.mxu0 0.0
    %357 = vmatprep.subr.mxu0 0.0
    %358 = vmatpush1.msra.mxu0 0.0
    %359 = vmatprep.subr.mxu0 0.0
    %360 = vmatpush1.msra.mxu0 0.0
    %361 = vmatprep.subr.mxu0 0.0
    %362 = vmatpush1.msra.mxu0 0.0
    %363 = vmatprep.subr.mxu0 0.0
    %364 = vmatpush1.msra.mxu0 0.0
    %365 = vmatprep.subr.mxu0 0.0
    %366 = vmatpush1.msra.mxu0 0.0
    %367 = vmatprep.subr.mxu0 0.0
    %368 = vmatpush1.msra.mxu0 0.0
    %369 = vmatprep.subr.mxu0 0.0
    %370 = vmatpush1.msra.mxu0 0.0
    %371 = vmatprep.subr.mxu0 0.0
    %372 = vmatpush1.msra.mxu0 0.0
    %373 = vmatprep.subr.mxu0 0.0
    %374 = vmatpush1.msra.mxu0 0.0
    %375 = vmatprep.subr.mxu0 0.0
    %376 = vmatpush1.msra.mxu0 %v343
    %377 = vmatprep.subr.mxu0 0.0
    %378 = vmatpush2.msra.mxu0 0.0
    %379 = vmatprep.subr.mxu0 0.0
    %380 = vmatpush2.msra.mxu0 0.0
    %381 = vmatprep.subr.mxu0 0.0
    %382 = vmatpush2.msra.mxu0 0.0
    %383 = vmatprep.subr.mxu0 0.0
    %384 = vmatpush2.msra.mxu0 0.0
    %385 = vmatprep.subr.mxu0 0.0
    %386 = vmatpush2.msra.mxu0 0.0
    %387 = vmatprep.subr.mxu0 0.0
    %388 = vmatpush2.msra.mxu0 0.0
    %389 = vmatprep.subr.mxu0 0.0
    %390 = vmatpush2.msra.mxu0 0.0
    %391 = vmatprep.subr.mxu0 0.0
    %392 = vmatpush2.msra.mxu0 0.0
    %393 = vmatprep.subr.mxu0 0.0
    %394 = vmatpush2.msra.mxu0 0.0
    %395 = vmatprep.subr.mxu0 0.0
    %396 = vmatpush2.msra.mxu0 0.0
    %397 = vmatprep.subr.mxu0 0.0
    %398 = vmatpush2.msra.mxu0 0.0
    %399 = vmatprep.subr.mxu0 0.0
    %400 = vmatpush2.msra.mxu0 0.0
    %401 = vmatprep.subr.mxu0 0.0
    %402 = vmatpush2.msra.mxu0 0.0
    %403 = vmatprep.subr.mxu0 0.0
    %404 = vmatpush2.msra.mxu0 0.0
    %405 = vmatprep.subr.mxu0 0.0
    %406 = vmatpush2.msra.mxu0 0.0
    %407 = vmatprep.subr.mxu0 0.0
    %408 = vmatpush2.msra.mxu0 0.0
    %409 = vmatprep.mubr.f32.mxu0 0.0
    %410 = vmatmul.mubr.f32.gmra.mxu0 %v143
    %v411 = vpop.f32.mrf.mxu0
    %v412 = vadd.f32 %v340, %v411
    %v413 = vpop.f32.mrf.mxu0
    %414 = vmatprep.mubr.f32.mxu0 0.0
    %415 = vmatmul.mubr.f32.gmra.mxu0 %v146
    %v416 = vpop.f32.mrf.mxu0
    %v417 = vadd.f32 %v340, %v416
    %v418 = vpop.f32.mrf.mxu0
    %419 = vdwg.mxu0
    %s420 = scalar_lea.vmem %s3, 8
    %v421 = vld [vmem:[%s420] sm:$0xf]
    %s422 = scalar_lea.vmem %s6, 3
    %v423 = vld [vmem:[%s422] sm:$0x1]
    %v425 = vlaneseq
    %v426 = vshrl.u32 %v425, 7
    %v427 = vsub.s32 0, %v426
    %v428 = vrot.slane %v423, %v427
    %v431 = vsel %vm141, %v51, 0
    %v434 = vsel %vm141, %v52, 0
    %v437 = vsel %vm148, %v421, 0
    %439 = vmatprep.subr.mxu0 0.0
    %440 = vmatpush1.msra.mxu0 0.0
    %441 = vmatprep.subr.mxu0 0.0
    %442 = vmatpush1.msra.mxu0 0.0
    %443 = vmatprep.subr.mxu0 0.0
    %444 = vmatpush1.msra.mxu0 0.0
    %445 = vmatprep.subr.mxu0 0.0
    %446 = vmatpush1.msra.mxu0 0.0
    %447 = vmatprep.subr.mxu0 0.0
    %448 = vmatpush1.msra.mxu0 0.0
    %449 = vmatprep.subr.mxu0 0.0
    %450 = vmatpush1.msra.mxu0 0.0
    %451 = vmatprep.subr.mxu0 0.0
    %452 = vmatpush1.msra.mxu0 0.0
    %453 = vmatprep.subr.mxu0 0.0
    %454 = vmatpush1.msra.mxu0 0.0
    %455 = vmatprep.subr.mxu0 0.0
    %456 = vmatpush1.msra.mxu0 0.0
    %457 = vmatprep.subr.mxu0 0.0
    %458 = vmatpush1.msra.mxu0 0.0
    %459 = vmatprep.subr.mxu0 0.0
    %460 = vmatpush1.msra.mxu0 0.0
    %461 = vmatprep.subr.mxu0 0.0
    %462 = vmatpush1.msra.mxu0 0.0
    %463 = vmatprep.subr.mxu0 0.0
    %464 = vmatpush1.msra.mxu0 0.0
    %465 = vmatprep.subr.mxu0 0.0
    %466 = vmatpush1.msra.mxu0 0.0
    %467 = vmatprep.subr.mxu0 0.0
    %468 = vmatpush1.msra.mxu0 0.0
    %469 = vmatprep.subr.mxu0 0.0
    %470 = vmatpush1.msra.mxu0 %v437
    %471 = vmatprep.subr.mxu0 0.0
    %472 = vmatpush2.msra.mxu0 0.0
    %473 = vmatprep.subr.mxu0 0.0
    %474 = vmatpush2.msra.mxu0 0.0
    %475 = vmatprep.subr.mxu0 0.0
    %476 = vmatpush2.msra.mxu0 0.0
    %477 = vmatprep.subr.mxu0 0.0
    %478 = vmatpush2.msra.mxu0 0.0
    %479 = vmatprep.subr.mxu0 0.0
    %480 = vmatpush2.msra.mxu0 0.0
    %481 = vmatprep.subr.mxu0 0.0
    %482 = vmatpush2.msra.mxu0 0.0
    %483 = vmatprep.subr.mxu0 0.0
    %484 = vmatpush2.msra.mxu0 0.0
    %485 = vmatprep.subr.mxu0 0.0
    %486 = vmatpush2.msra.mxu0 0.0
    %487 = vmatprep.subr.mxu0 0.0
    %488 = vmatpush2.msra.mxu0 0.0
    %489 = vmatprep.subr.mxu0 0.0
    %490 = vmatpush2.msra.mxu0 0.0
    %491 = vmatprep.subr.mxu0 0.0
    %492 = vmatpush2.msra.mxu0 0.0
    %493 = vmatprep.subr.mxu0 0.0
    %494 = vmatpush2.msra.mxu0 0.0
    %495 = vmatprep.subr.mxu0 0.0
    %496 = vmatpush2.msra.mxu0 0.0
    %497 = vmatprep.subr.mxu0 0.0
    %498 = vmatpush2.msra.mxu0 0.0
    %499 = vmatprep.subr.mxu0 0.0
    %500 = vmatpush2.msra.mxu0 0.0
    %501 = vmatprep.subr.mxu0 0.0
    %502 = vmatpush2.msra.mxu0 0.0
    %503 = vmatprep.mubr.f32.mxu0 0.0
    %504 = vmatmul.mubr.f32.gmra.mxu0 %v431
    %v505 = vpop.f32.mrf.mxu0
    %v506 = vadd.f32 %v428, %v505
    %v507 = vpop.f32.mrf.mxu0
    %508 = vmatprep.mubr.f32.mxu0 0.0
    %509 = vmatmul.mubr.f32.gmra.mxu0 %v434
    %v510 = vpop.f32.mrf.mxu0
    %v511 = vadd.f32 %v428, %v510
    %v512 = vpop.f32.mrf.mxu0
    %513 = vdwg.mxu0
    %v514 = vld [vmem:[#allocation2] sm:$0xff]
    %v515 = vld [vmem:[#allocation2 + $0x8] sm:$0xff]
    %v516 = vld [vmem:[#allocation2 + $0x10] sm:$0xff]
    %v517 = vld [vmem:[#allocation2 + $0x18] sm:$0xff]
    %v518 = vld [vmem:[%s8] sm:$0x1]
    %v519 = vlaneseq
    %v520 = vshrl.u32 %v519, 7
    %v521 = vsub.s32 0, %v520
    %v522 = vrot.slane %v518, %v521
    %v524 = vsel %vm250, %v324, 0
    %526 = vmatprep.subr.mxu0 0.0
    %527 = vmatpush1.msra.mxu0 0.0
    %528 = vmatprep.subr.mxu0 0.0
    %529 = vmatpush1.msra.mxu0 0.0
    %530 = vmatprep.subr.mxu0 0.0
    %531 = vmatpush1.msra.mxu0 0.0
    %532 = vmatprep.subr.mxu0 0.0
    %533 = vmatpush1.msra.mxu0 0.0
    %534 = vmatprep.subr.mxu0 0.0
    %535 = vmatpush1.msra.mxu0 0.0
    %536 = vmatprep.subr.mxu0 0.0
    %537 = vmatpush1.msra.mxu0 0.0
    %538 = vmatprep.subr.mxu0 0.0
    %539 = vmatpush1.msra.mxu0 0.0
    %540 = vmatprep.subr.mxu0 0.0
    %541 = vmatpush1.msra.mxu0 0.0
    %542 = vmatprep.subr.mxu0 0.0
    %543 = vmatpush1.msra.mxu0 0.0
    %544 = vmatprep.subr.mxu0 0.0
    %545 = vmatpush1.msra.mxu0 0.0
    %546 = vmatprep.subr.mxu0 0.0
    %547 = vmatpush1.msra.mxu0 0.0
    %548 = vmatprep.subr.mxu0 0.0
    %549 = vmatpush1.msra.mxu0 0.0
    %550 = vmatprep.subr.mxu0 0.0
    %551 = vmatpush1.msra.mxu0 %v517
    %552 = vmatprep.subr.mxu0 0.0
    %553 = vmatpush1.msra.mxu0 %v516
    %554 = vmatprep.subr.mxu0 0.0
    %555 = vmatpush1.msra.mxu0 %v515
    %556 = vmatprep.subr.mxu0 0.0
    %557 = vmatpush1.msra.mxu0 %v514
    %558 = vmatprep.subr.mxu0 0.0
    %559 = vmatpush2.msra.mxu0 0.0
    %560 = vmatprep.subr.mxu0 0.0
    %561 = vmatpush2.msra.mxu0 0.0
    %562 = vmatprep.subr.mxu0 0.0
    %563 = vmatpush2.msra.mxu0 0.0
    %564 = vmatprep.subr.mxu0 0.0
    %565 = vmatpush2.msra.mxu0 0.0
    %566 = vmatprep.subr.mxu0 0.0
    %567 = vmatpush2.msra.mxu0 0.0
    %568 = vmatprep.subr.mxu0 0.0
    %569 = vmatpush2.msra.mxu0 0.0
    %570 = vmatprep.subr.mxu0 0.0
    %571 = vmatpush2.msra.mxu0 0.0
    %572 = vmatprep.subr.mxu0 0.0
    %573 = vmatpush2.msra.mxu0 0.0
    %574 = vmatprep.subr.mxu0 0.0
    %575 = vmatpush2.msra.mxu0 0.0
    %576 = vmatprep.subr.mxu0 0.0
    %577 = vmatpush2.msra.mxu0 0.0
    %578 = vmatprep.subr.mxu0 0.0
    %579 = vmatpush2.msra.mxu0 0.0
    %580 = vmatprep.subr.mxu0 0.0
    %581 = vmatpush2.msra.mxu0 0.0
    %582 = vmatprep.subr.mxu0 0.0
    %583 = vmatpush2.msra.mxu0 0.0
    %584 = vmatprep.subr.mxu0 0.0
    %585 = vmatpush2.msra.mxu0 0.0
    %586 = vmatprep.subr.mxu0 0.0
    %587 = vmatpush2.msra.mxu0 0.0
    %588 = vmatprep.subr.mxu0 0.0
    %589 = vmatpush2.msra.mxu0 0.0
    %590 = vmatprep.mubr.f32.mxu0 0.0
    %591 = vmatmul.mubr.f32.gmra.mxu0 %v524
    %v592 = vpop.f32.mrf.mxu0
    %v593 = vadd.f32 %v522, %v592
    %v594 = vpop.f32.mrf.mxu0
    %595 = vdwg.mxu0
    %s596 = scalar_lea.vmem [#allocation2], 32
    %v597 = vld [vmem:[%s596] sm:$0xff]
    %v598 = vld [vmem:[%s596 + $0x8] sm:$0xff]
    %v599 = vld [vmem:[%s596 + $0x10] sm:$0xff]
    %v600 = vld [vmem:[%s596 + $0x18] sm:$0xff]
    %v601 = vld [vmem:[%s8 + $0x1] sm:$0x1]
    %v602 = vlaneseq
    %v603 = vshrl.u32 %v602, 7
    %v604 = vsub.s32 0, %v603
    %v605 = vrot.slane %v601, %v604
    %606 = vmatprep.subr.mxu0 0.0
    %607 = vmatpush1.msra.mxu0 0.0
    %608 = vmatprep.subr.mxu0 0.0
    %609 = vmatpush1.msra.mxu0 0.0
    %610 = vmatprep.subr.mxu0 0.0
    %611 = vmatpush1.msra.mxu0 0.0
    %612 = vmatprep.subr.mxu0 0.0
    %613 = vmatpush1.msra.mxu0 0.0
    %614 = vmatprep.subr.mxu0 0.0
    %615 = vmatpush1.msra.mxu0 0.0
    %616 = vmatprep.subr.mxu0 0.0
    %617 = vmatpush1.msra.mxu0 0.0
    %618 = vmatprep.subr.mxu0 0.0
    %619 = vmatpush1.msra.mxu0 0.0
    %620 = vmatprep.subr.mxu0 0.0
    %621 = vmatpush1.msra.mxu0 0.0
    %622 = vmatprep.subr.mxu0 0.0
    %623 = vmatpush1.msra.mxu0 0.0
    %624 = vmatprep.subr.mxu0 0.0
    %625 = vmatpush1.msra.mxu0 0.0
    %626 = vmatprep.subr.mxu0 0.0
    %627 = vmatpush1.msra.mxu0 0.0
    %628 = vmatprep.subr.mxu0 0.0
    %629 = vmatpush1.msra.mxu0 0.0
    %630 = vmatprep.subr.mxu0 0.0
    %631 = vmatpush1.msra.mxu0 %v600
    %632 = vmatprep.subr.mxu0 0.0
    %633 = vmatpush1.msra.mxu0 %v599
    %634 = vmatprep.subr.mxu0 0.0
    %635 = vmatpush1.msra.mxu0 %v598
    %636 = vmatprep.subr.mxu0 0.0
    %637 = vmatpush1.msra.mxu0 %v597
    %638 = vmatprep.subr.mxu0 0.0
    %639 = vmatpush2.msra.mxu0 0.0
    %640 = vmatprep.subr.mxu0 0.0
    %641 = vmatpush2.msra.mxu0 0.0
    %642 = vmatprep.subr.mxu0 0.0
    %643 = vmatpush2.msra.mxu0 0.0
    %644 = vmatprep.subr.mxu0 0.0
    %645 = vmatpush2.msra.mxu0 0.0
    %646 = vmatprep.subr.mxu0 0.0
    %647 = vmatpush2.msra.mxu0 0.0
    %648 = vmatprep.subr.mxu0 0.0
    %649 = vmatpush2.msra.mxu0 0.0
    %650 = vmatprep.subr.mxu0 0.0
    %651 = vmatpush2.msra.mxu0 0.0
    %652 = vmatprep.subr.mxu0 0.0
    %653 = vmatpush2.msra.mxu0 0.0
    %654 = vmatprep.subr.mxu0 0.0
    %655 = vmatpush2.msra.mxu0 0.0
    %656 = vmatprep.subr.mxu0 0.0
    %657 = vmatpush2.msra.mxu0 0.0
    %658 = vmatprep.subr.mxu0 0.0
    %659 = vmatpush2.msra.mxu0 0.0
    %660 = vmatprep.subr.mxu0 0.0
    %661 = vmatpush2.msra.mxu0 0.0
    %662 = vmatprep.subr.mxu0 0.0
    %663 = vmatpush2.msra.mxu0 0.0
    %664 = vmatprep.subr.mxu0 0.0
    %665 = vmatpush2.msra.mxu0 0.0
    %666 = vmatprep.subr.mxu0 0.0
    %667 = vmatpush2.msra.mxu0 0.0
    %668 = vmatprep.subr.mxu0 0.0
    %669 = vmatpush2.msra.mxu0 0.0
    %670 = vmatprep.mubr.f32.mxu0 0.0
    %671 = vmatmul.mubr.f32.gmra.mxu0 %v524
    %v672 = vpop.f32.mrf.mxu0
    %v673 = vadd.f32 %v605, %v672
    %v674 = vpop.f32.mrf.mxu0
    %675 = vdwg.mxu0
    %s676 = scalar_lea.vmem [#allocation2], 64
    %v677 = vld [vmem:[%s676] sm:$0xff]
    %v678 = vld [vmem:[%s676 + $0x8] sm:$0xff]
    %v679 = vld [vmem:[%s676 + $0x10] sm:$0xff]
    %v680 = vld [vmem:[%s676 + $0x18] sm:$0xff]
    %v681 = vld [vmem:[%s8 + $0x2] sm:$0x1]
    %v682 = vlaneseq
    %v683 = vshrl.u32 %v682, 7
    %v684 = vsub.s32 0, %v683
    %v685 = vrot.slane %v681, %v684
    %686 = vmatprep.subr.mxu0 0.0
    %687 = vmatpush1.msra.mxu0 0.0
    %688 = vmatprep.subr.mxu0 0.0
    %689 = vmatpush1.msra.mxu0 0.0
    %690 = vmatprep.subr.mxu0 0.0
    %691 = vmatpush1.msra.mxu0 0.0
    %692 = vmatprep.subr.mxu0 0.0
    %693 = vmatpush1.msra.mxu0 0.0
    %694 = vmatprep.subr.mxu0 0.0
    %695 = vmatpush1.msra.mxu0 0.0
    %696 = vmatprep.subr.mxu0 0.0
    %697 = vmatpush1.msra.mxu0 0.0
    %698 = vmatprep.subr.mxu0 0.0
    %699 = vmatpush1.msra.mxu0 0.0
    %700 = vmatprep.subr.mxu0 0.0
    %701 = vmatpush1.msra.mxu0 0.0
    %702 = vmatprep.subr.mxu0 0.0
    %703 = vmatpush1.msra.mxu0 0.0
    %704 = vmatprep.subr.mxu0 0.0
    %705 = vmatpush1.msra.mxu0 0.0
    %706 = vmatprep.subr.mxu0 0.0
    %707 = vmatpush1.msra.mxu0 0.0
    %708 = vmatprep.subr.mxu0 0.0
    %709 = vmatpush1.msra.mxu0 0.0
    %710 = vmatprep.subr.mxu0 0.0
    %711 = vmatpush1.msra.mxu0 %v680
    %712 = vmatprep.subr.mxu0 0.0
    %713 = vmatpush1.msra.mxu0 %v679
    %714 = vmatprep.subr.mxu0 0.0
    %715 = vmatpush1.msra.mxu0 %v678
    %716 = vmatprep.subr.mxu0 0.0
    %717 = vmatpush1.msra.mxu0 %v677
    %718 = vmatprep.subr.mxu0 0.0
    %719 = vmatpush2.msra.mxu0 0.0
    %720 = vmatprep.subr.mxu0 0.0
    %721 = vmatpush2.msra.mxu0 0.0
    %722 = vmatprep.subr.mxu0 0.0
    %723 = vmatpush2.msra.mxu0 0.0
    %724 = vmatprep.subr.mxu0 0.0
    %725 = vmatpush2.msra.mxu0 0.0
    %726 = vmatprep.subr.mxu0 0.0
    %727 = vmatpush2.msra.mxu0 0.0
    %728 = vmatprep.subr.mxu0 0.0
    %729 = vmatpush2.msra.mxu0 0.0
    %730 = vmatprep.subr.mxu0 0.0
    %731 = vmatpush2.msra.mxu0 0.0
    %732 = vmatprep.subr.mxu0 0.0
    %733 = vmatpush2.msra.mxu0 0.0
    %734 = vmatprep.subr.mxu0 0.0
    %735 = vmatpush2.msra.mxu0 0.0
    %736 = vmatprep.subr.mxu0 0.0
    %737 = vmatpush2.msra.mxu0 0.0
    %738 = vmatprep.subr.mxu0 0.0
    %739 = vmatpush2.msra.mxu0 0.0
    %740 = vmatprep.subr.mxu0 0.0
    %741 = vmatpush2.msra.mxu0 0.0
    %742 = vmatprep.subr.mxu0 0.0
    %743 = vmatpush2.msra.mxu0 0.0
    %744 = vmatprep.subr.mxu0 0.0
    %745 = vmatpush2.msra.mxu0 0.0
    %746 = vmatprep.subr.mxu0 0.0
    %747 = vmatpush2.msra.mxu0 0.0
    %748 = vmatprep.subr.mxu0 0.0
    %749 = vmatpush2.msra.mxu0 0.0
    %750 = vmatprep.mubr.f32.mxu0 0.0
    %751 = vmatmul.mubr.f32.gmra.mxu0 %v524
    %v752 = vpop.f32.mrf.mxu0
    %v753 = vadd.f32 %v685, %v752
    %v754 = vpop.f32.mrf.mxu0
    %755 = vdwg.mxu0
    %v757 = vsel %vm250, %v593, 0
    %v760 = vsel %vm250, %v673, 0
    %762 = vmatprep.subr.mxu0 0.0
    %763 = vmatpush1.xpose.msra.mxu0 0.0
    %764 = vmatprep.subr.mxu0 0.0
    %765 = vmatpush1.xpose.msra.mxu0 0.0
    %766 = vmatprep.subr.mxu0 0.0
    %767 = vmatpush1.xpose.msra.mxu0 0.0
    %768 = vmatprep.subr.mxu0 0.0
    %769 = vmatpush1.xpose.msra.mxu0 0.0
    %770 = vmatprep.subr.mxu0 0.0
    %771 = vmatpush1.xpose.msra.mxu0 0.0
    %772 = vmatprep.subr.mxu0 0.0
    %773 = vmatpush1.xpose.msra.mxu0 0.0
    %774 = vmatprep.subr.mxu0 0.0
    %775 = vmatpush1.xpose.msra.mxu0 0.0
    %776 = vmatprep.subr.mxu0 0.0
    %777 = vmatpush1.xpose.msra.mxu0 0.0
    %778 = vmatprep.subr.mxu0 0.0
    %779 = vmatpush1.xpose.msra.mxu0 0.0
    %780 = vmatprep.subr.mxu0 0.0
    %781 = vmatpush1.xpose.msra.mxu0 0.0
    %782 = vmatprep.subr.mxu0 0.0
    %783 = vmatpush1.xpose.msra.mxu0 0.0
    %784 = vmatprep.subr.mxu0 0.0
    %785 = vmatpush1.xpose.msra.mxu0 0.0
    %786 = vmatprep.subr.mxu0 0.0
    %787 = vmatpush1.xpose.msra.mxu0 0.0
    %788 = vmatprep.subr.mxu0 0.0
    %789 = vmatpush1.xpose.msra.mxu0 0.0
    %790 = vmatprep.subr.mxu0 0.0
    %791 = vmatpush1.xpose.msra.mxu0 0.0
    %792 = vmatprep.subr.mxu0 0.0
    %793 = vmatpush1.xpose.msra.mxu0 %v760
    %794 = vmatprep.subr.mxu0 0.0
    %795 = vmatpush2.xpose.msra.mxu0 0.0
    %796 = vmatprep.subr.mxu0 0.0
    %797 = vmatpush2.xpose.msra.mxu0 0.0
    %798 = vmatprep.subr.mxu0 0.0
    %799 = vmatpush2.xpose.msra.mxu0 0.0
    %800 = vmatprep.subr.mxu0 0.0
    %801 = vmatpush2.xpose.msra.mxu0 0.0
    %802 = vmatprep.subr.mxu0 0.0
    %803 = vmatpush2.xpose.msra.mxu0 0.0
    %804 = vmatprep.subr.mxu0 0.0
    %805 = vmatpush2.xpose.msra.mxu0 0.0
    %806 = vmatprep.subr.mxu0 0.0
    %807 = vmatpush2.xpose.msra.mxu0 0.0
    %808 = vmatprep.subr.mxu0 0.0
    %809 = vmatpush2.xpose.msra.mxu0 0.0
    %810 = vmatprep.subr.mxu0 0.0
    %811 = vmatpush2.xpose.msra.mxu0 0.0
    %812 = vmatprep.subr.mxu0 0.0
    %813 = vmatpush2.xpose.msra.mxu0 0.0
    %814 = vmatprep.subr.mxu0 0.0
    %815 = vmatpush2.xpose.msra.mxu0 0.0
    %816 = vmatprep.subr.mxu0 0.0
    %817 = vmatpush2.xpose.msra.mxu0 0.0
    %818 = vmatprep.subr.mxu0 0.0
    %819 = vmatpush2.xpose.msra.mxu0 0.0
    %820 = vmatprep.subr.mxu0 0.0
    %821 = vmatpush2.xpose.msra.mxu0 0.0
    %822 = vmatprep.subr.mxu0 0.0
    %823 = vmatpush2.xpose.msra.mxu0 0.0
    %824 = vmatprep.subr.mxu0 0.0
    %825 = vmatpush2.xpose.msra.mxu0 0.0
    %826 = vmatprep.mubr.f32.mxu0 0.0
    %827 = vmatmul.mubr.f32.gmra.mxu0 %v757
    %v828 = vpop.f32.mrf.mxu0
    %v829 = vadd.f32 0.0, %v828
    %v830 = vpop.f32.mrf.mxu0
    %831 = vdwg.mxu0
    %vm832 = vcmask 64512
    %v833 = vsel %vm832, %v829, -inf
    %834 = vmax.xlane.f32.xlu0 %v833
    %v835 = vpop.xlane.xlu0 %834
    %v836 = vsub.f32 %v829, %v835
    %v837 = vmul.f32 %v836, 1.442695
    %v838 = vpow.pop %v837
    %v839 = vsel %vm832, %v838, 0.0
    %840 = vadd.xlane.f32.xlu0 %v839
    %v841 = vpop.xlane.xlu0 %840
    %v842 = vrcp.pop %v841
    %v843 = vmul.f32 %v838, %v842
    %v845 = vsel %vm832, %v843, 0
    %847 = vmatprep.subr.mxu0 0.0
    %848 = vmatpush1.msra.mxu0 0.0
    %849 = vmatprep.subr.mxu0 0.0
    %850 = vmatpush1.msra.mxu0 0.0
    %851 = vmatprep.subr.mxu0 0.0
    %852 = vmatpush1.msra.mxu0 0.0
    %853 = vmatprep.subr.mxu0 0.0
    %854 = vmatpush1.msra.mxu0 0.0
    %855 = vmatprep.subr.mxu0 0.0
    %856 = vmatpush1.msra.mxu0 0.0
    %857 = vmatprep.subr.mxu0 0.0
    %858 = vmatpush1.msra.mxu0 0.0
    %859 = vmatprep.subr.mxu0 0.0
    %860 = vmatpush1.msra.mxu0 0.0
    %861 = vmatprep.subr.mxu0 0.0
    %862 = vmatpush1.msra.mxu0 0.0
    %863 = vmatprep.subr.mxu0 0.0
    %864 = vmatpush1.msra.mxu0 0.0
    %865 = vmatprep.subr.mxu0 0.0
    %866 = vmatpush1.msra.mxu0 0.0
    %867 = vmatprep.subr.mxu0 0.0
    %868 = vmatpush1.msra.mxu0 0.0
    %869 = vmatprep.subr.mxu0 0.0
    %870 = vmatpush1.msra.mxu0 0.0
    %871 = vmatprep.subr.mxu0 0.0
    %872 = vmatpush1.msra.mxu0 0.0
    %873 = vmatprep.subr.mxu0 0.0
    %874 = vmatpush1.msra.mxu0 0.0
    %875 = vmatprep.subr.mxu0 0.0
    %876 = vmatpush1.msra.mxu0 0.0
    %877 = vmatprep.subr.mxu0 0.0
    %878 = vmatpush1.msra.mxu0 %v753
    %879 = vmatprep.subr.mxu0 0.0
    %880 = vmatpush2.msra.mxu0 0.0
    %881 = vmatprep.subr.mxu0 0.0
    %882 = vmatpush2.msra.mxu0 0.0
    %883 = vmatprep.subr.mxu0 0.0
    %884 = vmatpush2.msra.mxu0 0.0
    %885 = vmatprep.subr.mxu0 0.0
    %886 = vmatpush2.msra.mxu0 0.0
    %887 = vmatprep.subr.mxu0 0.0
    %888 = vmatpush2.msra.mxu0 0.0
    %889 = vmatprep.subr.mxu0 0.0
    %890 = vmatpush2.msra.mxu0 0.0
    %891 = vmatprep.subr.mxu0 0.0
    %892 = vmatpush2.msra.mxu0 0.0
    %893 = vmatprep.subr.mxu0 0.0
    %894 = vmatpush2.msra.mxu0 0.0
    %895 = vmatprep.subr.mxu0 0.0
    %896 = vmatpush2.msra.mxu0 0.0
    %897 = vmatprep.subr.mxu0 0.0
    %898 = vmatpush2.msra.mxu0 0.0
    %899 = vmatprep.subr.mxu0 0.0
    %900 = vmatpush2.msra.mxu0 0.0
    %901 = vmatprep.subr.mxu0 0.0
    %902 = vmatpush2.msra.mxu0 0.0
    %903 = vmatprep.subr.mxu0 0.0
    %904 = vmatpush2.msra.mxu0 0.0
    %905 = vmatprep.subr.mxu0 0.0
    %906 = vmatpush2.msra.mxu0 0.0
    %907 = vmatprep.subr.mxu0 0.0
    %908 = vmatpush2.msra.mxu0 0.0
    %909 = vmatprep.subr.mxu0 0.0
    %910 = vmatpush2.msra.mxu0 0.0
    %911 = vmatprep.mubr.f32.mxu0 0.0
    %912 = vmatmul.mubr.f32.gmra.mxu0 %v845
    %v913 = vpop.f32.mrf.mxu0
    %v914 = vadd.f32 %v324, %v913
    %v915 = vpop.f32.mrf.mxu0
    %916 = vdwg.mxu0
    %v917 = vsel %vm250, %v914, 0.0
    %918 = vadd.xlane.f32.xlu0 %v917
    %v919 = vpop.xlane.xlu0 %918
    %v920 = vrcp.pop 32.0
    %v921 = vmul.f32 %v919, %v920
    %v922 = vsub.f32 %v914, %v921
    %v923 = vmul.f32 %v922, %v922
    %v924 = vsel %vm250, %v923, 0.0
    %925 = vadd.xlane.f32.xlu0 %v924
    %v926 = vpop.xlane.xlu0 %925
    %v927 = vmul.f32 %v926, %v920
    %v928 = vadd.f32 %v927, 1e-05
    %v929 = vrsqrt.pop %v928
    %v930 = vmul.f32 %v922, %v929
    %v931 = vld [vmem:[%s8 + $0x3] sm:$0x1]
    %v932 = vlaneseq
    %v933 = vshrl.u32 %v932, 7
    %v934 = vsub.s32 0, %v933
    %v935 = vrot.slane %v931, %v934
    %v936 = vmul.f32 %v930, %v935
    %v937 = vld [vmem:[%s8 + $0x4] sm:$0x1]
    %v938 = vlaneseq
    %v939 = vshrl.u32 %v938, 7
    %v940 = vsub.s32 0, %v939
    %v941 = vrot.slane %v937, %v940
    %v942 = vadd.f32 %v936, %v941
    %s943 = scalar_lea.vmem [#allocation2], 96
    %v944 = vld [vmem:[%s943] sm:$0xff]
    %v945 = vld [vmem:[%s943 + $0x8] sm:$0xff]
    %v946 = vld [vmem:[%s943 + $0x10] sm:$0xff]
    %v947 = vld [vmem:[%s943 + $0x18] sm:$0xff]
    %s948 = scalar_lea.vmem %s8, 8
    %v949 = vld [vmem:[%s948] sm:$0x1]
    %v950 = vlaneseq
    %v951 = vshrl.u32 %v950, 7
    %v952 = vsub.s32 0, %v951
    %v953 = vrot.slane %v949, %v952
    %v955 = vsel %vm250, %v942, 0
    %957 = vmatprep.subr.mxu0 0.0
    %958 = vmatpush1.msra.mxu0 0.0
    %959 = vmatprep.subr.mxu0 0.0
    %960 = vmatpush1.msra.mxu0 0.0
    %961 = vmatprep.subr.mxu0 0.0
    %962 = vmatpush1.msra.mxu0 0.0
    %963 = vmatprep.subr.mxu0 0.0
    %964 = vmatpush1.msra.mxu0 0.0
    %965 = vmatprep.subr.mxu0 0.0
    %966 = vmatpush1.msra.mxu0 0.0
    %967 = vmatprep.subr.mxu0 0.0
    %968 = vmatpush1.msra.mxu0 0.0
    %969 = vmatprep.subr.mxu0 0.0
    %970 = vmatpush1.msra.mxu0 0.0
    %971 = vmatprep.subr.mxu0 0.0
    %972 = vmatpush1.msra.mxu0 0.0
    %973 = vmatprep.subr.mxu0 0.0
    %974 = vmatpush1.msra.mxu0 0.0
    %975 = vmatprep.subr.mxu0 0.0
    %976 = vmatpush1.msra.mxu0 0.0
    %977 = vmatprep.subr.mxu0 0.0
    %978 = vmatpush1.msra.mxu0 0.0
    %979 = vmatprep.subr.mxu0 0.0
    %980 = vmatpush1.msra.mxu0 0.0
    %981 = vmatprep.subr.mxu0 0.0
    %982 = vmatpush1.msra.mxu0 %v947
    %983 = vmatprep.subr.mxu0 0.0
    %984 = vmatpush1.msra.mxu0 %v946
    %985 = vmatprep.subr.mxu0 0.0
    %986 = vmatpush1.msra.mxu0 %v945
    %987 = vmatprep.subr.mxu0 0.0
    %988 = vmatpush1.msra.mxu0 %v944
    %989 = vmatprep.subr.mxu0 0.0
    %990 = vmatpush2.msra.mxu0 0.0
    %991 = vmatprep.subr.mxu0 0.0
    %992 = vmatpush2.msra.mxu0 0.0
    %993 = vmatprep.subr.mxu0 0.0
    %994 = vmatpush2.msra.mxu0 0.0
    %995 = vmatprep.subr.mxu0 0.0
    %996 = vmatpush2.msra.mxu0 0.0
    %997 = vmatprep.subr.mxu0 0.0
    %998 = vmatpush2.msra.mxu0 0.0
    %999 = vmatprep.subr.mxu0 0.0
    %1000 = vmatpush2.msra.mxu0 0.0
    %1001 = vmatprep.subr.mxu0 0.0
    %1002 = vmatpush2.msra.mxu0 0.0
    %1003 = vmatprep.subr.mxu0 0.0
    %1004 = vmatpush2.msra.mxu0 0.0
    %1005 = vmatprep.subr.mxu0 0.0
    %1006 = vmatpush2.msra.mxu0 0.0
    %1007 = vmatprep.subr.mxu0 0.0
    %1008 = vmatpush2.msra.mxu0 0.0
    %1009 = vmatprep.subr.mxu0 0.0
    %1010 = vmatpush2.msra.mxu0 0.0
    %1011 = vmatprep.subr.mxu0 0.0
    %1012 = vmatpush2.msra.mxu0 0.0
    %1013 = vmatprep.subr.mxu0 0.0
    %1014 = vmatpush2.msra.mxu0 0.0
    %1015 = vmatprep.subr.mxu0 0.0
    %1016 = vmatpush2.msra.mxu0 0.0
    %1017 = vmatprep.subr.mxu0 0.0
    %1018 = vmatpush2.msra.mxu0 0.0
    %1019 = vmatprep.subr.mxu0 0.0
    %1020 = vmatpush2.msra.mxu0 0.0
    %1021 = vmatprep.mubr.f32.mxu0 0.0
    %1022 = vmatmul.mubr.f32.gmra.mxu0 %v955
    %v1023 = vpop.f32.mrf.mxu0
    %v1024 = vadd.f32 %v953, %v1023
    %v1025 = vpop.f32.mrf.mxu0
    %1026 = vdwg.mxu0
    %s1027 = scalar_lea.vmem [#allocation2], 128
    %v1028 = vld [vmem:[%s1027] sm:$0xff]
    %v1029 = vld [vmem:[%s1027 + $0x8] sm:$0xff]
    %v1030 = vld [vmem:[%s1027 + $0x10] sm:$0xff]
    %v1031 = vld [vmem:[%s1027 + $0x18] sm:$0xff]
    %v1032 = vld [vmem:[%s948 + $0x1] sm:$0x1]
    %v1033 = vlaneseq
    %v1034 = vshrl.u32 %v1033, 7
    %v1035 = vsub.s32 0, %v1034
    %v1036 = vrot.slane %v1032, %v1035
    %1037 = vmatprep.subr.mxu0 0.0
    %1038 = vmatpush1.msra.mxu0 0.0
    %1039 = vmatprep.subr.mxu0 0.0
    %1040 = vmatpush1.msra.mxu0 0.0
    %1041 = vmatprep.subr.mxu0 0.0
    %1042 = vmatpush1.msra.mxu0 0.0
    %1043 = vmatprep.subr.mxu0 0.0
    %1044 = vmatpush1.msra.mxu0 0.0
    %1045 = vmatprep.subr.mxu0 0.0
    %1046 = vmatpush1.msra.mxu0 0.0
    %1047 = vmatprep.subr.mxu0 0.0
    %1048 = vmatpush1.msra.mxu0 0.0
    %1049 = vmatprep.subr.mxu0 0.0
    %1050 = vmatpush1.msra.mxu0 0.0
    %1051 = vmatprep.subr.mxu0 0.0
    %1052 = vmatpush1.msra.mxu0 0.0
    %1053 = vmatprep.subr.mxu0 0.0
    %1054 = vmatpush1.msra.mxu0 0.0
    %1055 = vmatprep.subr.mxu0 0.0
    %1056 = vmatpush1.msra.mxu0 0.0
    %1057 = vmatprep.subr.mxu0 0.0
    %1058 = vmatpush1.msra.mxu0 0.0
    %1059 = vmatprep.subr.mxu0 0.0
    %1060 = vmatpush1.msra.mxu0 0.0
    %1061 = vmatprep.subr.mxu0 0.0
    %1062 = vmatpush1.msra.mxu0 %v1031
    %1063 = vmatprep.subr.mxu0 0.0
    %1064 = vmatpush1.msra.mxu0 %v1030
    %1065 = vmatprep.subr.mxu0 0.0
    %1066 = vmatpush1.msra.mxu0 %v1029
    %1067 = vmatprep.subr.mxu0 0.0
    %1068 = vmatpush1.msra.mxu0 %v1028
    %1069 = vmatprep.subr.mxu0 0.0
    %1070 = vmatpush2.msra.mxu0 0.0
    %1071 = vmatprep.subr.mxu0 0.0
    %1072 = vmatpush2.msra.mxu0 0.0
    %1073 = vmatprep.subr.mxu0 0.0
    %1074 = vmatpush2.msra.mxu0 0.0
    %1075 = vmatprep.subr.mxu0 0.0
    %1076 = vmatpush2.msra.mxu0 0.0
    %1077 = vmatprep.subr.mxu0 0.0
    %1078 = vmatpush2.msra.mxu0 0.0
    %1079 = vmatprep.subr.mxu0 0.0
    %1080 = vmatpush2.msra.mxu0 0.0
    %1081 = vmatprep.subr.mxu0 0.0
    %1082 = vmatpush2.msra.mxu0 0.0
    %1083 = vmatprep.subr.mxu0 0.0
    %1084 = vmatpush2.msra.mxu0 0.0
    %1085 = vmatprep.subr.mxu0 0.0
    %1086 = vmatpush2.msra.mxu0 0.0
    %1087 = vmatprep.subr.mxu0 0.0
    %1088 = vmatpush2.msra.mxu0 0.0
    %1089 = vmatprep.subr.mxu0 0.0
    %1090 = vmatpush2.msra.mxu0 0.0
    %1091 = vmatprep.subr.mxu0 0.0
    %1092 = vmatpush2.msra.mxu0 0.0
    %1093 = vmatprep.subr.mxu0 0.0
    %1094 = vmatpush2.msra.mxu0 0.0
    %1095 = vmatprep.subr.mxu0 0.0
    %1096 = vmatpush2.msra.mxu0 0.0
    %1097 = vmatprep.subr.mxu0 0.0
    %1098 = vmatpush2.msra.mxu0 0.0
    %1099 = vmatprep.subr.mxu0 0.0
    %1100 = vmatpush2.msra.mxu0 0.0
    %1101 = vmatprep.mubr.f32.mxu0 0.0
    %1102 = vmatmul.mubr.f32.gmra.mxu0 %v955
    %v1103 = vpop.f32.mrf.mxu0
    %v1104 = vadd.f32 %v1036, %v1103
    %v1105 = vpop.f32.mrf.mxu0
    %1106 = vdwg.mxu0
    %s1107 = scalar_lea.vmem [#allocation2], 160
    %v1108 = vld [vmem:[%s1107] sm:$0xff]
    %v1109 = vld [vmem:[%s1107 + $0x8] sm:$0xff]
    %v1110 = vld [vmem:[%s1107 + $0x10] sm:$0xff]
    %v1111 = vld [vmem:[%s1107 + $0x18] sm:$0xff]
    %v1112 = vld [vmem:[%s948 + $0x2] sm:$0x1]
    %v1113 = vlaneseq
    %v1114 = vshrl.u32 %v1113, 7
    %v1115 = vsub.s32 0, %v1114
    %v1116 = vrot.slane %v1112, %v1115
    %1117 = vmatprep.subr.mxu0 0.0
    %1118 = vmatpush1.msra.mxu0 0.0
    %1119 = vmatprep.subr.mxu0 0.0
    %1120 = vmatpush1.msra.mxu0 0.0
    %1121 = vmatprep.subr.mxu0 0.0
    %1122 = vmatpush1.msra.mxu0 0.0
    %1123 = vmatprep.subr.mxu0 0.0
    %1124 = vmatpush1.msra.mxu0 0.0
    %1125 = vmatprep.subr.mxu0 0.0
    %1126 = vmatpush1.msra.mxu0 0.0
    %1127 = vmatprep.subr.mxu0 0.0
    %1128 = vmatpush1.msra.mxu0 0.0
    %1129 = vmatprep.subr.mxu0 0.0
    %1130 = vmatpush1.msra.mxu0 0.0
    %1131 = vmatprep.subr.mxu0 0.0
    %1132 = vmatpush1.msra.mxu0 0.0
    %1133 = vmatprep.subr.mxu0 0.0
    %1134 = vmatpush1.msra.mxu0 0.0
    %1135 = vmatprep.subr.mxu0 0.0
    %1136 = vmatpush1.msra.mxu0 0.0
    %1137 = vmatprep.subr.mxu0 0.0
    %1138 = vmatpush1.msra.mxu0 0.0
    %1139 = vmatprep.subr.mxu0 0.0
    %1140 = vmatpush1.msra.mxu0 0.0
    %1141 = vmatprep.subr.mxu0 0.0
    %1142 = vmatpush1.msra.mxu0 %v1111
    %1143 = vmatprep.subr.mxu0 0.0
    %1144 = vmatpush1.msra.mxu0 %v1110
    %1145 = vmatprep.subr.mxu0 0.0
    %1146 = vmatpush1.msra.mxu0 %v1109
    %1147 = vmatprep.subr.mxu0 0.0
    %1148 = vmatpush1.msra.mxu0 %v1108
    %1149 = vmatprep.subr.mxu0 0.0
    %1150 = vmatpush2.msra.mxu0 0.0
    %1151 = vmatprep.subr.mxu0 0.0
    %1152 = vmatpush2.msra.mxu0 0.0
    %1153 = vmatprep.subr.mxu0 0.0
    %1154 = vmatpush2.msra.mxu0 0.0
    %1155 = vmatprep.subr.mxu0 0.0
    %1156 = vmatpush2.msra.mxu0 0.0
    %1157 = vmatprep.subr.mxu0 0.0
    %1158 = vmatpush2.msra.mxu0 0.0
    %1159 = vmatprep.subr.mxu0 0.0
    %1160 = vmatpush2.msra.mxu0 0.0
    %1161 = vmatprep.subr.mxu0 0.0
    %1162 = vmatpush2.msra.mxu0 0.0
    %1163 = vmatprep.subr.mxu0 0.0
    %1164 = vmatpush2.msra.mxu0 0.0
    %1165 = vmatprep.subr.mxu0 0.0
    %1166 = vmatpush2.msra.mxu0 0.0
    %1167 = vmatprep.subr.mxu0 0.0
    %1168 = vmatpush2.msra.mxu0 0.0
    %1169 = vmatprep.subr.mxu0 0.0
    %1170 = vmatpush2.msra.mxu0 0.0
    %1171 = vmatprep.subr.mxu0 0.0
    %1172 = vmatpush2.msra.mxu0 0.0
    %1173 = vmatprep.subr.mxu0 0.0
    %1174 = vmatpush2.msra.mxu0 0.0
    %1175 = vmatprep.subr.mxu0 0.0
    %1176 = vmatpush2.msra.mxu0 0.0
    %1177 = vmatprep.subr.mxu0 0.0
    %1178 = vmatpush2.msra.mxu0 0.0
    %1179 = vmatprep.subr.mxu0 0.0
    %1180 = vmatpush2.msra.mxu0 0.0
    %1181 = vmatprep.mubr.f32.mxu0 0.0
    %1182 = vmatmul.mubr.f32.gmra.mxu0 %v955
    %v1183 = vpop.f32.mrf.mxu0
    %v1184 = vadd.f32 %v1116, %v1183
    %v1185 = vpop.f32.mrf.mxu0
    %1186 = vdwg.mxu0
    %v1188 = vsel %vm250, %v1024, 0
    %v1191 = vsel %vm250, %v1104, 0
    %1193 = vmatprep.subr.mxu0 0.0
    %1194 = vmatpush1.xpose.msra.mxu0 0.0
    %1195 = vmatprep.subr.mxu0 0.0
    %1196 = vmatpush1.xpose.msra.mxu0 0.0
    %1197 = vmatprep.subr.mxu0 0.0
    %1198 = vmatpush1.xpose.msra.mxu0 0.0
    %1199 = vmatprep.subr.mxu0 0.0
    %1200 = vmatpush1.xpose.msra.mxu0 0.0
    %1201 = vmatprep.subr.mxu0 0.0
    %1202 = vmatpush1.xpose.msra.mxu0 0.0
    %1203 = vmatprep.subr.mxu0 0.0
    %1204 = vmatpush1.xpose.msra.mxu0 0.0
    %1205 = vmatprep.subr.mxu0 0.0
    %1206 = vmatpush1.xpose.msra.mxu0 0.0
    %1207 = vmatprep.subr.mxu0 0.0
    %1208 = vmatpush1.xpose.msra.mxu0 0.0
    %1209 = vmatprep.subr.mxu0 0.0
    %1210 = vmatpush1.xpose.msra.mxu0 0.0
    %1211 = vmatprep.subr.mxu0 0.0
    %1212 = vmatpush1.xpose.msra.mxu0 0.0
    %1213 = vmatprep.subr.mxu0 0.0
    %1214 = vmatpush1.xpose.msra.mxu0 0.0
    %1215 = vmatprep.subr.mxu0 0.0
    %1216 = vmatpush1.xpose.msra.mxu0 0.0
    %1217 = vmatprep.subr.mxu0 0.0
    %1218 = vmatpush1.xpose.msra.mxu0 0.0
    %1219 = vmatprep.subr.mxu0 0.0
    %1220 = vmatpush1.xpose.msra.mxu0 0.0
    %1221 = vmatprep.subr.mxu0 0.0
    %1222 = vmatpush1.xpose.msra.mxu0 0.0
    %1223 = vmatprep.subr.mxu0 0.0
    %1224 = vmatpush1.xpose.msra.mxu0 %v1191
    %1225 = vmatprep.subr.mxu0 0.0
    %1226 = vmatpush2.xpose.msra.mxu0 0.0
    %1227 = vmatprep.subr.mxu0 0.0
    %1228 = vmatpush2.xpose.msra.mxu0 0.0
    %1229 = vmatprep.subr.mxu0 0.0
    %1230 = vmatpush2.xpose.msra.mxu0 0.0
    %1231 = vmatprep.subr.mxu0 0.0
    %1232 = vmatpush2.xpose.msra.mxu0 0.0
    %1233 = vmatprep.subr.mxu0 0.0
    %1234 = vmatpush2.xpose.msra.mxu0 0.0
    %1235 = vmatprep.subr.mxu0 0.0
    %1236 = vmatpush2.xpose.msra.mxu0 0.0
    %1237 = vmatprep.subr.mxu0 0.0
    %1238 = vmatpush2.xpose.msra.mxu0 0.0
    %1239 = vmatprep.subr.mxu0 0.0
    %1240 = vmatpush2.xpose.msra.mxu0 0.0
    %1241 = vmatprep.subr.mxu0 0.0
    %1242 = vmatpush2.xpose.msra.mxu0 0.0
    %1243 = vmatprep.subr.mxu0 0.0
    %1244 = vmatpush2.xpose.msra.mxu0 0.0
    %1245 = vmatprep.subr.mxu0 0.0
    %1246 = vmatpush2.xpose.msra.mxu0 0.0
    %1247 = vmatprep.subr.mxu0 0.0
    %1248 = vmatpush2.xpose.msra.mxu0 0.0
    %1249 = vmatprep.subr.mxu0 0.0
    %1250 = vmatpush2.xpose.msra.mxu0 0.0
    %1251 = vmatprep.subr.mxu0 0.0
    %1252 = vmatpush2.xpose.msra.mxu0 0.0
    %1253 = vmatprep.subr.mxu0 0.0
    %1254 = vmatpush2.xpose.msra.mxu0 0.0
    %1255 = vmatprep.subr.mxu0 0.0
    %1256 = vmatpush2.xpose.msra.mxu0 0.0
    %1257 = vmatprep.mubr.f32.mxu0 0.0
    %1258 = vmatmul.mubr.f32.gmra.mxu0 %v1188
    %v1259 = vpop.f32.mrf.mxu0
    %v1260 = vadd.f32 0.0, %v1259
    %v1261 = vpop.f32.mrf.mxu0
    %1262 = vdwg.mxu0
    %v1263 = vsel %vm832, %v1260, -inf
    %1264 = vmax.xlane.f32.xlu0 %v1263
    %v1265 = vpop.xlane.xlu0 %1264
    %v1266 = vsub.f32 %v1260, %v1265
    %v1267 = vmul.f32 %v1266, 1.442695
    %v1268 = vpow.pop %v1267
    %v1269 = vsel %vm832, %v1268, 0.0
    %1270 = vadd.xlane.f32.xlu0 %v1269
    %v1271 = vpop.xlane.xlu0 %1270
    %v1272 = vrcp.pop %v1271
    %v1273 = vmul.f32 %v1268, %v1272
    %v1275 = vsel %vm832, %v1273, 0
    %1277 = vmatprep.subr.mxu0 0.0
    %1278 = vmatpush1.msra.mxu0 0.0
    %1279 = vmatprep.subr.mxu0 0.0
    %1280 = vmatpush1.msra.mxu0 0.0
    %1281 = vmatprep.subr.mxu0 0.0
    %1282 = vmatpush1.msra.mxu0 0.0
    %1283 = vmatprep.subr.mxu0 0.0
    %1284 = vmatpush1.msra.mxu0 0.0
    %1285 = vmatprep.subr.mxu0 0.0
    %1286 = vmatpush1.msra.mxu0 0.0
    %1287 = vmatprep.subr.mxu0 0.0
    %1288 = vmatpush1.msra.mxu0 0.0
    %1289 = vmatprep.subr.mxu0 0.0
    %1290 = vmatpush1.msra.mxu0 0.0
    %1291 = vmatprep.subr.mxu0 0.0
    %1292 = vmatpush1.msra.mxu0 0.0
    %1293 = vmatprep.subr.mxu0 0.0
    %1294 = vmatpush1.msra.mxu0 0.0
    %1295 = vmatprep.subr.mxu0 0.0
    %1296 = vmatpush1.msra.mxu0 0.0
    %1297 = vmatprep.subr.mxu0 0.0
    %1298 = vmatpush1.msra.mxu0 0.0
    %1299 = vmatprep.subr.mxu0 0.0
    %1300 = vmatpush1.msra.mxu0 0.0
    %1301 = vmatprep.subr.mxu0 0.0
    %1302 = vmatpush1.msra.mxu0 0.0
    %1303 = vmatprep.subr.mxu0 0.0
    %1304 = vmatpush1.msra.mxu0 0.0
    %1305 = vmatprep.subr.mxu0 0.0
    %1306 = vmatpush1.msra.mxu0 0.0
    %1307 = vmatprep.subr.mxu0 0.0
    %1308 = vmatpush1.msra.mxu0 %v1184
    %1309 = vmatprep.subr.mxu0 0.0
    %1310 = vmatpush2.msra.mxu0 0.0
    %1311 = vmatprep.subr.mxu0 0.0
    %1312 = vmatpush2.msra.mxu0 0.0
    %1313 = vmatprep.subr.mxu0 0.0
    %1314 = vmatpush2.msra.mxu0 0.0
    %1315 = vmatprep.subr.mxu0 0.0
    %1316 = vmatpush2.msra.mxu0 0.0
    %1317 = vmatprep.subr.mxu0 0.0
    %1318 = vmatpush2.msra.mxu0 0.0
    %1319 = vmatprep.subr.mxu0 0.0
    %1320 = vmatpush2.msra.mxu0 0.0
    %1321 = vmatprep.subr.mxu0 0.0
    %1322 = vmatpush2.msra.mxu0 0.0
    %1323 = vmatprep.subr.mxu0 0.0
    %1324 = vmatpush2.msra.mxu0 0.0
    %1325 = vmatprep.subr.mxu0 0.0
    %1326 = vmatpush2.msra.mxu0 0.0
    %1327 = vmatprep.subr.mxu0 0.0
    %1328 = vmatpush2.msra.mxu0 0.0
    %1329 = vmatprep.subr.mxu0 0.0
    %1330 = vmatpush2.msra.mxu0 0.0
    %1331 = vmatprep.subr.mxu0 0.0
    %1332 = vmatpush2.msra.mxu0 0.0
    %1333 = vmatprep.subr.mxu0 0.0
    %1334 = vmatpush2.msra.mxu0 0.0
    %1335 = vmatprep.subr.mxu0 0.0
    %1336 = vmatpush2.msra.mxu0 0.0
    %1337 = vmatprep.subr.mxu0 0.0
    %1338 = vmatpush2.msra.mxu0 0.0
    %1339 = vmatprep.subr.mxu0 0.0
    %1340 = vmatpush2.msra.mxu0 0.0
    %1341 = vmatprep.mubr.f32.mxu0 0.0
    %1342 = vmatmul.mubr.f32.gmra.mxu0 %v1275
    %v1343 = vpop.f32.mrf.mxu0
    %v1344 = vadd.f32 %v942, %v1343
    %v1345 = vpop.f32.mrf.mxu0
    %1346 = vdwg.mxu0
    %v1347 = vsel %vm250, %v1344, 0.0
    %1348 = vadd.xlane.f32.xlu0 %v1347
    %v1349 = vpop.xlane.xlu0 %1348
    %v1350 = vmul.f32 %v1349, %v920
    %v1351 = vsub.f32 %v1344, %v1350
    %v1352 = vmul.f32 %v1351, %v1351
    %v1353 = vsel %vm250, %v1352, 0.0
    %1354 = vadd.xlane.f32.xlu0 %v1353
    %v1355 = vpop.xlane.xlu0 %1354
    %v1356 = vmul.f32 %v1355, %v920
    %v1357 = vadd.f32 %v1356, 1e-05
    %v1358 = vrsqrt.pop %v1357
    %v1359 = vmul.f32 %v1351, %v1358
    %v1360 = vld [vmem:[%s948 + $0x3] sm:$0x1]
    %v1361 = vlaneseq
    %v1362 = vshrl.u32 %v1361, 7
    %v1363 = vsub.s32 0, %v1362
    %v1364 = vrot.slane %v1360, %v1363
    %v1365 = vmul.f32 %v1359, %v1364
    %v1366 = vld [vmem:[%s948 + $0x4] sm:$0x1]
    %v1367 = vlaneseq
    %v1368 = vshrl.u32 %v1367, 7
    %v1369 = vsub.s32 0, %v1368
    %v1370 = vrot.slane %v1366, %v1369
    %v1371 = vadd.f32 %v1365, %v1370
    %s1372 = scalar_lea.vmem [#allocation2], 192
    %v1373 = vld [vmem:[%s1372] sm:$0xff]
    %v1374 = vld [vmem:[%s1372 + $0x8] sm:$0xff]
    %v1375 = vld [vmem:[%s1372 + $0x10] sm:$0xff]
    %v1376 = vld [vmem:[%s1372 + $0x18] sm:$0xff]
    %s1377 = scalar_lea.vmem %s8, 16
    %v1378 = vld [vmem:[%s1377] sm:$0x1]
    %v1379 = vlaneseq
    %v1380 = vshrl.u32 %v1379, 7
    %v1381 = vsub.s32 0, %v1380
    %v1382 = vrot.slane %v1378, %v1381
    %v1384 = vsel %vm250, %v506, 0
    %1386 = vmatprep.subr.mxu0 0.0
    %1387 = vmatpush1.msra.mxu0 0.0
    %1388 = vmatprep.subr.mxu0 0.0
    %1389 = vmatpush1.msra.mxu0 0.0
    %1390 = vmatprep.subr.mxu0 0.0
    %1391 = vmatpush1.msra.mxu0 0.0
    %1392 = vmatprep.subr.mxu0 0.0
    %1393 = vmatpush1.msra.mxu0 0.0
    %1394 = vmatprep.subr.mxu0 0.0
    %1395 = vmatpush1.msra.mxu0 0.0
    %1396 = vmatprep.subr.mxu0 0.0
    %1397 = vmatpush1.msra.mxu0 0.0
    %1398 = vmatprep.subr.mxu0 0.0
    %1399 = vmatpush1.msra.mxu0 0.0
    %1400 = vmatprep.subr.mxu0 0.0
    %1401 = vmatpush1.msra.mxu0 0.0
    %1402 = vmatprep.subr.mxu0 0.0
    %1403 = vmatpush1.msra.mxu0 0.0
    %1404 = vmatprep.subr.mxu0 0.0
    %1405 = vmatpush1.msra.mxu0 0.0
    %1406 = vmatprep.subr.mxu0 0.0
    %1407 = vmatpush1.msra.mxu0 0.0
    %1408 = vmatprep.subr.mxu0 0.0
    %1409 = vmatpush1.msra.mxu0 0.0
    %1410 = vmatprep.subr.mxu0 0.0
    %1411 = vmatpush1.msra.mxu0 %v1376
    %1412 = vmatprep.subr.mxu0 0.0
    %1413 = vmatpush1.msra.mxu0 %v1375
    %1414 = vmatprep.subr.mxu0 0.0
    %1415 = vmatpush1.msra.mxu0 %v1374
    %1416 = vmatprep.subr.mxu0 0.0
    %1417 = vmatpush1.msra.mxu0 %v1373
    %1418 = vmatprep.subr.mxu0 0.0
    %1419 = vmatpush2.msra.mxu0 0.0
    %1420 = vmatprep.subr.mxu0 0.0
    %1421 = vmatpush2.msra.mxu0 0.0
    %1422 = vmatprep.subr.mxu0 0.0
    %1423 = vmatpush2.msra.mxu0 0.0
    %1424 = vmatprep.subr.mxu0 0.0
    %1425 = vmatpush2.msra.mxu0 0.0
    %1426 = vmatprep.subr.mxu0 0.0
    %1427 = vmatpush2.msra.mxu0 0.0
    %1428 = vmatprep.subr.mxu0 0.0
    %1429 = vmatpush2.msra.mxu0 0.0
    %1430 = vmatprep.subr.mxu0 0.0
    %1431 = vmatpush2.msra.mxu0 0.0
    %1432 = vmatprep.subr.mxu0 0.0
    %1433 = vmatpush2.msra.mxu0 0.0
    %1434 = vmatprep.subr.mxu0 0.0
    %1435 = vmatpush2.msra.mxu0 0.0
    %1436 = vmatprep.subr.mxu0 0.0
    %1437 = vmatpush2.msra.mxu0 0.0
    %1438 = vmatprep.subr.mxu0 0.0
    %1439 = vmatpush2.msra.mxu0 0.0
    %1440 = vmatprep.subr.mxu0 0.0
    %1441 = vmatpush2.msra.mxu0 0.0
    %1442 = vmatprep.subr.mxu0 0.0
    %1443 = vmatpush2.msra.mxu0 0.0
    %1444 = vmatprep.subr.mxu0 0.0
    %1445 = vmatpush2.msra.mxu0 0.0
    %1446 = vmatprep.subr.mxu0 0.0
    %1447 = vmatpush2.msra.mxu0 0.0
    %1448 = vmatprep.subr.mxu0 0.0
    %1449 = vmatpush2.msra.mxu0 0.0
    %1450 = vmatprep.mubr.f32.mxu0 0.0
    %1451 = vmatmul.mubr.f32.gmra.mxu0 %v1384
    %v1452 = vpop.f32.mrf.mxu0
    %v1453 = vadd.f32 %v1382, %v1452
    %v1454 = vpop.f32.mrf.mxu0
    %1455 = vdwg.mxu0
    %s1456 = scalar_lea.vmem [#allocation2], 224
    %v1457 = vld [vmem:[%s1456] sm:$0xff]
    %v1458 = vld [vmem:[%s1456 + $0x8] sm:$0xff]
    %v1459 = vld [vmem:[%s1456 + $0x10] sm:$0xff]
    %v1460 = vld [vmem:[%s1456 + $0x18] sm:$0xff]
    %v1461 = vld [vmem:[%s1377 + $0x1] sm:$0x1]
    %v1462 = vlaneseq
    %v1463 = vshrl.u32 %v1462, 7
    %v1464 = vsub.s32 0, %v1463
    %v1465 = vrot.slane %v1461, %v1464
    %v1467 = vsel %vm250, %v412, 0
    %1469 = vmatprep.subr.mxu0 0.0
    %1470 = vmatpush1.msra.mxu0 0.0
    %1471 = vmatprep.subr.mxu0 0.0
    %1472 = vmatpush1.msra.mxu0 0.0
    %1473 = vmatprep.subr.mxu0 0.0
    %1474 = vmatpush1.msra.mxu0 0.0
    %1475 = vmatprep.subr.mxu0 0.0
    %1476 = vmatpush1.msra.mxu0 0.0
    %1477 = vmatprep.subr.mxu0 0.0
    %1478 = vmatpush1.msra.mxu0 0.0
    %1479 = vmatprep.subr.mxu0 0.0
    %1480 = vmatpush1.msra.mxu0 0.0
    %1481 = vmatprep.subr.mxu0 0.0
    %1482 = vmatpush1.msra.mxu0 0.0
    %1483 = vmatprep.subr.mxu0 0.0
    %1484 = vmatpush1.msra.mxu0 0.0
    %1485 = vmatprep.subr.mxu0 0.0
    %1486 = vmatpush1.msra.mxu0 0.0
    %1487 = vmatprep.subr.mxu0 0.0
    %1488 = vmatpush1.msra.mxu0 0.0
    %1489 = vmatprep.subr.mxu0 0.0
    %1490 = vmatpush1.msra.mxu0 0.0
    %1491 = vmatprep.subr.mxu0 0.0
    %1492 = vmatpush1.msra.mxu0 0.0
    %1493 = vmatprep.subr.mxu0 0.0
    %1494 = vmatpush1.msra.mxu0 %v1460
    %1495 = vmatprep.subr.mxu0 0.0
    %1496 = vmatpush1.msra.mxu0 %v1459
    %1497 = vmatprep.subr.mxu0 0.0
    %1498 = vmatpush1.msra.mxu0 %v1458
    %1499 = vmatprep.subr.mxu0 0.0
    %1500 = vmatpush1.msra.mxu0 %v1457
    %1501 = vmatprep.subr.mxu0 0.0
    %1502 = vmatpush2.msra.mxu0 0.0
    %1503 = vmatprep.subr.mxu0 0.0
    %1504 = vmatpush2.msra.mxu0 0.0
    %1505 = vmatprep.subr.mxu0 0.0
    %1506 = vmatpush2.msra.mxu0 0.0
    %1507 = vmatprep.subr.mxu0 0.0
    %1508 = vmatpush2.msra.mxu0 0.0
    %1509 = vmatprep.subr.mxu0 0.0
    %1510 = vmatpush2.msra.mxu0 0.0
    %1511 = vmatprep.subr.mxu0 0.0
    %1512 = vmatpush2.msra.mxu0 0.0
    %1513 = vmatprep.subr.mxu0 0.0
    %1514 = vmatpush2.msra.mxu0 0.0
    %1515 = vmatprep.subr.mxu0 0.0
    %1516 = vmatpush2.msra.mxu0 0.0
    %1517 = vmatprep.subr.mxu0 0.0
    %1518 = vmatpush2.msra.mxu0 0.0
    %1519 = vmatprep.subr.mxu0 0.0
    %1520 = vmatpush2.msra.mxu0 0.0
    %1521 = vmatprep.subr.mxu0 0.0
    %1522 = vmatpush2.msra.mxu0 0.0
    %1523 = vmatprep.subr.mxu0 0.0
    %1524 = vmatpush2.msra.mxu0 0.0
    %1525 = vmatprep.subr.mxu0 0.0
    %1526 = vmatpush2.msra.mxu0 0.0
    %1527 = vmatprep.subr.mxu0 0.0
    %1528 = vmatpush2.msra.mxu0 0.0
    %1529 = vmatprep.subr.mxu0 0.0
    %1530 = vmatpush2.msra.mxu0 0.0
    %1531 = vmatprep.subr.mxu0 0.0
    %1532 = vmatpush2.msra.mxu0 0.0
    %1533 = vmatprep.mubr.f32.mxu0 0.0
    %1534 = vmatmul.mubr.f32.gmra.mxu0 %v1467
    %v1535 = vpop.f32.mrf.mxu0
    %v1536 = vadd.f32 %v1465, %v1535
    %v1537 = vpop.f32.mrf.mxu0
    %1538 = vdwg.mxu0
    %s1539 = scalar_lea.vmem [#allocation2], 256
    %v1540 = vld [vmem:[%s1539] sm:$0xff]
    %v1541 = vld [vmem:[%s1539 + $0x8] sm:$0xff]
    %v1542 = vld [vmem:[%s1539 + $0x10] sm:$0xff]
    %v1543 = vld [vmem:[%s1539 + $0x18] sm:$0xff]
    %v1544 = vld [vmem:[%s1377 + $0x2] sm:$0x1]
    %v1545 = vlaneseq
    %v1546 = vshrl.u32 %v1545, 7
    %v1547 = vsub.s32 0, %v1546
    %v1548 = vrot.slane %v1544, %v1547
    %v1550 = vsel %vm250, %v1371, 0
    %1552 = vmatprep.subr.mxu0 0.0
    %1553 = vmatpush1.msra.mxu0 0.0
    %1554 = vmatprep.subr.mxu0 0.0
    %1555 = vmatpush1.msra.mxu0 0.0
    %1556 = vmatprep.subr.mxu0 0.0
    %1557 = vmatpush1.msra.mxu0 0.0
    %1558 = vmatprep.subr.mxu0 0.0
    %1559 = vmatpush1.msra.mxu0 0.0
    %1560 = vmatprep.subr.mxu0 0.0
    %1561 = vmatpush1.msra.mxu0 0.0
    %1562 = vmatprep.subr.mxu0 0.0
    %1563 = vmatpush1.msra.mxu0 0.0
    %1564 = vmatprep.subr.mxu0 0.0
    %1565 = vmatpush1.msra.mxu0 0.0
    %1566 = vmatprep.subr.mxu0 0.0
    %1567 = vmatpush1.msra.mxu0 0.0
    %1568 = vmatprep.subr.mxu0 0.0
    %1569 = vmatpush1.msra.mxu0 0.0
    %1570 = vmatprep.subr.mxu0 0.0
    %1571 = vmatpush1.msra.mxu0 0.0
    %1572 = vmatprep.subr.mxu0 0.0
    %1573 = vmatpush1.msra.mxu0 0.0
    %1574 = vmatprep.subr.mxu0 0.0
    %1575 = vmatpush1.msra.mxu0 0.0
    %1576 = vmatprep.subr.mxu0 0.0
    %1577 = vmatpush1.msra.mxu0 %v1543
    %1578 = vmatprep.subr.mxu0 0.0
    %1579 = vmatpush1.msra.mxu0 %v1542
    %1580 = vmatprep.subr.mxu0 0.0
    %1581 = vmatpush1.msra.mxu0 %v1541
    %1582 = vmatprep.subr.mxu0 0.0
    %1583 = vmatpush1.msra.mxu0 %v1540
    %1584 = vmatprep.subr.mxu0 0.0
    %1585 = vmatpush2.msra.mxu0 0.0
    %1586 = vmatprep.subr.mxu0 0.0
    %1587 = vmatpush2.msra.mxu0 0.0
    %1588 = vmatprep.subr.mxu0 0.0
    %1589 = vmatpush2.msra.mxu0 0.0
    %1590 = vmatprep.subr.mxu0 0.0
    %1591 = vmatpush2.msra.mxu0 0.0
    %1592 = vmatprep.subr.mxu0 0.0
    %1593 = vmatpush2.msra.mxu0 0.0
    %1594 = vmatprep.subr.mxu0 0.0
    %1595 = vmatpush2.msra.mxu0 0.0
    %1596 = vmatprep.subr.mxu0 0.0
    %1597 = vmatpush2.msra.mxu0 0.0
    %1598 = vmatprep.subr.mxu0 0.0
    %1599 = vmatpush2.msra.mxu0 0.0
    %1600 = vmatprep.subr.mxu0 0.0
    %1601 = vmatpush2.msra.mxu0 0.0
    %1602 = vmatprep.subr.mxu0 0.0
    %1603 = vmatpush2.msra.mxu0 0.0
    %1604 = vmatprep.subr.mxu0 0.0
    %1605 = vmatpush2.msra.mxu0 0.0
    %1606 = vmatprep.subr.mxu0 0.0
    %1607 = vmatpush2.msra.mxu0 0.0
    %1608 = vmatprep.subr.mxu0 0.0
    %1609 = vmatpush2.msra.mxu0 0.0
    %1610 = vmatprep.subr.mxu0 0.0
    %1611 = vmatpush2.msra.mxu0 0.0
    %1612 = vmatprep.subr.mxu0 0.0
    %1613 = vmatpush2.msra.mxu0 0.0
    %1614 = vmatprep.subr.mxu0 0.0
    %1615 = vmatpush2.msra.mxu0 0.0
    %1616 = vmatprep.mubr.f32.mxu0 0.0
    %1617 = vmatmul.mubr.f32.gmra.mxu0 %v1550
    %v1618 = vpop.f32.mrf.mxu0
    %v1619 = vadd.f32 %v1548, %v1618
    %v1620 = vpop.f32.mrf.mxu0
    %1621 = vdwg.mxu0
    %v1623 = vsel %vm250, %v1453, 0
    %v1626 = vsel %vm250, %v1536, 0
    %1628 = vmatprep.subr.mxu0 0.0
    %1629 = vmatpush1.xpose.msra.mxu0 0.0
    %1630 = vmatprep.subr.mxu0 0.0
    %1631 = vmatpush1.xpose.msra.mxu0 0.0
    %1632 = vmatprep.subr.mxu0 0.0
    %1633 = vmatpush1.xpose.msra.mxu0 0.0
    %1634 = vmatprep.subr.mxu0 0.0
    %1635 = vmatpush1.xpose.msra.mxu0 0.0
    %1636 = vmatprep.subr.mxu0 0.0
    %1637 = vmatpush1.xpose.msra.mxu0 0.0
    %1638 = vmatprep.subr.mxu0 0.0
    %1639 = vmatpush1.xpose.msra.mxu0 0.0
    %1640 = vmatprep.subr.mxu0 0.0
    %1641 = vmatpush1.xpose.msra.mxu0 0.0
    %1642 = vmatprep.subr.mxu0 0.0
    %1643 = vmatpush1.xpose.msra.mxu0 0.0
    %1644 = vmatprep.subr.mxu0 0.0
    %1645 = vmatpush1.xpose.msra.mxu0 0.0
    %1646 = vmatprep.subr.mxu0 0.0
    %1647 = vmatpush1.xpose.msra.mxu0 0.0
    %1648 = vmatprep.subr.mxu0 0.0
    %1649 = vmatpush1.xpose.msra.mxu0 0.0
    %1650 = vmatprep.subr.mxu0 0.0
    %1651 = vmatpush1.xpose.msra.mxu0 0.0
    %1652 = vmatprep.subr.mxu0 0.0
    %1653 = vmatpush1.xpose.msra.mxu0 0.0
    %1654 = vmatprep.subr.mxu0 0.0
    %1655 = vmatpush1.xpose.msra.mxu0 0.0
    %1656 = vmatprep.subr.mxu0 0.0
    %1657 = vmatpush1.xpose.msra.mxu0 0.0
    %1658 = vmatprep.subr.mxu0 0.0
    %1659 = vmatpush1.xpose.msra.mxu0 %v1626
    %1660 = vmatprep.subr.mxu0 0.0
    %1661 = vmatpush2.xpose.msra.mxu0 0.0
    %1662 = vmatprep.subr.mxu0 0.0
    %1663 = vmatpush2.xpose.msra.mxu0 0.0
    %1664 = vmatprep.subr.mxu0 0.0
    %1665 = vmatpush2.xpose.msra.mxu0 0.0
    %1666 = vmatprep.subr.mxu0 0.0
    %1667 = vmatpush2.xpose.msra.mxu0 0.0
    %1668 = vmatprep.subr.mxu0 0.0
    %1669 = vmatpush2.xpose.msra.mxu0 0.0
    %1670 = vmatprep.subr.mxu0 0.0
    %1671 = vmatpush2.xpose.msra.mxu0 0.0
    %1672 = vmatprep.subr.mxu0 0.0
    %1673 = vmatpush2.xpose.msra.mxu0 0.0
    %1674 = vmatprep.subr.mxu0 0.0
    %1675 = vmatpush2.xpose.msra.mxu0 0.0
    %1676 = vmatprep.subr.mxu0 0.0
    %1677 = vmatpush2.xpose.msra.mxu0 0.0
    %1678 = vmatprep.subr.mxu0 0.0
    %1679 = vmatpush2.xpose.msra.mxu0 0.0
    %1680 = vmatprep.subr.mxu0 0.0
    %1681 = vmatpush2.xpose.msra.mxu0 0.0
    %1682 = vmatprep.subr.mxu0 0.0
    %1683 = vmatpush2.xpose.msra.mxu0 0.0
    %1684 = vmatprep.subr.mxu0 0.0
    %1685 = vmatpush2.xpose.msra.mxu0 0.0
    %1686 = vmatprep.subr.mxu0 0.0
    %1687 = vmatpush2.xpose.msra.mxu0 0.0
    %1688 = vmatprep.subr.mxu0 0.0
    %1689 = vmatpush2.xpose.msra.mxu0 0.0
    %1690 = vmatprep.subr.mxu0 0.0
    %1691 = vmatpush2.xpose.msra.mxu0 0.0
    %1692 = vmatprep.mubr.f32.mxu0 0.0
    %1693 = vmatmul.mubr.f32.gmra.mxu0 %v1623
    %v1694 = vpop.f32.mrf.mxu0
    %v1695 = vadd.f32 0.0, %v1694
    %v1696 = vpop.f32.mrf.mxu0
    %1697 = vdwg.mxu0
    %v1698 = vsel %vm832, %v1695, -inf
    %1699 = vmax.xlane.f32.xlu0 %v1698
    %v1700 = vpop.xlane.xlu0 %1699
    %v1701 = vsub.f32 %v1695, %v1700
    %v1702 = vmul.f32 %v1701, 1.442695
    %v1703 = vpow.pop %v1702
    %v1704 = vsel %vm832, %v1703, 0.0
    %1705 = vadd.xlane.f32.xlu0 %v1704
    %v1706 = vpop.xlane.xlu0 %1705
    %v1707 = vrcp.pop %v1706
    %v1708 = vmul.f32 %v1703, %v1707
    %v1710 = vsel %vm832, %v1708, 0
    %1712 = vmatprep.subr.mxu0 0.0
    %1713 = vmatpush1.msra.mxu0 0.0
    %1714 = vmatprep.subr.mxu0 0.0
    %1715 = vmatpush1.msra.mxu0 0.0
    %1716 = vmatprep.subr.mxu0 0.0
    %1717 = vmatpush1.msra.mxu0 0.0
    %1718 = vmatprep.subr.mxu0 0.0
    %1719 = vmatpush1.msra.mxu0 0.0
    %1720 = vmatprep.subr.mxu0 0.0
    %1721 = vmatpush1.msra.mxu0 0.0
    %1722 = vmatprep.subr.mxu0 0.0
    %1723 = vmatpush1.msra.mxu0 0.0
    %1724 = vmatprep.subr.mxu0 0.0
    %1725 = vmatpush1.msra.mxu0 0.0
    %1726 = vmatprep.subr.mxu0 0.0
    %1727 = vmatpush1.msra.mxu0 0.0
    %1728 = vmatprep.subr.mxu0 0.0
    %1729 = vmatpush1.msra.mxu0 0.0
    %1730 = vmatprep.subr.mxu0 0.0
    %1731 = vmatpush1.msra.mxu0 0.0
    %1732 = vmatprep.subr.mxu0 0.0
    %1733 = vmatpush1.msra.mxu0 0.0
    %1734 = vmatprep.subr.mxu0 0.0
    %1735 = vmatpush1.msra.mxu0 0.0
    %1736 = vmatprep.subr.mxu0 0.0
    %1737 = vmatpush1.msra.mxu0 0.0
    %1738 = vmatprep.subr.mxu0 0.0
    %1739 = vmatpush1.msra.mxu0 0.0
    %1740 = vmatprep.subr.mxu0 0.0
    %1741 = vmatpush1.msra.mxu0 0.0
    %1742 = vmatprep.subr.mxu0 0.0
    %1743 = vmatpush1.msra.mxu0 %v1619
    %1744 = vmatprep.subr.mxu0 0.0
    %1745 = vmatpush2.msra.mxu0 0.0
    %1746 = vmatprep.subr.mxu0 0.0
    %1747 = vmatpush2.msra.mxu0 0.0
    %1748 = vmatprep.subr.mxu0 0.0
    %1749 = vmatpush2.msra.mxu0 0.0
    %1750 = vmatprep.subr.mxu0 0.0
    %1751 = vmatpush2.msra.mxu0 0.0
    %1752 = vmatprep.subr.mxu0 0.0
    %1753 = vmatpush2.msra.mxu0 0.0
    %1754 = vmatprep.subr.mxu0 0.0
    %1755 = vmatpush2.msra.mxu0 0.0
    %1756 = vmatprep.subr.mxu0 0.0
    %1757 = vmatpush2.msra.mxu0 0.0
    %1758 = vmatprep.subr.mxu0 0.0
    %1759 = vmatpush2.msra.mxu0 0.0
    %1760 = vmatprep.subr.mxu0 0.0
    %1761 = vmatpush2.msra.mxu0 0.0
    %1762 = vmatprep.subr.mxu0 0.0
    %1763 = vmatpush2.msra.mxu0 0.0
    %1764 = vmatprep.subr.mxu0 0.0
    %1765 = vmatpush2.msra.mxu0 0.0
    %1766 = vmatprep.subr.mxu0 0.0
    %1767 = vmatpush2.msra.mxu0 0.0
    %1768 = vmatprep.subr.mxu0 0.0
    %1769 = vmatpush2.msra.mxu0 0.0
    %1770 = vmatprep.subr.mxu0 0.0
    %1771 = vmatpush2.msra.mxu0 0.0
    %1772 = vmatprep.subr.mxu0 0.0
    %1773 = vmatpush2.msra.mxu0 0.0
    %1774 = vmatprep.subr.mxu0 0.0
    %1775 = vmatpush2.msra.mxu0 0.0
    %1776 = vmatprep.mubr.f32.mxu0 0.0
    %1777 = vmatmul.mubr.f32.gmra.mxu0 %v1710
    %v1778 = vpop.f32.mrf.mxu0
    %v1779 = vadd.f32 %v506, %v1778
    %v1780 = vpop.f32.mrf.mxu0
    %1781 = vdwg.mxu0
    %v1782 = vsel %vm250, %v1779, 0.0
    %1783 = vadd.xlane.f32.xlu0 %v1782
    %v1784 = vpop.xlane.xlu0 %1783
    %v1785 = vmul.f32 %v1784, %v920
    %v1786 = vsub.f32 %v1779, %v1785
    %v1787 = vmul.f32 %v1786, %v1786
    %v1788 = vsel %vm250, %v1787, 0.0
    %1789 = vadd.xlane.f32.xlu0 %v1788
    %v1790 = vpop.xlane.xlu0 %1789
    %v1791 = vmul.f32 %v1790, %v920
    %v1792 = vadd.f32 %v1791, 1e-05
    %v1793 = vrsqrt.pop %v1792
    %v1794 = vmul.f32 %v1786, %v1793
    %v1795 = vld [vmem:[%s1377 + $0x3] sm:$0x1]
    %v1796 = vlaneseq
    %v1797 = vshrl.u32 %v1796, 7
    %v1798 = vsub.s32 0, %v1797
    %v1799 = vrot.slane %v1795, %v1798
    %v1800 = vmul.f32 %v1794, %v1799
    %v1801 = vld [vmem:[%s1377 + $0x4] sm:$0x1]
    %v1802 = vlaneseq
    %v1803 = vshrl.u32 %v1802, 7
    %v1804 = vsub.s32 0, %v1803
    %v1805 = vrot.slane %v1801, %v1804
    %v1806 = vadd.f32 %v1800, %v1805
    %s1807 = scalar_lea.vmem [#allocation2], 288
    %v1808 = vld [vmem:[%s1807] sm:$0xff]
    %v1809 = vld [vmem:[%s1807 + $0x8] sm:$0xff]
    %v1810 = vld [vmem:[%s1807 + $0x10] sm:$0xff]
    %v1811 = vld [vmem:[%s1807 + $0x18] sm:$0xff]
    %s1812 = scalar_lea.vmem %s8, 24
    %v1813 = vld [vmem:[%s1812] sm:$0x1]
    %v1814 = vlaneseq
    %v1815 = vshrl.u32 %v1814, 7
    %v1816 = vsub.s32 0, %v1815
    %v1817 = vrot.slane %v1813, %v1816
    %v1819 = vsel %vm250, %v1806, 0
    %1821 = vmatprep.subr.mxu0 0.0
    %1822 = vmatpush1.msra.mxu0 0.0
    %1823 = vmatprep.subr.mxu0 0.0
    %1824 = vmatpush1.msra.mxu0 0.0
    %1825 = vmatprep.subr.mxu0 0.0
    %1826 = vmatpush1.msra.mxu0 0.0
    %1827 = vmatprep.subr.mxu0 0.0
    %1828 = vmatpush1.msra.mxu0 0.0
    %1829 = vmatprep.subr.mxu0 0.0
    %1830 = vmatpush1.msra.mxu0 0.0
    %1831 = vmatprep.subr.mxu0 0.0
    %1832 = vmatpush1.msra.mxu0 0.0
    %1833 = vmatprep.subr.mxu0 0.0
    %1834 = vmatpush1.msra.mxu0 0.0
    %1835 = vmatprep.subr.mxu0 0.0
    %1836 = vmatpush1.msra.mxu0 0.0
    %1837 = vmatprep.subr.mxu0 0.0
    %1838 = vmatpush1.msra.mxu0 0.0
    %1839 = vmatprep.subr.mxu0 0.0
    %1840 = vmatpush1.msra.mxu0 0.0
    %1841 = vmatprep.subr.mxu0 0.0
    %1842 = vmatpush1.msra.mxu0 0.0
    %1843 = vmatprep.subr.mxu0 0.0
    %1844 = vmatpush1.msra.mxu0 0.0
    %1845 = vmatprep.subr.mxu0 0.0
    %1846 = vmatpush1.msra.mxu0 %v1811
    %1847 = vmatprep.subr.mxu0 0.0
    %1848 = vmatpush1.msra.mxu0 %v1810
    %1849 = vmatprep.subr.mxu0 0.0
    %1850 = vmatpush1.msra.mxu0 %v1809
    %1851 = vmatprep.subr.mxu0 0.0
    %1852 = vmatpush1.msra.mxu0 %v1808
    %1853 = vmatprep.subr.mxu0 0.0
    %1854 = vmatpush2.msra.mxu0 0.0
    %1855 = vmatprep.subr.mxu0 0.0
    %1856 = vmatpush2.msra.mxu0 0.0
    %1857 = vmatprep.subr.mxu0 0.0
    %1858 = vmatpush2.msra.mxu0 0.0
    %1859 = vmatprep.subr.mxu0 0.0
    %1860 = vmatpush2.msra.mxu0 0.0
    %1861 = vmatprep.subr.mxu0 0.0
    %1862 = vmatpush2.msra.mxu0 0.0
    %1863 = vmatprep.subr.mxu0 0.0
    %1864 = vmatpush2.msra.mxu0 0.0
    %1865 = vmatprep.subr.mxu0 0.0
    %1866 = vmatpush2.msra.mxu0 0.0
    %1867 = vmatprep.subr.mxu0 0.0
    %1868 = vmatpush2.msra.mxu0 0.0
    %1869 = vmatprep.subr.mxu0 0.0
    %1870 = vmatpush2.msra.mxu0 0.0
    %1871 = vmatprep.subr.mxu0 0.0
    %1872 = vmatpush2.msra.mxu0 0.0
    %1873 = vmatprep.subr.mxu0 0.0
    %1874 = vmatpush2.msra.mxu0 0.0
    %1875 = vmatprep.subr.mxu0 0.0
    %1876 = vmatpush2.msra.mxu0 0.0
    %1877 = vmatprep.subr.mxu0 0.0
    %1878 = vmatpush2.msra.mxu0 0.0
    %1879 = vmatprep.subr.mxu0 0.0
    %1880 = vmatpush2.msra.mxu0 0.0
    %1881 = vmatprep.subr.mxu0 0.0
    %1882 = vmatpush2.msra.mxu0 0.0
    %1883 = vmatprep.subr.mxu0 0.0
    %1884 = vmatpush2.msra.mxu0 0.0
    %1885 = vmatprep.mubr.f32.mxu0 0.0
    %1886 = vmatmul.mubr.f32.gmra.mxu0 %v1819
    %v1887 = vpop.f32.mrf.mxu0
    %v1888 = vadd.f32 %v1817, %v1887
    %v1889 = vpop.f32.mrf.mxu0
    %1890 = vdwg.mxu0
    %s1891 = scalar_lea.vmem [#allocation2], 320
    %v1892 = vld [vmem:[%s1891] sm:$0xff]
    %v1893 = vld [vmem:[%s1891 + $0x8] sm:$0xff]
    %v1894 = vld [vmem:[%s1891 + $0x10] sm:$0xff]
    %v1895 = vld [vmem:[%s1891 + $0x18] sm:$0xff]
    %v1896 = vld [vmem:[%s1812 + $0x1] sm:$0x1]
    %v1897 = vlaneseq
    %v1898 = vshrl.u32 %v1897, 7
    %v1899 = vsub.s32 0, %v1898
    %v1900 = vrot.slane %v1896, %v1899
    %1901 = vmatprep.subr.mxu0 0.0
    %1902 = vmatpush1.msra.mxu0 0.0
    %1903 = vmatprep.subr.mxu0 0.0
    %1904 = vmatpush1.msra.mxu0 0.0
    %1905 = vmatprep.subr.mxu0 0.0
    %1906 = vmatpush1.msra.mxu0 0.0
    %1907 = vmatprep.subr.mxu0 0.0
    %1908 = vmatpush1.msra.mxu0 0.0
    %1909 = vmatprep.subr.mxu0 0.0
    %1910 = vmatpush1.msra.mxu0 0.0
    %1911 = vmatprep.subr.mxu0 0.0
    %1912 = vmatpush1.msra.mxu0 0.0
    %1913 = vmatprep.subr.mxu0 0.0
    %1914 = vmatpush1.msra.mxu0 0.0
    %1915 = vmatprep.subr.mxu0 0.0
    %1916 = vmatpush1.msra.mxu0 0.0
    %1917 = vmatprep.subr.mxu0 0.0
    %1918 = vmatpush1.msra.mxu0 0.0
    %1919 = vmatprep.subr.mxu0 0.0
    %1920 = vmatpush1.msra.mxu0 0.0
    %1921 = vmatprep.subr.mxu0 0.0
    %1922 = vmatpush1.msra.mxu0 0.0
    %1923 = vmatprep.subr.mxu0 0.0
    %1924 = vmatpush1.msra.mxu0 0.0
    %1925 = vmatprep.subr.mxu0 0.0
    %1926 = vmatpush1.msra.mxu0 %v1895
    %1927 = vmatprep.subr.mxu0 0.0
    %1928 = vmatpush1.msra.mxu0 %v1894
    %1929 = vmatprep.subr.mxu0 0.0
    %1930 = vmatpush1.msra.mxu0 %v1893
    %1931 = vmatprep.subr.mxu0 0.0
    %1932 = vmatpush1.msra.mxu0 %v1892
    %1933 = vmatprep.subr.mxu0 0.0
    %1934 = vmatpush2.msra.mxu0 0.0
    %1935 = vmatprep.subr.mxu0 0.0
    %1936 = vmatpush2.msra.mxu0 0.0
    %1937 = vmatprep.subr.mxu0 0.0
    %1938 = vmatpush2.msra.mxu0 0.0
    %1939 = vmatprep.subr.mxu0 0.0
    %1940 = vmatpush2.msra.mxu0 0.0
    %1941 = vmatprep.subr.mxu0 0.0
    %1942 = vmatpush2.msra.mxu0 0.0
    %1943 = vmatprep.subr.mxu0 0.0
    %1944 = vmatpush2.msra.mxu0 0.0
    %1945 = vmatprep.subr.mxu0 0.0
    %1946 = vmatpush2.msra.mxu0 0.0
    %1947 = vmatprep.subr.mxu0 0.0
    %1948 = vmatpush2.msra.mxu0 0.0
    %1949 = vmatprep.subr.mxu0 0.0
    %1950 = vmatpush2.msra.mxu0 0.0
    %1951 = vmatprep.subr.mxu0 0.0
    %1952 = vmatpush2.msra.mxu0 0.0
    %1953 = vmatprep.subr.mxu0 0.0
    %1954 = vmatpush2.msra.mxu0 0.0
    %1955 = vmatprep.subr.mxu0 0.0
    %1956 = vmatpush2.msra.mxu0 0.0
    %1957 = vmatprep.subr.mxu0 0.0
    %1958 = vmatpush2.msra.mxu0 0.0
    %1959 = vmatprep.subr.mxu0 0.0
    %1960 = vmatpush2.msra.mxu0 0.0
    %1961 = vmatprep.subr.mxu0 0.0
    %1962 = vmatpush2.msra.mxu0 0.0
    %1963 = vmatprep.subr.mxu0 0.0
    %1964 = vmatpush2.msra.mxu0 0.0
    %1965 = vmatprep.mubr.f32.mxu0 0.0
    %1966 = vmatmul.mubr.f32.gmra.mxu0 %v1467
    %v1967 = vpop.f32.mrf.mxu0
    %v1968 = vadd.f32 %v1900, %v1967
    %v1969 = vpop.f32.mrf.mxu0
    %1970 = vdwg.mxu0
    %s1971 = scalar_lea.vmem [#allocation2], 352
    %v1972 = vld [vmem:[%s1971] sm:$0xff]
    %v1973 = vld [vmem:[%s1971 + $0x8] sm:$0xff]
    %v1974 = vld [vmem:[%s1971 + $0x10] sm:$0xff]
    %v1975 = vld [vmem:[%s1971 + $0x18] sm:$0xff]
    %v1976 = vld [vmem:[%s1812 + $0x2] sm:$0x1]
    %v1977 = vlaneseq
    %v1978 = vshrl.u32 %v1977, 7
    %v1979 = vsub.s32 0, %v1978
    %v1980 = vrot.slane %v1976, %v1979
    %1981 = vmatprep.subr.mxu0 0.0
    %1982 = vmatpush1.msra.mxu0 0.0
    %1983 = vmatprep.subr.mxu0 0.0
    %1984 = vmatpush1.msra.mxu0 0.0
    %1985 = vmatprep.subr.mxu0 0.0
    %1986 = vmatpush1.msra.mxu0 0.0
    %1987 = vmatprep.subr.mxu0 0.0
    %1988 = vmatpush1.msra.mxu0 0.0
    %1989 = vmatprep.subr.mxu0 0.0
    %1990 = vmatpush1.msra.mxu0 0.0
    %1991 = vmatprep.subr.mxu0 0.0
    %1992 = vmatpush1.msra.mxu0 0.0
    %1993 = vmatprep.subr.mxu0 0.0
    %1994 = vmatpush1.msra.mxu0 0.0
    %1995 = vmatprep.subr.mxu0 0.0
    %1996 = vmatpush1.msra.mxu0 0.0
    %1997 = vmatprep.subr.mxu0 0.0
    %1998 = vmatpush1.msra.mxu0 0.0
    %1999 = vmatprep.subr.mxu0 0.0
    %2000 = vmatpush1.msra.mxu0 0.0
    %2001 = vmatprep.subr.mxu0 0.0
    %2002 = vmatpush1.msra.mxu0 0.0
    %2003 = vmatprep.subr.mxu0 0.0
    %2004 = vmatpush1.msra.mxu0 0.0
    %2005 = vmatprep.subr.mxu0 0.0
    %2006 = vmatpush1.msra.mxu0 %v1975
    %2007 = vmatprep.subr.mxu0 0.0
    %2008 = vmatpush1.msra.mxu0 %v1974
    %2009 = vmatprep.subr.mxu0 0.0
    %2010 = vmatpush1.msra.mxu0 %v1973
    %2011 = vmatprep.subr.mxu0 0.0
    %2012 = vmatpush1.msra.mxu0 %v1972
    %2013 = vmatprep.subr.mxu0 0.0
    %2014 = vmatpush2.msra.mxu0 0.0
    %2015 = vmatprep.subr.mxu0 0.0
    %2016 = vmatpush2.msra.mxu0 0.0
    %2017 = vmatprep.subr.mxu0 0.0
    %2018 = vmatpush2.msra.mxu0 0.0
    %2019 = vmatprep.subr.mxu0 0.0
    %2020 = vmatpush2.msra.mxu0 0.0
    %2021 = vmatprep.subr.mxu0 0.0
    %2022 = vmatpush2.msra.mxu0 0.0
    %2023 = vmatprep.subr.mxu0 0.0
    %2024 = vmatpush2.msra.mxu0 0.0
    %2025 = vmatprep.subr.mxu0 0.0
    %2026 = vmatpush2.msra.mxu0 0.0
    %2027 = vmatprep.subr.mxu0 0.0
    %2028 = vmatpush2.msra.mxu0 0.0
    %2029 = vmatprep.subr.mxu0 0.0
    %2030 = vmatpush2.msra.mxu0 0.0
    %2031 = vmatprep.subr.mxu0 0.0
    %2032 = vmatpush2.msra.mxu0 0.0
    %2033 = vmatprep.subr.mxu0 0.0
    %2034 = vmatpush2.msra.mxu0 0.0
    %2035 = vmatprep.subr.mxu0 0.0
    %2036 = vmatpush2.msra.mxu0 0.0
    %2037 = vmatprep.subr.mxu0 0.0
    %2038 = vmatpush2.msra.mxu0 0.0
    %2039 = vmatprep.subr.mxu0 0.0
    %2040 = vmatpush2.msra.mxu0 0.0
    %2041 = vmatprep.subr.mxu0 0.0
    %2042 = vmatpush2.msra.mxu0 0.0
    %2043 = vmatprep.subr.mxu0 0.0
    %2044 = vmatpush2.msra.mxu0 0.0
    %2045 = vmatprep.mubr.f32.mxu0 0.0
    %2046 = vmatmul.mubr.f32.gmra.mxu0 %v1550
    %v2047 = vpop.f32.mrf.mxu0
    %v2048 = vadd.f32 %v1980, %v2047
    %v2049 = vpop.f32.mrf.mxu0
    %2050 = vdwg.mxu0
    %v2052 = vsel %vm250, %v1888, 0
    %v2055 = vsel %vm250, %v1968, 0
    %2057 = vmatprep.subr.mxu0 0.0
    %2058 = vmatpush1.xpose.msra.mxu0 0.0
    %2059 = vmatprep.subr.mxu0 0.0
    %2060 = vmatpush1.xpose.msra.mxu0 0.0
    %2061 = vmatprep.subr.mxu0 0.0
    %2062 = vmatpush1.xpose.msra.mxu0 0.0
    %2063 = vmatprep.subr.mxu0 0.0
    %2064 = vmatpush1.xpose.msra.mxu0 0.0
    %2065 = vmatprep.subr.mxu0 0.0
    %2066 = vmatpush1.xpose.msra.mxu0 0.0
    %2067 = vmatprep.subr.mxu0 0.0
    %2068 = vmatpush1.xpose.msra.mxu0 0.0
    %2069 = vmatprep.subr.mxu0 0.0
    %2070 = vmatpush1.xpose.msra.mxu0 0.0
    %2071 = vmatprep.subr.mxu0 0.0
    %2072 = vmatpush1.xpose.msra.mxu0 0.0
    %2073 = vmatprep.subr.mxu0 0.0
    %2074 = vmatpush1.xpose.msra.mxu0 0.0
    %2075 = vmatprep.subr.mxu0 0.0
    %2076 = vmatpush1.xpose.msra.mxu0 0.0
    %2077 = vmatprep.subr.mxu0 0.0
    %2078 = vmatpush1.xpose.msra.mxu0 0.0
    %2079 = vmatprep.subr.mxu0 0.0
    %2080 = vmatpush1.xpose.msra.mxu0 0.0
    %2081 = vmatprep.subr.mxu0 0.0
    %2082 = vmatpush1.xpose.msra.mxu0 0.0
    %2083 = vmatprep.subr.mxu0 0.0
    %2084 = vmatpush1.xpose.msra.mxu0 0.0
    %2085 = vmatprep.subr.mxu0 0.0
    %2086 = vmatpush1.xpose.msra.mxu0 0.0
    %2087 = vmatprep.subr.mxu0 0.0
    %2088 = vmatpush1.xpose.msra.mxu0 %v2055
    %2089 = vmatprep.subr.mxu0 0.0
    %2090 = vmatpush2.xpose.msra.mxu0 0.0
    %2091 = vmatprep.subr.mxu0 0.0
    %2092 = vmatpush2.xpose.msra.mxu0 0.0
    %2093 = vmatprep.subr.mxu0 0.0
    %2094 = vmatpush2.xpose.msra.mxu0 0.0
    %2095 = vmatprep.subr.mxu0 0.0
    %2096 = vmatpush2.xpose.msra.mxu0 0.0
    %2097 = vmatprep.subr.mxu0 0.0
    %2098 = vmatpush2.xpose.msra.mxu0 0.0
    %2099 = vmatprep.subr.mxu0 0.0
    %2100 = vmatpush2.xpose.msra.mxu0 0.0
    %2101 = vmatprep.subr.mxu0 0.0
    %2102 = vmatpush2.xpose.msra.mxu0 0.0
    %2103 = vmatprep.subr.mxu0 0.0
    %2104 = vmatpush2.xpose.msra.mxu0 0.0
    %2105 = vmatprep.subr.mxu0 0.0
    %2106 = vmatpush2.xpose.msra.mxu0 0.0
    %2107 = vmatprep.subr.mxu0 0.0
    %2108 = vmatpush2.xpose.msra.mxu0 0.0
    %2109 = vmatprep.subr.mxu0 0.0
    %2110 = vmatpush2.xpose.msra.mxu0 0.0
    %2111 = vmatprep.subr.mxu0 0.0
    %2112 = vmatpush2.xpose.msra.mxu0 0.0
    %2113 = vmatprep.subr.mxu0 0.0
    %2114 = vmatpush2.xpose.msra.mxu0 0.0
    %2115 = vmatprep.subr.mxu0 0.0
    %2116 = vmatpush2.xpose.msra.mxu0 0.0
    %2117 = vmatprep.subr.mxu0 0.0
    %2118 = vmatpush2.xpose.msra.mxu0 0.0
    %2119 = vmatprep.subr.mxu0 0.0
    %2120 = vmatpush2.xpose.msra.mxu0 0.0
    %2121 = vmatprep.mubr.f32.mxu0 0.0
    %2122 = vmatmul.mubr.f32.gmra.mxu0 %v2052
    %v2123 = vpop.f32.mrf.mxu0
    %v2124 = vadd.f32 0.0, %v2123
    %v2125 = vpop.f32.mrf.mxu0
    %2126 = vdwg.mxu0
    %v2127 = vsel %vm832, %v2124, -inf
    %2128 = vmax.xlane.f32.xlu0 %v2127
    %v2129 = vpop.xlane.xlu0 %2128
    %v2130 = vsub.f32 %v2124, %v2129
    %v2131 = vmul.f32 %v2130, 1.442695
    %v2132 = vpow.pop %v2131
    %v2133 = vsel %vm832, %v2132, 0.0
    %2134 = vadd.xlane.f32.xlu0 %v2133
    %v2135 = vpop.xlane.xlu0 %2134
    %v2136 = vrcp.pop %v2135
    %v2137 = vmul.f32 %v2132, %v2136
    %v2139 = vsel %vm832, %v2137, 0
    %2141 = vmatprep.subr.mxu0 0.0
    %2142 = vmatpush1.msra.mxu0 0.0
    %2143 = vmatprep.subr.mxu0 0.0
    %2144 = vmatpush1.msra.mxu0 0.0
    %2145 = vmatprep.subr.mxu0 0.0
    %2146 = vmatpush1.msra.mxu0 0.0
    %2147 = vmatprep.subr.mxu0 0.0
    %2148 = vmatpush1.msra.mxu0 0.0
    %2149 = vmatprep.subr.mxu0 0.0
    %2150 = vmatpush1.msra.mxu0 0.0
    %2151 = vmatprep.subr.mxu0 0.0
    %2152 = vmatpush1.msra.mxu0 0.0
    %2153 = vmatprep.subr.mxu0 0.0
    %2154 = vmatpush1.msra.mxu0 0.0
    %2155 = vmatprep.subr.mxu0 0.0
    %2156 = vmatpush1.msra.mxu0 0.0
    %2157 = vmatprep.subr.mxu0 0.0
    %2158 = vmatpush1.msra.mxu0 0.0
    %2159 = vmatprep.subr.mxu0 0.0
    %2160 = vmatpush1.msra.mxu0 0.0
    %2161 = vmatprep.subr.mxu0 0.0
    %2162 = vmatpush1.msra.mxu0 0.0
    %2163 = vmatprep.subr.mxu0 0.0
    %2164 = vmatpush1.msra.mxu0 0.0
    %2165 = vmatprep.subr.mxu0 0.0
    %2166 = vmatpush1.msra.mxu0 0.0
    %2167 = vmatprep.subr.mxu0 0.0
    %2168 = vmatpush1.msra.mxu0 0.0
    %2169 = vmatprep.subr.mxu0 0.0
    %2170 = vmatpush1.msra.mxu0 0.0
    %2171 = vmatprep.subr.mxu0 0.0
    %2172 = vmatpush1.msra.mxu0 %v2048
    %2173 = vmatprep.subr.mxu0 0.0
    %2174 = vmatpush2.msra.mxu0 0.0
    %2175 = vmatprep.subr.mxu0 0.0
    %2176 = vmatpush2.msra.mxu0 0.0
    %2177 = vmatprep.subr.mxu0 0.0
    %2178 = vmatpush2.msra.mxu0 0.0
    %2179 = vmatprep.subr.mxu0 0.0
    %2180 = vmatpush2.msra.mxu0 0.0
    %2181 = vmatprep.subr.mxu0 0.0
    %2182 = vmatpush2.msra.mxu0 0.0
    %2183 = vmatprep.subr.mxu0 0.0
    %2184 = vmatpush2.msra.mxu0 0.0
    %2185 = vmatprep.subr.mxu0 0.0
    %2186 = vmatpush2.msra.mxu0 0.0
    %2187 = vmatprep.subr.mxu0 0.0
    %2188 = vmatpush2.msra.mxu0 0.0
    %2189 = vmatprep.subr.mxu0 0.0
    %2190 = vmatpush2.msra.mxu0 0.0
    %2191 = vmatprep.subr.mxu0 0.0
    %2192 = vmatpush2.msra.mxu0 0.0
    %2193 = vmatprep.subr.mxu0 0.0
    %2194 = vmatpush2.msra.mxu0 0.0
    %2195 = vmatprep.subr.mxu0 0.0
    %2196 = vmatpush2.msra.mxu0 0.0
    %2197 = vmatprep.subr.mxu0 0.0
    %2198 = vmatpush2.msra.mxu0 0.0
    %2199 = vmatprep.subr.mxu0 0.0
    %2200 = vmatpush2.msra.mxu0 0.0
    %2201 = vmatprep.subr.mxu0 0.0
    %2202 = vmatpush2.msra.mxu0 0.0
    %2203 = vmatprep.subr.mxu0 0.0
    %2204 = vmatpush2.msra.mxu0 0.0
    %2205 = vmatprep.mubr.f32.mxu0 0.0
    %2206 = vmatmul.mubr.f32.gmra.mxu0 %v2139
    %v2207 = vpop.f32.mrf.mxu0
    %v2208 = vadd.f32 %v1806, %v2207
    %v2209 = vpop.f32.mrf.mxu0
    %2210 = vdwg.mxu0
    %v2211 = vsel %vm250, %v2208, 0.0
    %2212 = vadd.xlane.f32.xlu0 %v2211
    %v2213 = vpop.xlane.xlu0 %2212
    %v2214 = vmul.f32 %v2213, %v920
    %v2215 = vsub.f32 %v2208, %v2214
    %v2216 = vmul.f32 %v2215, %v2215
    %v2217 = vsel %vm250, %v2216, 0.0
    %2218 = vadd.xlane.f32.xlu0 %v2217
    %v2219 = vpop.xlane.xlu0 %2218
    %v2220 = vmul.f32 %v2219, %v920
    %v2221 = vadd.f32 %v2220, 1e-05
    %v2222 = vrsqrt.pop %v2221
    %v2223 = vmul.f32 %v2215, %v2222
    %v2224 = vld [vmem:[%s1812 + $0x3] sm:$0x1]
    %v2225 = vlaneseq
    %v2226 = vshrl.u32 %v2225, 7
    %v2227 = vsub.s32 0, %v2226
    %v2228 = vrot.slane %v2224, %v2227
    %v2229 = vmul.f32 %v2223, %v2228
    %v2230 = vld [vmem:[%s1812 + $0x4] sm:$0x1]
    %v2231 = vlaneseq
    %v2232 = vshrl.u32 %v2231, 7
    %v2233 = vsub.s32 0, %v2232
    %v2234 = vrot.slane %v2230, %v2233
    %v2235 = vadd.f32 %v2229, %v2234
    %v2237 = vsel %vm250, %v329, 0
    %2239 = vmatprep.subr.mxu0 0.0
    %2240 = vmatpush1.msra.mxu0 0.0
    %2241 = vmatprep.subr.mxu0 0.0
    %2242 = vmatpush1.msra.mxu0 0.0
    %2243 = vmatprep.subr.mxu0 0.0
    %2244 = vmatpush1.msra.mxu0 0.0
    %2245 = vmatprep.subr.mxu0 0.0
    %2246 = vmatpush1.msra.mxu0 0.0
    %2247 = vmatprep.subr.mxu0 0.0
    %2248 = vmatpush1.msra.mxu0 0.0
    %2249 = vmatprep.subr.mxu0 0.0
    %2250 = vmatpush1.msra.mxu0 0.0
    %2251 = vmatprep.subr.mxu0 0.0
    %2252 = vmatpush1.msra.mxu0 0.0
    %2253 = vmatprep.subr.mxu0 0.0
    %2254 = vmatpush1.msra.mxu0 0.0
    %2255 = vmatprep.subr.mxu0 0.0
    %2256 = vmatpush1.msra.mxu0 0.0
    %2257 = vmatprep.subr.mxu0 0.0
    %2258 = vmatpush1.msra.mxu0 0.0
    %2259 = vmatprep.subr.mxu0 0.0
    %2260 = vmatpush1.msra.mxu0 0.0
    %2261 = vmatprep.subr.mxu0 0.0
    %2262 = vmatpush1.msra.mxu0 0.0
    %2263 = vmatprep.subr.mxu0 0.0
    %2264 = vmatpush1.msra.mxu0 %v517
    %2265 = vmatprep.subr.mxu0 0.0
    %2266 = vmatpush1.msra.mxu0 %v516
    %2267 = vmatprep.subr.mxu0 0.0
    %2268 = vmatpush1.msra.mxu0 %v515
    %2269 = vmatprep.subr.mxu0 0.0
    %2270 = vmatpush1.msra.mxu0 %v514
    %2271 = vmatprep.subr.mxu0 0.0
    %2272 = vmatpush2.msra.mxu0 0.0
    %2273 = vmatprep.subr.mxu0 0.0
    %2274 = vmatpush2.msra.mxu0 0.0
    %2275 = vmatprep.subr.mxu0 0.0
    %2276 = vmatpush2.msra.mxu0 0.0
    %2277 = vmatprep.subr.mxu0 0.0
    %2278 = vmatpush2.msra.mxu0 0.0
    %2279 = vmatprep.subr.mxu0 0.0
    %2280 = vmatpush2.msra.mxu0 0.0
    %2281 = vmatprep.subr.mxu0 0.0
    %2282 = vmatpush2.msra.mxu0 0.0
    %2283 = vmatprep.subr.mxu0 0.0
    %2284 = vmatpush2.msra.mxu0 0.0
    %2285 = vmatprep.subr.mxu0 0.0
    %2286 = vmatpush2.msra.mxu0 0.0
    %2287 = vmatprep.subr.mxu0 0.0
    %2288 = vmatpush2.msra.mxu0 0.0
    %2289 = vmatprep.subr.mxu0 0.0
    %2290 = vmatpush2.msra.mxu0 0.0
    %2291 = vmatprep.subr.mxu0 0.0
    %2292 = vmatpush2.msra.mxu0 0.0
    %2293 = vmatprep.subr.mxu0 0.0
    %2294 = vmatpush2.msra.mxu0 0.0
    %2295 = vmatprep.subr.mxu0 0.0
    %2296 = vmatpush2.msra.mxu0 0.0
    %2297 = vmatprep.subr.mxu0 0.0
    %2298 = vmatpush2.msra.mxu0 0.0
    %2299 = vmatprep.subr.mxu0 0.0
    %2300 = vmatpush2.msra.mxu0 0.0
    %2301 = vmatprep.subr.mxu0 0.0
    %2302 = vmatpush2.msra.mxu0 0.0
    %2303 = vmatprep.mubr.f32.mxu0 0.0
    %2304 = vmatmul.mubr.f32.gmra.mxu0 %v2237
    %v2305 = vpop.f32.mrf.mxu0
    %v2306 = vadd.f32 %v522, %v2305
    %v2307 = vpop.f32.mrf.mxu0
    %2308 = vdwg.mxu0
    %2309 = vmatprep.subr.mxu0 0.0
    %2310 = vmatpush1.msra.mxu0 0.0
    %2311 = vmatprep.subr.mxu0 0.0
    %2312 = vmatpush1.msra.mxu0 0.0
    %2313 = vmatprep.subr.mxu0 0.0
    %2314 = vmatpush1.msra.mxu0 0.0
    %2315 = vmatprep.subr.mxu0 0.0
    %2316 = vmatpush1.msra.mxu0 0.0
    %2317 = vmatprep.subr.mxu0 0.0
    %2318 = vmatpush1.msra.mxu0 0.0
    %2319 = vmatprep.subr.mxu0 0.0
    %2320 = vmatpush1.msra.mxu0 0.0
    %2321 = vmatprep.subr.mxu0 0.0
    %2322 = vmatpush1.msra.mxu0 0.0
    %2323 = vmatprep.subr.mxu0 0.0
    %2324 = vmatpush1.msra.mxu0 0.0
    %2325 = vmatprep.subr.mxu0 0.0
    %2326 = vmatpush1.msra.mxu0 0.0
    %2327 = vmatprep.subr.mxu0 0.0
    %2328 = vmatpush1.msra.mxu0 0.0
    %2329 = vmatprep.subr.mxu0 0.0
    %2330 = vmatpush1.msra.mxu0 0.0
    %2331 = vmatprep.subr.mxu0 0.0
    %2332 = vmatpush1.msra.mxu0 0.0
    %2333 = vmatprep.subr.mxu0 0.0
    %2334 = vmatpush1.msra.mxu0 %v600
    %2335 = vmatprep.subr.mxu0 0.0
    %2336 = vmatpush1.msra.mxu0 %v599
    %2337 = vmatprep.subr.mxu0 0.0
    %2338 = vmatpush1.msra.mxu0 %v598
    %2339 = vmatprep.subr.mxu0 0.0
    %2340 = vmatpush1.msra.mxu0 %v597
    %2341 = vmatprep.subr.mxu0 0.0
    %2342 = vmatpush2.msra.mxu0 0.0
    %2343 = vmatprep.subr.mxu0 0.0
    %2344 = vmatpush2.msra.mxu0 0.0
    %2345 = vmatprep.subr.mxu0 0.0
    %2346 = vmatpush2.msra.mxu0 0.0
    %2347 = vmatprep.subr.mxu0 0.0
    %2348 = vmatpush2.msra.mxu0 0.0
    %2349 = vmatprep.subr.mxu0 0.0
    %2350 = vmatpush2.msra.mxu0 0.0
    %2351 = vmatprep.subr.mxu0 0.0
    %2352 = vmatpush2.msra.mxu0 0.0
    %2353 = vmatprep.subr.mxu0 0.0
    %2354 = vmatpush2.msra.mxu0 0.0
    %2355 = vmatprep.subr.mxu0 0.0
    %2356 = vmatpush2.msra.mxu0 0.0
    %2357 = vmatprep.subr.mxu0 0.0
    %2358 = vmatpush2.msra.mxu0 0.0
    %2359 = vmatprep.subr.mxu0 0.0
    %2360 = vmatpush2.msra.mxu0 0.0
    %2361 = vmatprep.subr.mxu0 0.0
    %2362 = vmatpush2.msra.mxu0 0.0
    %2363 = vmatprep.subr.mxu0 0.0
    %2364 = vmatpush2.msra.mxu0 0.0
    %2365 = vmatprep.subr.mxu0 0.0
    %2366 = vmatpush2.msra.mxu0 0.0
    %2367 = vmatprep.subr.mxu0 0.0
    %2368 = vmatpush2.msra.mxu0 0.0
    %2369 = vmatprep.subr.mxu0 0.0
    %2370 = vmatpush2.msra.mxu0 0.0
    %2371 = vmatprep.subr.mxu0 0.0
    %2372 = vmatpush2.msra.mxu0 0.0
    %2373 = vmatprep.mubr.f32.mxu0 0.0
    %2374 = vmatmul.mubr.f32.gmra.mxu0 %v2237
    %v2375 = vpop.f32.mrf.mxu0
    %v2376 = vadd.f32 %v605, %v2375
    %v2377 = vpop.f32.mrf.mxu0
    %2378 = vdwg.mxu0
    %2379 = vmatprep.subr.mxu0 0.0
    %2380 = vmatpush1.msra.mxu0 0.0
    %2381 = vmatprep.subr.mxu0 0.0
    %2382 = vmatpush1.msra.mxu0 0.0
    %2383 = vmatprep.subr.mxu0 0.0
    %2384 = vmatpush1.msra.mxu0 0.0
    %2385 = vmatprep.subr.mxu0 0.0
    %2386 = vmatpush1.msra.mxu0 0.0
    %2387 = vmatprep.subr.mxu0 0.0
    %2388 = vmatpush1.msra.mxu0 0.0
    %2389 = vmatprep.subr.mxu0 0.0
    %2390 = vmatpush1.msra.mxu0 0.0
    %2391 = vmatprep.subr.mxu0 0.0
    %2392 = vmatpush1.msra.mxu0 0.0
    %2393 = vmatprep.subr.mxu0 0.0
    %2394 = vmatpush1.msra.mxu0 0.0
    %2395 = vmatprep.subr.mxu0 0.0
    %2396 = vmatpush1.msra.mxu0 0.0
    %2397 = vmatprep.subr.mxu0 0.0
    %2398 = vmatpush1.msra.mxu0 0.0
    %2399 = vmatprep.subr.mxu0 0.0
    %2400 = vmatpush1.msra.mxu0 0.0
    %2401 = vmatprep.subr.mxu0 0.0
    %2402 = vmatpush1.msra.mxu0 0.0
    %2403 = vmatprep.subr.mxu0 0.0
    %2404 = vmatpush1.msra.mxu0 %v680
    %2405 = vmatprep.subr.mxu0 0.0
    %2406 = vmatpush1.msra.mxu0 %v679
    %2407 = vmatprep.subr.mxu0 0.0
    %2408 = vmatpush1.msra.mxu0 %v678
    %2409 = vmatprep.subr.mxu0 0.0
    %2410 = vmatpush1.msra.mxu0 %v677
    %2411 = vmatprep.subr.mxu0 0.0
    %2412 = vmatpush2.msra.mxu0 0.0
    %2413 = vmatprep.subr.mxu0 0.0
    %2414 = vmatpush2.msra.mxu0 0.0
    %2415 = vmatprep.subr.mxu0 0.0
    %2416 = vmatpush2.msra.mxu0 0.0
    %2417 = vmatprep.subr.mxu0 0.0
    %2418 = vmatpush2.msra.mxu0 0.0
    %2419 = vmatprep.subr.mxu0 0.0
    %2420 = vmatpush2.msra.mxu0 0.0
    %2421 = vmatprep.subr.mxu0 0.0
    %2422 = vmatpush2.msra.mxu0 0.0
    %2423 = vmatprep.subr.mxu0 0.0
    %2424 = vmatpush2.msra.mxu0 0.0
    %2425 = vmatprep.subr.mxu0 0.0
    %2426 = vmatpush2.msra.mxu0 0.0
    %2427 = vmatprep.subr.mxu0 0.0
    %2428 = vmatpush2.msra.mxu0 0.0
    %2429 = vmatprep.subr.mxu0 0.0
    %2430 = vmatpush2.msra.mxu0 0.0
    %2431 = vmatprep.subr.mxu0 0.0
    %2432 = vmatpush2.msra.mxu0 0.0
    %2433 = vmatprep.subr.mxu0 0.0
    %2434 = vmatpush2.msra.mxu0 0.0
    %2435 = vmatprep.subr.mxu0 0.0
    %2436 = vmatpush2.msra.mxu0 0.0
    %2437 = vmatprep.subr.mxu0 0.0
    %2438 = vmatpush2.msra.mxu0 0.0
    %2439 = vmatprep.subr.mxu0 0.0
    %2440 = vmatpush2.msra.mxu0 0.0
    %2441 = vmatprep.subr.mxu0 0.0
    %2442 = vmatpush2.msra.mxu0 0.0
    %2443 = vmatprep.mubr.f32.mxu0 0.0
    %2444 = vmatmul.mubr.f32.gmra.mxu0 %v2237
    %v2445 = vpop.f32.mrf.mxu0
    %v2446 = vadd.f32 %v685, %v2445
    %v2447 = vpop.f32.mrf.mxu0
    %2448 = vdwg.mxu0
    %v2450 = vsel %vm250, %v2306, 0
    %v2453 = vsel %vm250, %v2376, 0
    %2455 = vmatprep.subr.mxu0 0.0
    %2456 = vmatpush1.xpose.msra.mxu0 0.0
    %2457 = vmatprep.subr.mxu0 0.0
    %2458 = vmatpush1.xpose.msra.mxu0 0.0
    %2459 = vmatprep.subr.mxu0 0.0
    %2460 = vmatpush1.xpose.msra.mxu0 0.0
    %2461 = vmatprep.subr.mxu0 0.0
    %2462 = vmatpush1.xpose.msra.mxu0 0.0
    %2463 = vmatprep.subr.mxu0 0.0
    %2464 = vmatpush1.xpose.msra.mxu0 0.0
    %2465 = vmatprep.subr.mxu0 0.0
    %2466 = vmatpush1.xpose.msra.mxu0 0.0
    %2467 = vmatprep.subr.mxu0 0.0
    %2468 = vmatpush1.xpose.msra.mxu0 0.0
    %2469 = vmatprep.subr.mxu0 0.0
    %2470 = vmatpush1.xpose.msra.mxu0 0.0
    %2471 = vmatprep.subr.mxu0 0.0
    %2472 = vmatpush1.xpose.msra.mxu0 0.0
    %2473 = vmatprep.subr.mxu0 0.0
    %2474 = vmatpush1.xpose.msra.mxu0 0.0
    %2475 = vmatprep.subr.mxu0 0.0
    %2476 = vmatpush1.xpose.msra.mxu0 0.0
    %2477 = vmatprep.subr.mxu0 0.0
    %2478 = vmatpush1.xpose.msra.mxu0 0.0
    %2479 = vmatprep.subr.mxu0 0.0
    %2480 = vmatpush1.xpose.msra.mxu0 0.0
    %2481 = vmatprep.subr.mxu0 0.0
    %2482 = vmatpush1.xpose.msra.mxu0 0.0
    %2483 = vmatprep.subr.mxu0 0.0
    %2484 = vmatpush1.xpose.msra.mxu0 0.0
    %2485 = vmatprep.subr.mxu0 0.0
    %2486 = vmatpush1.xpose.msra.mxu0 %v2453
    %2487 = vmatprep.subr.mxu0 0.0
    %2488 = vmatpush2.xpose.msra.mxu0 0.0
    %2489 = vmatprep.subr.mxu0 0.0
    %2490 = vmatpush2.xpose.msra.mxu0 0.0
    %2491 = vmatprep.subr.mxu0 0.0
    %2492 = vmatpush2.xpose.msra.mxu0 0.0
    %2493 = vmatprep.subr.mxu0 0.0
    %2494 = vmatpush2.xpose.msra.mxu0 0.0
    %2495 = vmatprep.subr.mxu0 0.0
    %2496 = vmatpush2.xpose.msra.mxu0 0.0
    %2497 = vmatprep.subr.mxu0 0.0
    %2498 = vmatpush2.xpose.msra.mxu0 0.0
    %2499 = vmatprep.subr.mxu0 0.0
    %2500 = vmatpush2.xpose.msra.mxu0 0.0
    %2501 = vmatprep.subr.mxu0 0.0
    %2502 = vmatpush2.xpose.msra.mxu0 0.0
    %2503 = vmatprep.subr.mxu0 0.0
    %2504 = vmatpush2.xpose.msra.mxu0 0.0
    %2505 = vmatprep.subr.mxu0 0.0
    %2506 = vmatpush2.xpose.msra.mxu0 0.0
    %2507 = vmatprep.subr.mxu0 0.0
    %2508 = vmatpush2.xpose.msra.mxu0 0.0
    %2509 = vmatprep.subr.mxu0 0.0
    %2510 = vmatpush2.xpose.msra.mxu0 0.0
    %2511 = vmatprep.subr.mxu0 0.0
    %2512 = vmatpush2.xpose.msra.mxu0 0.0
    %2513 = vmatprep.subr.mxu0 0.0
    %2514 = vmatpush2.xpose.msra.mxu0 0.0
    %2515 = vmatprep.subr.mxu0 0.0
    %2516 = vmatpush2.xpose.msra.mxu0 0.0
    %2517 = vmatprep.subr.mxu0 0.0
    %2518 = vmatpush2.xpose.msra.mxu0 0.0
    %2519 = vmatprep.mubr.f32.mxu0 0.0
    %2520 = vmatmul.mubr.f32.gmra.mxu0 %v2450
    %v2521 = vpop.f32.mrf.mxu0
    %v2522 = vadd.f32 0.0, %v2521
    %v2523 = vpop.f32.mrf.mxu0
    %2524 = vdwg.mxu0
    %v2525 = vsel %vm832, %v2522, -inf
    %2526 = vmax.xlane.f32.xlu0 %v2525
    %v2527 = vpop.xlane.xlu0 %2526
    %v2528 = vsub.f32 %v2522, %v2527
    %v2529 = vmul.f32 %v2528, 1.442695
    %v2530 = vpow.pop %v2529
    %v2531 = vsel %vm832, %v2530, 0.0
    %2532 = vadd.xlane.f32.xlu0 %v2531
    %v2533 = vpop.xlane.xlu0 %2532
    %v2534 = vrcp.pop %v2533
    %v2535 = vmul.f32 %v2530, %v2534
    %v2537 = vsel %vm832, %v2535, 0
    %2539 = vmatprep.subr.mxu0 0.0
    %2540 = vmatpush1.msra.mxu0 0.0
    %2541 = vmatprep.subr.mxu0 0.0
    %2542 = vmatpush1.msra.mxu0 0.0
    %2543 = vmatprep.subr.mxu0 0.0
    %2544 = vmatpush1.msra.mxu0 0.0
    %2545 = vmatprep.subr.mxu0 0.0
    %2546 = vmatpush1.msra.mxu0 0.0
    %2547 = vmatprep.subr.mxu0 0.0
    %2548 = vmatpush1.msra.mxu0 0.0
    %2549 = vmatprep.subr.mxu0 0.0
    %2550 = vmatpush1.msra.mxu0 0.0
    %2551 = vmatprep.subr.mxu0 0.0
    %2552 = vmatpush1.msra.mxu0 0.0
    %2553 = vmatprep.subr.mxu0 0.0
    %2554 = vmatpush1.msra.mxu0 0.0
    %2555 = vmatprep.subr.mxu0 0.0
    %2556 = vmatpush1.msra.mxu0 0.0
    %2557 = vmatprep.subr.mxu0 0.0
    %2558 = vmatpush1.msra.mxu0 0.0
    %2559 = vmatprep.subr.mxu0 0.0
    %2560 = vmatpush1.msra.mxu0 0.0
    %2561 = vmatprep.subr.mxu0 0.0
    %2562 = vmatpush1.msra.mxu0 0.0
    %2563 = vmatprep.subr.mxu0 0.0
    %2564 = vmatpush1.msra.mxu0 0.0
    %2565 = vmatprep.subr.mxu0 0.0
    %2566 = vmatpush1.msra.mxu0 0.0
    %2567 = vmatprep.subr.mxu0 0.0
    %2568 = vmatpush1.msra.mxu0 0.0
    %2569 = vmatprep.subr.mxu0 0.0
    %2570 = vmatpush1.msra.mxu0 %v2446
    %2571 = vmatprep.subr.mxu0 0.0
    %2572 = vmatpush2.msra.mxu0 0.0
    %2573 = vmatprep.subr.mxu0 0.0
    %2574 = vmatpush2.msra.mxu0 0.0
    %2575 = vmatprep.subr.mxu0 0.0
    %2576 = vmatpush2.msra.mxu0 0.0
    %2577 = vmatprep.subr.mxu0 0.0
    %2578 = vmatpush2.msra.mxu0 0.0
    %2579 = vmatprep.subr.mxu0 0.0
    %2580 = vmatpush2.msra.mxu0 0.0
    %2581 = vmatprep.subr.mxu0 0.0
    %2582 = vmatpush2.msra.mxu0 0.0
    %2583 = vmatprep.subr.mxu0 0.0
    %2584 = vmatpush2.msra.mxu0 0.0
    %2585 = vmatprep.subr.mxu0 0.0
    %2586 = vmatpush2.msra.mxu0 0.0
    %2587 = vmatprep.subr.mxu0 0.0
    %2588 = vmatpush2.msra.mxu0 0.0
    %2589 = vmatprep.subr.mxu0 0.0
    %2590 = vmatpush2.msra.mxu0 0.0
    %2591 = vmatprep.subr.mxu0 0.0
    %2592 = vmatpush2.msra.mxu0 0.0
    %2593 = vmatprep.subr.mxu0 0.0
    %2594 = vmatpush2.msra.mxu0 0.0
    %2595 = vmatprep.subr.mxu0 0.0
    %2596 = vmatpush2.msra.mxu0 0.0
    %2597 = vmatprep.subr.mxu0 0.0
    %2598 = vmatpush2.msra.mxu0 0.0
    %2599 = vmatprep.subr.mxu0 0.0
    %2600 = vmatpush2.msra.mxu0 0.0
    %2601 = vmatprep.subr.mxu0 0.0
    %2602 = vmatpush2.msra.mxu0 0.0
    %2603 = vmatprep.mubr.f32.mxu0 0.0
    %2604 = vmatmul.mubr.f32.gmra.mxu0 %v2537
    %v2605 = vpop.f32.mrf.mxu0
    %v2606 = vadd.f32 %v329, %v2605
    %v2607 = vpop.f32.mrf.mxu0
    %2608 = vdwg.mxu0
    %v2609 = vsel %vm250, %v2606, 0.0
    %2610 = vadd.xlane.f32.xlu0 %v2609
    %v2611 = vpop.xlane.xlu0 %2610
    %v2612 = vmul.f32 %v2611, %v920
    %v2613 = vsub.f32 %v2606, %v2612
    %v2614 = vmul.f32 %v2613, %v2613
    %v2615 = vsel %vm250, %v2614, 0.0
    %2616 = vadd.xlane.f32.xlu0 %v2615
    %v2617 = vpop.xlane.xlu0 %2616
    %v2618 = vmul.f32 %v2617, %v920
    %v2619 = vadd.f32 %v2618, 1e-05
    %v2620 = vrsqrt.pop %v2619
    %v2621 = vmul.f32 %v2613, %v2620
    %v2622 = vmul.f32 %v2621, %v935
    %v2623 = vadd.f32 %v2622, %v941
    %v2625 = vsel %vm250, %v2623, 0
    %2627 = vmatprep.subr.mxu0 0.0
    %2628 = vmatpush1.msra.mxu0 0.0
    %2629 = vmatprep.subr.mxu0 0.0
    %2630 = vmatpush1.msra.mxu0 0.0
    %2631 = vmatprep.subr.mxu0 0.0
    %2632 = vmatpush1.msra.mxu0 0.0
    %2633 = vmatprep.subr.mxu0 0.0
    %2634 = vmatpush1.msra.mxu0 0.0
    %2635 = vmatprep.subr.mxu0 0.0
    %2636 = vmatpush1.msra.mxu0 0.0
    %2637 = vmatprep.subr.mxu0 0.0
    %2638 = vmatpush1.msra.mxu0 0.0
    %2639 = vmatprep.subr.mxu0 0.0
    %2640 = vmatpush1.msra.mxu0 0.0
    %2641 = vmatprep.subr.mxu0 0.0
    %2642 = vmatpush1.msra.mxu0 0.0
    %2643 = vmatprep.subr.mxu0 0.0
    %2644 = vmatpush1.msra.mxu0 0.0
    %2645 = vmatprep.subr.mxu0 0.0
    %2646 = vmatpush1.msra.mxu0 0.0
    %2647 = vmatprep.subr.mxu0 0.0
    %2648 = vmatpush1.msra.mxu0 0.0
    %2649 = vmatprep.subr.mxu0 0.0
    %2650 = vmatpush1.msra.mxu0 0.0
    %2651 = vmatprep.subr.mxu0 0.0
    %2652 = vmatpush1.msra.mxu0 %v947
    %2653 = vmatprep.subr.mxu0 0.0
    %2654 = vmatpush1.msra.mxu0 %v946
    %2655 = vmatprep.subr.mxu0 0.0
    %2656 = vmatpush1.msra.mxu0 %v945
    %2657 = vmatprep.subr.mxu0 0.0
    %2658 = vmatpush1.msra.mxu0 %v944
    %2659 = vmatprep.subr.mxu0 0.0
    %2660 = vmatpush2.msra.mxu0 0.0
    %2661 = vmatprep.subr.mxu0 0.0
    %2662 = vmatpush2.msra.mxu0 0.0
    %2663 = vmatprep.subr.mxu0 0.0
    %2664 = vmatpush2.msra.mxu0 0.0
    %2665 = vmatprep.subr.mxu0 0.0
    %2666 = vmatpush2.msra.mxu0 0.0
    %2667 = vmatprep.subr.mxu0 0.0
    %2668 = vmatpush2.msra.mxu0 0.0
    %2669 = vmatprep.subr.mxu0 0.0
    %2670 = vmatpush2.msra.mxu0 0.0
    %2671 = vmatprep.subr.mxu0 0.0
    %2672 = vmatpush2.msra.mxu0 0.0
    %2673 = vmatprep.subr.mxu0 0.0
    %2674 = vmatpush2.msra.mxu0 0.0
    %2675 = vmatprep.subr.mxu0 0.0
    %2676 = vmatpush2.msra.mxu0 0.0
    %2677 = vmatprep.subr.mxu0 0.0
    %2678 = vmatpush2.msra.mxu0 0.0
    %2679 = vmatprep.subr.mxu0 0.0
    %2680 = vmatpush2.msra.mxu0 0.0
    %2681 = vmatprep.subr.mxu0 0.0
    %2682 = vmatpush2.msra.mxu0 0.0
    %2683 = vmatprep.subr.mxu0 0.0
    %2684 = vmatpush2.msra.mxu0 0.0
    %2685 = vmatprep.subr.mxu0 0.0
    %2686 = vmatpush2.msra.mxu0 0.0
    %2687 = vmatprep.subr.mxu0 0.0
    %2688 = vmatpush2.msra.mxu0 0.0
    %2689 = vmatprep.subr.mxu0 0.0
    %2690 = vmatpush2.msra.mxu0 0.0
    %2691 = vmatprep.mubr.f32.mxu0 0.0
    %2692 = vmatmul.mubr.f32.gmra.mxu0 %v2625
    %v2693 = vpop.f32.mrf.mxu0
    %v2694 = vadd.f32 %v953, %v2693
    %v2695 = vpop.f32.mrf.mxu0
    %2696 = vdwg.mxu0
    %2697 = vmatprep.subr.mxu0 0.0
    %2698 = vmatpush1.msra.mxu0 0.0
    %2699 = vmatprep.subr.mxu0 0.0
    %2700 = vmatpush1.msra.mxu0 0.0
    %2701 = vmatprep.subr.mxu0 0.0
    %2702 = vmatpush1.msra.mxu0 0.0
    %2703 = vmatprep.subr.mxu0 0.0
    %2704 = vmatpush1.msra.mxu0 0.0
    %2705 = vmatprep.subr.mxu0 0.0
    %2706 = vmatpush1.msra.mxu0 0.0
    %2707 = vmatprep.subr.mxu0 0.0
    %2708 = vmatpush1.msra.mxu0 0.0
    %2709 = vmatprep.subr.mxu0 0.0
    %2710 = vmatpush1.msra.mxu0 0.0
    %2711 = vmatprep.subr.mxu0 0.0
    %2712 = vmatpush1.msra.mxu0 0.0
    %2713 = vmatprep.subr.mxu0 0.0
    %2714 = vmatpush1.msra.mxu0 0.0
    %2715 = vmatprep.subr.mxu0 0.0
    %2716 = vmatpush1.msra.mxu0 0.0
    %2717 = vmatprep.subr.mxu0 0.0
    %2718 = vmatpush1.msra.mxu0 0.0
    %2719 = vmatprep.subr.mxu0 0.0
    %2720 = vmatpush1.msra.mxu0 0.0
    %2721 = vmatprep.subr.mxu0 0.0
    %2722 = vmatpush1.msra.mxu0 %v1031
    %2723 = vmatprep.subr.mxu0 0.0
    %2724 = vmatpush1.msra.mxu0 %v1030
    %2725 = vmatprep.subr.mxu0 0.0
    %2726 = vmatpush1.msra.mxu0 %v1029
    %2727 = vmatprep.subr.mxu0 0.0
    %2728 = vmatpush1.msra.mxu0 %v1028
    %2729 = vmatprep.subr.mxu0 0.0
    %2730 = vmatpush2.msra.mxu0 0.0
    %2731 = vmatprep.subr.mxu0 0.0
    %2732 = vmatpush2.msra.mxu0 0.0
    %2733 = vmatprep.subr.mxu0 0.0
    %2734 = vmatpush2.msra.mxu0 0.0
    %2735 = vmatprep.subr.mxu0 0.0
    %2736 = vmatpush2.msra.mxu0 0.0
    %2737 = vmatprep.subr.mxu0 0.0
    %2738 = vmatpush2.msra.mxu0 0.0
    %2739 = vmatprep.subr.mxu0 0.0
    %2740 = vmatpush2.msra.mxu0 0.0
    %2741 = vmatprep.subr.mxu0 0.0
    %2742 = vmatpush2.msra.mxu0 0.0
    %2743 = vmatprep.subr.mxu0 0.0
    %2744 = vmatpush2.msra.mxu0 0.0
    %2745 = vmatprep.subr.mxu0 0.0
    %2746 = vmatpush2.msra.mxu0 0.0
    %2747 = vmatprep.subr.mxu0 0.0
    %2748 = vmatpush2.msra.mxu0 0.0
    %2749 = vmatprep.subr.mxu0 0.0
    %2750 = vmatpush2.msra.mxu0 0.0
    %2751 = vmatprep.subr.mxu0 0.0
    %2752 = vmatpush2.msra.mxu0 0.0
    %2753 = vmatprep.subr.mxu0 0.0
    %2754 = vmatpush2.msra.mxu0 0.0
    %2755 = vmatprep.subr.mxu0 0.0
    %2756 = vmatpush2.msra.mxu0 0.0
    %2757 = vmatprep.subr.mxu0 0.0
    %2758 = vmatpush2.msra.mxu0 0.0
    %2759 = vmatprep.subr.mxu0 0.0
    %2760 = vmatpush2.msra.mxu0 0.0
    %2761 = vmatprep.mubr.f32.mxu0 0.0
    %2762 = vmatmul.mubr.f32.gmra.mxu0 %v2625
    %v2763 = vpop.f32.mrf.mxu0
    %v2764 = vadd.f32 %v1036, %v2763
    %v2765 = vpop.f32.mrf.mxu0
    %2766 = vdwg.mxu0
    %2767 = vmatprep.subr.mxu0 0.0
    %2768 = vmatpush1.msra.mxu0 0.0
    %2769 = vmatprep.subr.mxu0 0.0
    %2770 = vmatpush1.msra.mxu0 0.0
    %2771 = vmatprep.subr.mxu0 0.0
    %2772 = vmatpush1.msra.mxu0 0.0
    %2773 = vmatprep.subr.mxu0 0.0
    %2774 = vmatpush1.msra.mxu0 0.0
    %2775 = vmatprep.subr.mxu0 0.0
    %2776 = vmatpush1.msra.mxu0 0.0
    %2777 = vmatprep.subr.mxu0 0.0
    %2778 = vmatpush1.msra.mxu0 0.0
    %2779 = vmatprep.subr.mxu0 0.0
    %2780 = vmatpush1.msra.mxu0 0.0
    %2781 = vmatprep.subr.mxu0 0.0
    %2782 = vmatpush1.msra.mxu0 0.0
    %2783 = vmatprep.subr.mxu0 0.0
    %2784 = vmatpush1.msra.mxu0 0.0
    %2785 = vmatprep.subr.mxu0 0.0
    %2786 = vmatpush1.msra.mxu0 0.0
    %2787 = vmatprep.subr.mxu0 0.0
    %2788 = vmatpush1.msra.mxu0 0.0
    %2789 = vmatprep.subr.mxu0 0.0
    %2790 = vmatpush1.msra.mxu0 0.0
    %2791 = vmatprep.subr.mxu0 0.0
    %2792 = vmatpush1.msra.mxu0 %v1111
    %2793 = vmatprep.subr.mxu0 0.0
    %2794 = vmatpush1.msra.mxu0 %v1110
    %2795 = vmatprep.subr.mxu0 0.0
    %2796 = vmatpush1.msra.mxu0 %v1109
    %2797 = vmatprep.subr.mxu0 0.0
    %2798 = vmatpush1.msra.mxu0 %v1108
    %2799 = vmatprep.subr.mxu0 0.0
    %2800 = vmatpush2.msra.mxu0 0.0
    %2801 = vmatprep.subr.mxu0 0.0
    %2802 = vmatpush2.msra.mxu0 0.0
    %2803 = vmatprep.subr.mxu0 0.0
    %2804 = vmatpush2.msra.mxu0 0.0
    %2805 = vmatprep.subr.mxu0 0.0
    %2806 = vmatpush2.msra.mxu0 0.0
    %2807 = vmatprep.subr.mxu0 0.0
    %2808 = vmatpush2.msra.mxu0 0.0
    %2809 = vmatprep.subr.mxu0 0.0
    %2810 = vmatpush2.msra.mxu0 0.0
    %2811 = vmatprep.subr.mxu0 0.0
    %2812 = vmatpush2.msra.mxu0 0.0
    %2813 = vmatprep.subr.mxu0 0.0
    %2814 = vmatpush2.msra.mxu0 0.0
    %2815 = vmatprep.subr.mxu0 0.0
    %2816 = vmatpush2.msra.mxu0 0.0
    %2817 = vmatprep.subr.mxu0 0.0
    %2818 = vmatpush2.msra.mxu0 0.0
    %2819 = vmatprep.subr.mxu0 0.0
    %2820 = vmatpush2.msra.mxu0 0.0
    %2821 = vmatprep.subr.mxu0 0.0
    %2822 = vmatpush2.msra.mxu0 0.0
    %2823 = vmatprep.subr.mxu0 0.0
    %2824 = vmatpush2.msra.mxu0 0.0
    %2825 = vmatprep.subr.mxu0 0.0
    %2826 = vmatpush2.msra.mxu0 0.0
    %2827 = vmatprep.subr.mxu0 0.0
    %2828 = vmatpush2.msra.mxu0 0.0
    %2829 = vmatprep.subr.mxu0 0.0
    %2830 = vmatpush2.msra.mxu0 0.0
    %2831 = vmatprep.mubr.f32.mxu0 0.0
    %2832 = vmatmul.mubr.f32.gmra.mxu0 %v2625
    %v2833 = vpop.f32.mrf.mxu0
    %v2834 = vadd.f32 %v1116, %v2833
    %v2835 = vpop.f32.mrf.mxu0
    %2836 = vdwg.mxu0
    %v2838 = vsel %vm250, %v2694, 0
    %v2841 = vsel %vm250, %v2764, 0
    %2843 = vmatprep.subr.mxu0 0.0
    %2844 = vmatpush1.xpose.msra.mxu0 0.0
    %2845 = vmatprep.subr.mxu0 0.0
    %2846 = vmatpush1.xpose.msra.mxu0 0.0
    %2847 = vmatprep.subr.mxu0 0.0
    %2848 = vmatpush1.xpose.msra.mxu0 0.0
    %2849 = vmatprep.subr.mxu0 0.0
    %2850 = vmatpush1.xpose.msra.mxu0 0.0
    %2851 = vmatprep.subr.mxu0 0.0
    %2852 = vmatpush1.xpose.msra.mxu0 0.0
    %2853 = vmatprep.subr.mxu0 0.0
    %2854 = vmatpush1.xpose.msra.mxu0 0.0
    %2855 = vmatprep.subr.mxu0 0.0
    %2856 = vmatpush1.xpose.msra.mxu0 0.0
    %2857 = vmatprep.subr.mxu0 0.0
    %2858 = vmatpush1.xpose.msra.mxu0 0.0
    %2859 = vmatprep.subr.mxu0 0.0
    %2860 = vmatpush1.xpose.msra.mxu0 0.0
    %2861 = vmatprep.subr.mxu0 0.0
    %2862 = vmatpush1.xpose.msra.mxu0 0.0
    %2863 = vmatprep.subr.mxu0 0.0
    %2864 = vmatpush1.xpose.msra.mxu0 0.0
    %2865 = vmatprep.subr.mxu0 0.0
    %2866 = vmatpush1.xpose.msra.mxu0 0.0
    %2867 = vmatprep.subr.mxu0 0.0
    %2868 = vmatpush1.xpose.msra.mxu0 0.0
    %2869 = vmatprep.subr.mxu0 0.0
    %2870 = vmatpush1.xpose.msra.mxu0 0.0
    %2871 = vmatprep.subr.mxu0 0.0
    %2872 = vmatpush1.xpose.msra.mxu0 0.0
    %2873 = vmatprep.subr.mxu0 0.0
    %2874 = vmatpush1.xpose.msra.mxu0 %v2841
    %2875 = vmatprep.subr.mxu0 0.0
    %2876 = vmatpush2.xpose.msra.mxu0 0.0
    %2877 = vmatprep.subr.mxu0 0.0
    %2878 = vmatpush2.xpose.msra.mxu0 0.0
    %2879 = vmatprep.subr.mxu0 0.0
    %2880 = vmatpush2.xpose.msra.mxu0 0.0
    %2881 = vmatprep.subr.mxu0 0.0
    %2882 = vmatpush2.xpose.msra.mxu0 0.0
    %2883 = vmatprep.subr.mxu0 0.0
    %2884 = vmatpush2.xpose.msra.mxu0 0.0
    %2885 = vmatprep.subr.mxu0 0.0
    %2886 = vmatpush2.xpose.msra.mxu0 0.0
    %2887 = vmatprep.subr.mxu0 0.0
    %2888 = vmatpush2.xpose.msra.mxu0 0.0
    %2889 = vmatprep.subr.mxu0 0.0
    %2890 = vmatpush2.xpose.msra.mxu0 0.0
    %2891 = vmatprep.subr.mxu0 0.0
    %2892 = vmatpush2.xpose.msra.mxu0 0.0
    %2893 = vmatprep.subr.mxu0 0.0
    %2894 = vmatpush2.xpose.msra.mxu0 0.0
    %2895 = vmatprep.subr.mxu0 0.0
    %2896 = vmatpush2.xpose.msra.mxu0 0.0
    %2897 = vmatprep.subr.mxu0 0.0
    %2898 = vmatpush2.xpose.msra.mxu0 0.0
    %2899 = vmatprep.subr.mxu0 0.0
    %2900 = vmatpush2.xpose.msra.mxu0 0.0
    %2901 = vmatprep.subr.mxu0 0.0
    %2902 = vmatpush2.xpose.msra.mxu0 0.0
    %2903 = vmatprep.subr.mxu0 0.0
    %2904 = vmatpush2.xpose.msra.mxu0 0.0
    %2905 = vmatprep.subr.mxu0 0.0
    %2906 = vmatpush2.xpose.msra.mxu0 0.0
    %2907 = vmatprep.mubr.f32.mxu0 0.0
    %2908 = vmatmul.mubr.f32.gmra.mxu0 %v2838
    %v2909 = vpop.f32.mrf.mxu0
    %v2910 = vadd.f32 0.0, %v2909
    %v2911 = vpop.f32.mrf.mxu0
    %2912 = vdwg.mxu0
    %v2913 = vsel %vm832, %v2910, -inf
    %2914 = vmax.xlane.f32.xlu0 %v2913
    %v2915 = vpop.xlane.xlu0 %2914
    %v2916 = vsub.f32 %v2910, %v2915
    %v2917 = vmul.f32 %v2916, 1.442695
    %v2918 = vpow.pop %v2917
    %v2919 = vsel %vm832, %v2918, 0.0
    %2920 = vadd.xlane.f32.xlu0 %v2919
    %v2921 = vpop.xlane.xlu0 %2920
    %v2922 = vrcp.pop %v2921
    %v2923 = vmul.f32 %v2918, %v2922
    %v2925 = vsel %vm832, %v2923, 0
    %2927 = vmatprep.subr.mxu0 0.0
    %2928 = vmatpush1.msra.mxu0 0.0
    %2929 = vmatprep.subr.mxu0 0.0
    %2930 = vmatpush1.msra.mxu0 0.0
    %2931 = vmatprep.subr.mxu0 0.0
    %2932 = vmatpush1.msra.mxu0 0.0
    %2933 = vmatprep.subr.mxu0 0.0
    %2934 = vmatpush1.msra.mxu0 0.0
    %2935 = vmatprep.subr.mxu0 0.0
    %2936 = vmatpush1.msra.mxu0 0.0
    %2937 = vmatprep.subr.mxu0 0.0
    %2938 = vmatpush1.msra.mxu0 0.0
    %2939 = vmatprep.subr.mxu0 0.0
    %2940 = vmatpush1.msra.mxu0 0.0
    %2941 = vmatprep.subr.mxu0 0.0
    %2942 = vmatpush1.msra.mxu0 0.0
    %2943 = vmatprep.subr.mxu0 0.0
    %2944 = vmatpush1.msra.mxu0 0.0
    %2945 = vmatprep.subr.mxu0 0.0
    %2946 = vmatpush1.msra.mxu0 0.0
    %2947 = vmatprep.subr.mxu0 0.0
    %2948 = vmatpush1.msra.mxu0 0.0
    %2949 = vmatprep.subr.mxu0 0.0
    %2950 = vmatpush1.msra.mxu0 0.0
    %2951 = vmatprep.subr.mxu0 0.0
    %2952 = vmatpush1.msra.mxu0 0.0
    %2953 = vmatprep.subr.mxu0 0.0
    %2954 = vmatpush1.msra.mxu0 0.0
    %2955 = vmatprep.subr.mxu0 0.0
    %2956 = vmatpush1.msra.mxu0 0.0
    %2957 = vmatprep.subr.mxu0 0.0
    %2958 = vmatpush1.msra.mxu0 %v2834
    %2959 = vmatprep.subr.mxu0 0.0
    %2960 = vmatpush2.msra.mxu0 0.0
    %2961 = vmatprep.subr.mxu0 0.0
    %2962 = vmatpush2.msra.mxu0 0.0
    %2963 = vmatprep.subr.mxu0 0.0
    %2964 = vmatpush2.msra.mxu0 0.0
    %2965 = vmatprep.subr.mxu0 0.0
    %2966 = vmatpush2.msra.mxu0 0.0
    %2967 = vmatprep.subr.mxu0 0.0
    %2968 = vmatpush2.msra.mxu0 0.0
    %2969 = vmatprep.subr.mxu0 0.0
    %2970 = vmatpush2.msra.mxu0 0.0
    %2971 = vmatprep.subr.mxu0 0.0
    %2972 = vmatpush2.msra.mxu0 0.0
    %2973 = vmatprep.subr.mxu0 0.0
    %2974 = vmatpush2.msra.mxu0 0.0
    %2975 = vmatprep.subr.mxu0 0.0
    %2976 = vmatpush2.msra.mxu0 0.0
    %2977 = vmatprep.subr.mxu0 0.0
    %2978 = vmatpush2.msra.mxu0 0.0
    %2979 = vmatprep.subr.mxu0 0.0
    %2980 = vmatpush2.msra.mxu0 0.0
    %2981 = vmatprep.subr.mxu0 0.0
    %2982 = vmatpush2.msra.mxu0 0.0
    %2983 = vmatprep.subr.mxu0 0.0
    %2984 = vmatpush2.msra.mxu0 0.0
    %2985 = vmatprep.subr.mxu0 0.0
    %2986 = vmatpush2.msra.mxu0 0.0
    %2987 = vmatprep.subr.mxu0 0.0
    %2988 = vmatpush2.msra.mxu0 0.0
    %2989 = vmatprep.subr.mxu0 0.0
    %2990 = vmatpush2.msra.mxu0 0.0
    %2991 = vmatprep.mubr.f32.mxu0 0.0
    %2992 = vmatmul.mubr.f32.gmra.mxu0 %v2925
    %v2993 = vpop.f32.mrf.mxu0
    %v2994 = vadd.f32 %v2623, %v2993
    %v2995 = vpop.f32.mrf.mxu0
    %2996 = vdwg.mxu0
    %v2997 = vsel %vm250, %v2994, 0.0
    %2998 = vadd.xlane.f32.xlu0 %v2997
    %v2999 = vpop.xlane.xlu0 %2998
    %v3000 = vmul.f32 %v2999, %v920
    %v3001 = vsub.f32 %v2994, %v3000
    %v3002 = vmul.f32 %v3001, %v3001
    %v3003 = vsel %vm250, %v3002, 0.0
    %3004 = vadd.xlane.f32.xlu0 %v3003
    %v3005 = vpop.xlane.xlu0 %3004
    %v3006 = vmul.f32 %v3005, %v920
    %v3007 = vadd.f32 %v3006, 1e-05
    %v3008 = vrsqrt.pop %v3007
    %v3009 = vmul.f32 %v3001, %v3008
    %v3010 = vmul.f32 %v3009, %v1364
    %v3011 = vadd.f32 %v3010, %v1370
    %v3013 = vsel %vm250, %v511, 0
    %3015 = vmatprep.subr.mxu0 0.0
    %3016 = vmatpush1.msra.mxu0 0.0
    %3017 = vmatprep.subr.mxu0 0.0
    %3018 = vmatpush1.msra.mxu0 0.0
    %3019 = vmatprep.subr.mxu0 0.0
    %3020 = vmatpush1.msra.mxu0 0.0
    %3021 = vmatprep.subr.mxu0 0.0
    %3022 = vmatpush1.msra.mxu0 0.0
    %3023 = vmatprep.subr.mxu0 0.0
    %3024 = vmatpush1.msra.mxu0 0.0
    %3025 = vmatprep.subr.mxu0 0.0
    %3026 = vmatpush1.msra.mxu0 0.0
    %3027 = vmatprep.subr.mxu0 0.0
    %3028 = vmatpush1.msra.mxu0 0.0
    %3029 = vmatprep.subr.mxu0 0.0
    %3030 = vmatpush1.msra.mxu0 0.0
    %3031 = vmatprep.subr.mxu0 0.0
    %3032 = vmatpush1.msra.mxu0 0.0
    %3033 = vmatprep.subr.mxu0 0.0
    %3034 = vmatpush1.msra.mxu0 0.0
    %3035 = vmatprep.subr.mxu0 0.0
    %3036 = vmatpush1.msra.mxu0 0.0
    %3037 = vmatprep.subr.mxu0 0.0
    %3038 = vmatpush1.msra.mxu0 0.0
    %3039 = vmatprep.subr.mxu0 0.0
    %3040 = vmatpush1.msra.mxu0 %v1376
    %3041 = vmatprep.subr.mxu0 0.0
    %3042 = vmatpush1.msra.mxu0 %v1375
    %3043 = vmatprep.subr.mxu0 0.0
    %3044 = vmatpush1.msra.mxu0 %v1374
    %3045 = vmatprep.subr.mxu0 0.0
    %3046 = vmatpush1.msra.mxu0 %v1373
    %3047 = vmatprep.subr.mxu0 0.0
    %3048 = vmatpush2.msra.mxu0 0.0
    %3049 = vmatprep.subr.mxu0 0.0
    %3050 = vmatpush2.msra.mxu0 0.0
    %3051 = vmatprep.subr.mxu0 0.0
    %3052 = vmatpush2.msra.mxu0 0.0
    %3053 = vmatprep.subr.mxu0 0.0
    %3054 = vmatpush2.msra.mxu0 0.0
    %3055 = vmatprep.subr.mxu0 0.0
    %3056 = vmatpush2.msra.mxu0 0.0
    %3057 = vmatprep.subr.mxu0 0.0
    %3058 = vmatpush2.msra.mxu0 0.0
    %3059 = vmatprep.subr.mxu0 0.0
    %3060 = vmatpush2.msra.mxu0 0.0
    %3061 = vmatprep.subr.mxu0 0.0
    %3062 = vmatpush2.msra.mxu0 0.0
    %3063 = vmatprep.subr.mxu0 0.0
    %3064 = vmatpush2.msra.mxu0 0.0
    %3065 = vmatprep.subr.mxu0 0.0
    %3066 = vmatpush2.msra.mxu0 0.0
    %3067 = vmatprep.subr.mxu0 0.0
    %3068 = vmatpush2.msra.mxu0 0.0
    %3069 = vmatprep.subr.mxu0 0.0
    %3070 = vmatpush2.msra.mxu0 0.0
    %3071 = vmatprep.subr.mxu0 0.0
    %3072 = vmatpush2.msra.mxu0 0.0
    %3073 = vmatprep.subr.mxu0 0.0
    %3074 = vmatpush2.msra.mxu0 0.0
    %3075 = vmatprep.subr.mxu0 0.0
    %3076 = vmatpush2.msra.mxu0 0.0
    %3077 = vmatprep.subr.mxu0 0.0
    %3078 = vmatpush2.msra.mxu0 0.0
    %3079 = vmatprep.mubr.f32.mxu0 0.0
    %3080 = vmatmul.mubr.f32.gmra.mxu0 %v3013
    %v3081 = vpop.f32.mrf.mxu0
    %v3082 = vadd.f32 %v1382, %v3081
    %v3083 = vpop.f32.mrf.mxu0
    %3084 = vdwg.mxu0
    %v3086 = vsel %vm250, %v417, 0
    %3088 = vmatprep.subr.mxu0 0.0
    %3089 = vmatpush1.msra.mxu0 0.0
    %3090 = vmatprep.subr.mxu0 0.0
    %3091 = vmatpush1.msra.mxu0 0.0
    %3092 = vmatprep.subr.mxu0 0.0
    %3093 = vmatpush1.msra.mxu0 0.0
    %3094 = vmatprep.subr.mxu0 0.0
    %3095 = vmatpush1.msra.mxu0 0.0
    %3096 = vmatprep.subr.mxu0 0.0
    %3097 = vmatpush1.msra.mxu0 0.0
    %3098 = vmatprep.subr.mxu0 0.0
    %3099 = vmatpush1.msra.mxu0 0.0
    %3100 = vmatprep.subr.mxu0 0.0
    %3101 = vmatpush1.msra.mxu0 0.0
    %3102 = vmatprep.subr.mxu0 0.0
    %3103 = vmatpush1.msra.mxu0 0.0
    %3104 = vmatprep.subr.mxu0 0.0
    %3105 = vmatpush1.msra.mxu0 0.0
    %3106 = vmatprep.subr.mxu0 0.0
    %3107 = vmatpush1.msra.mxu0 0.0
    %3108 = vmatprep.subr.mxu0 0.0
    %3109 = vmatpush1.msra.mxu0 0.0
    %3110 = vmatprep.subr.mxu0 0.0
    %3111 = vmatpush1.msra.mxu0 0.0
    %3112 = vmatprep.subr.mxu0 0.0
    %3113 = vmatpush1.msra.mxu0 %v1460
    %3114 = vmatprep.subr.mxu0 0.0
    %3115 = vmatpush1.msra.mxu0 %v1459
    %3116 = vmatprep.subr.mxu0 0.0
    %3117 = vmatpush1.msra.mxu0 %v1458
    %3118 = vmatprep.subr.mxu0 0.0
    %3119 = vmatpush1.msra.mxu0 %v1457
    %3120 = vmatprep.subr.mxu0 0.0
    %3121 = vmatpush2.msra.mxu0 0.0
    %3122 = vmatprep.subr.mxu0 0.0
    %3123 = vmatpush2.msra.mxu0 0.0
    %3124 = vmatprep.subr.mxu0 0.0
    %3125 = vmatpush2.msra.mxu0 0.0
    %3126 = vmatprep.subr.mxu0 0.0
    %3127 = vmatpush2.msra.mxu0 0.0
    %3128 = vmatprep.subr.mxu0 0.0
    %3129 = vmatpush2.msra.mxu0 0.0
    %3130 = vmatprep.subr.mxu0 0.0
    %3131 = vmatpush2.msra.mxu0 0.0
    %3132 = vmatprep.subr.mxu0 0.0
    %3133 = vmatpush2.msra.mxu0 0.0
    %3134 = vmatprep.subr.mxu0 0.0
    %3135 = vmatpush2.msra.mxu0 0.0
    %3136 = vmatprep.subr.mxu0 0.0
    %3137 = vmatpush2.msra.mxu0 0.0
    %3138 = vmatprep.subr.mxu0 0.0
    %3139 = vmatpush2.msra.mxu0 0.0
    %3140 = vmatprep.subr.mxu0 0.0
    %3141 = vmatpush2.msra.mxu0 0.0
    %3142 = vmatprep.subr.mxu0 0.0
    %3143 = vmatpush2.msra.mxu0 0.0
    %3144 = vmatprep.subr.mxu0 0.0
    %3145 = vmatpush2.msra.mxu0 0.0
    %3146 = vmatprep.subr.mxu0 0.0
    %3147 = vmatpush2.msra.mxu0 0.0
    %3148 = vmatprep.subr.mxu0 0.0
    %3149 = vmatpush2.msra.mxu0 0.0
    %3150 = vmatprep.subr.mxu0 0.0
    %3151 = vmatpush2.msra.mxu0 0.0
    %3152 = vmatprep.mubr.f32.mxu0 0.0
    %3153 = vmatmul.mubr.f32.gmra.mxu0 %v3086
    %v3154 = vpop.f32.mrf.mxu0
    %v3155 = vadd.f32 %v1465, %v3154
    %v3156 = vpop.f32.mrf.mxu0
    %3157 = vdwg.mxu0
    %v3159 = vsel %vm250, %v3011, 0
    %3161 = vmatprep.subr.mxu0 0.0
    %3162 = vmatpush1.msra.mxu0 0.0
    %3163 = vmatprep.subr.mxu0 0.0
    %3164 = vmatpush1.msra.mxu0 0.0
    %3165 = vmatprep.subr.mxu0 0.0
    %3166 = vmatpush1.msra.mxu0 0.0
    %3167 = vmatprep.subr.mxu0 0.0
    %3168 = vmatpush1.msra.mxu0 0.0
    %3169 = vmatprep.subr.mxu0 0.0
    %3170 = vmatpush1.msra.mxu0 0.0
    %3171 = vmatprep.subr.mxu0 0.0
    %3172 = vmatpush1.msra.mxu0 0.0
    %3173 = vmatprep.subr.mxu0 0.0
    %3174 = vmatpush1.msra.mxu0 0.0
    %3175 = vmatprep.subr.mxu0 0.0
    %3176 = vmatpush1.msra.mxu0 0.0
    %3177 = vmatprep.subr.mxu0 0.0
    %3178 = vmatpush1.msra.mxu0 0.0
    %3179 = vmatprep.subr.mxu0 0.0
    %3180 = vmatpush1.msra.mxu0 0.0
    %3181 = vmatprep.subr.mxu0 0.0
    %3182 = vmatpush1.msra.mxu0 0.0
    %3183 = vmatprep.subr.mxu0 0.0
    %3184 = vmatpush1.msra.mxu0 0.0
    %3185 = vmatprep.subr.mxu0 0.0
    %3186 = vmatpush1.msra.mxu0 %v1543
    %3187 = vmatprep.subr.mxu0 0.0
    %3188 = vmatpush1.msra.mxu0 %v1542
    %3189 = vmatprep.subr.mxu0 0.0
    %3190 = vmatpush1.msra.mxu0 %v1541
    %3191 = vmatprep.subr.mxu0 0.0
    %3192 = vmatpush1.msra.mxu0 %v1540
    %3193 = vmatprep.subr.mxu0 0.0
    %3194 = vmatpush2.msra.mxu0 0.0
    %3195 = vmatprep.subr.mxu0 0.0
    %3196 = vmatpush2.msra.mxu0 0.0
    %3197 = vmatprep.subr.mxu0 0.0
    %3198 = vmatpush2.msra.mxu0 0.0
    %3199 = vmatprep.subr.mxu0 0.0
    %3200 = vmatpush2.msra.mxu0 0.0
    %3201 = vmatprep.subr.mxu0 0.0
    %3202 = vmatpush2.msra.mxu0 0.0
    %3203 = vmatprep.subr.mxu0 0.0
    %3204 = vmatpush2.msra.mxu0 0.0
    %3205 = vmatprep.subr.mxu0 0.0
    %3206 = vmatpush2.msra.mxu0 0.0
    %3207 = vmatprep.subr.mxu0 0.0
    %3208 = vmatpush2.msra.mxu0 0.0
    %3209 = vmatprep.subr.mxu0 0.0
    %3210 = vmatpush2.msra.mxu0 0.0
    %3211 = vmatprep.subr.mxu0 0.0
    %3212 = vmatpush2.msra.mxu0 0.0
    %3213 = vmatprep.subr.mxu0 0.0
    %3214 = vmatpush2.msra.mxu0 0.0
    %3215 = vmatprep.subr.mxu0 0.0
    %3216 = vmatpush2.msra.mxu0 0.0
    %3217 = vmatprep.subr.mxu0 0.0
    %3218 = vmatpush2.msra.mxu0 0.0
    %3219 = vmatprep.subr.mxu0 0.0
    %3220 = vmatpush2.msra.mxu0 0.0
    %3221 = vmatprep.subr.mxu0 0.0
    %3222 = vmatpush2.msra.mxu0 0.0
    %3223 = vmatprep.subr.mxu0 0.0
    %3224 = vmatpush2.msra.mxu0 0.0
    %3225 = vmatprep.mubr.f32.mxu0 0.0
    %3226 = vmatmul.mubr.f32.gmra.mxu0 %v3159
    %v3227 = vpop.f32.mrf.mxu0
    %v3228 = vadd.f32 %v1548, %v3227
    %v3229 = vpop.f32.mrf.mxu0
    %3230 = vdwg.mxu0
    %v3232 = vsel %vm250, %v3082, 0
    %v3235 = vsel %vm250, %v3155, 0
    %3237 = vmatprep.subr.mxu0 0.0
    %3238 = vmatpush1.xpose.msra.mxu0 0.0
    %3239 = vmatprep.subr.mxu0 0.0
    %3240 = vmatpush1.xpose.msra.mxu0 0.0
    %3241 = vmatprep.subr.mxu0 0.0
    %3242 = vmatpush1.xpose.msra.mxu0 0.0
    %3243 = vmatprep.subr.mxu0 0.0
    %3244 = vmatpush1.xpose.msra.mxu0 0.0
    %3245 = vmatprep.subr.mxu0 0.0
    %3246 = vmatpush1.xpose.msra.mxu0 0.0
    %3247 = vmatprep.subr.mxu0 0.0
    %3248 = vmatpush1.xpose.msra.mxu0 0.0
    %3249 = vmatprep.subr.mxu0 0.0
    %3250 = vmatpush1.xpose.msra.mxu0 0.0
    %3251 = vmatprep.subr.mxu0 0.0
    %3252 = vmatpush1.xpose.msra.mxu0 0.0
    %3253 = vmatprep.subr.mxu0 0.0
    %3254 = vmatpush1.xpose.msra.mxu0 0.0
    %3255 = vmatprep.subr.mxu0 0.0
    %3256 = vmatpush1.xpose.msra.mxu0 0.0
    %3257 = vmatprep.subr.mxu0 0.0
    %3258 = vmatpush1.xpose.msra.mxu0 0.0
    %3259 = vmatprep.subr.mxu0 0.0
    %3260 = vmatpush1.xpose.msra.mxu0 0.0
    %3261 = vmatprep.subr.mxu0 0.0
    %3262 = vmatpush1.xpose.msra.mxu0 0.0
    %3263 = vmatprep.subr.mxu0 0.0
    %3264 = vmatpush1.xpose.msra.mxu0 0.0
    %3265 = vmatprep.subr.mxu0 0.0
    %3266 = vmatpush1.xpose.msra.mxu0 0.0
    %3267 = vmatprep.subr.mxu0 0.0
    %3268 = vmatpush1.xpose.msra.mxu0 %v3235
    %3269 = vmatprep.subr.mxu0 0.0
    %3270 = vmatpush2.xpose.msra.mxu0 0.0
    %3271 = vmatprep.subr.mxu0 0.0
    %3272 = vmatpush2.xpose.msra.mxu0 0.0
    %3273 = vmatprep.subr.mxu0 0.0
    %3274 = vmatpush2.xpose.msra.mxu0 0.0
    %3275 = vmatprep.subr.mxu0 0.0
    %3276 = vmatpush2.xpose.msra.mxu0 0.0
    %3277 = vmatprep.subr.mxu0 0.0
    %3278 = vmatpush2.xpose.msra.mxu0 0.0
    %3279 = vmatprep.subr.mxu0 0.0
    %3280 = vmatpush2.xpose.msra.mxu0 0.0
    %3281 = vmatprep.subr.mxu0 0.0
    %3282 = vmatpush2.xpose.msra.mxu0 0.0
    %3283 = vmatprep.subr.mxu0 0.0
    %3284 = vmatpush2.xpose.msra.mxu0 0.0
    %3285 = vmatprep.subr.mxu0 0.0
    %3286 = vmatpush2.xpose.msra.mxu0 0.0
    %3287 = vmatprep.subr.mxu0 0.0
    %3288 = vmatpush2.xpose.msra.mxu0 0.0
    %3289 = vmatprep.subr.mxu0 0.0
    %3290 = vmatpush2.xpose.msra.mxu0 0.0
    %3291 = vmatprep.subr.mxu0 0.0
    %3292 = vmatpush2.xpose.msra.mxu0 0.0
    %3293 = vmatprep.subr.mxu0 0.0
    %3294 = vmatpush2.xpose.msra.mxu0 0.0
    %3295 = vmatprep.subr.mxu0 0.0
    %3296 = vmatpush2.xpose.msra.mxu0 0.0
    %3297 = vmatprep.subr.mxu0 0.0
    %3298 = vmatpush2.xpose.msra.mxu0 0.0
    %3299 = vmatprep.subr.mxu0 0.0
    %3300 = vmatpush2.xpose.msra.mxu0 0.0
    %3301 = vmatprep.mubr.f32.mxu0 0.0
    %3302 = vmatmul.mubr.f32.gmra.mxu0 %v3232
    %v3303 = vpop.f32.mrf.mxu0
    %v3304 = vadd.f32 0.0, %v3303
    %v3305 = vpop.f32.mrf.mxu0
    %3306 = vdwg.mxu0
    %v3307 = vsel %vm832, %v3304, -inf
    %3308 = vmax.xlane.f32.xlu0 %v3307
    %v3309 = vpop.xlane.xlu0 %3308
    %v3310 = vsub.f32 %v3304, %v3309
    %v3311 = vmul.f32 %v3310, 1.442695
    %v3312 = vpow.pop %v3311
    %v3313 = vsel %vm832, %v3312, 0.0
    %3314 = vadd.xlane.f32.xlu0 %v3313
    %v3315 = vpop.xlane.xlu0 %3314
    %v3316 = vrcp.pop %v3315
    %v3317 = vmul.f32 %v3312, %v3316
    %v3319 = vsel %vm832, %v3317, 0
    %3321 = vmatprep.subr.mxu0 0.0
    %3322 = vmatpush1.msra.mxu0 0.0
    %3323 = vmatprep.subr.mxu0 0.0
    %3324 = vmatpush1.msra.mxu0 0.0
    %3325 = vmatprep.subr.mxu0 0.0
    %3326 = vmatpush1.msra.mxu0 0.0
    %3327 = vmatprep.subr.mxu0 0.0
    %3328 = vmatpush1.msra.mxu0 0.0
    %3329 = vmatprep.subr.mxu0 0.0
    %3330 = vmatpush1.msra.mxu0 0.0
    %3331 = vmatprep.subr.mxu0 0.0
    %3332 = vmatpush1.msra.mxu0 0.0
    %3333 = vmatprep.subr.mxu0 0.0
    %3334 = vmatpush1.msra.mxu0 0.0
    %3335 = vmatprep.subr.mxu0 0.0
    %3336 = vmatpush1.msra.mxu0 0.0
    %3337 = vmatprep.subr.mxu0 0.0
    %3338 = vmatpush1.msra.mxu0 0.0
    %3339 = vmatprep.subr.mxu0 0.0
    %3340 = vmatpush1.msra.mxu0 0.0
    %3341 = vmatprep.subr.mxu0 0.0
    %3342 = vmatpush1.msra.mxu0 0.0
    %3343 = vmatprep.subr.mxu0 0.0
    %3344 = vmatpush1.msra.mxu0 0.0
    %3345 = vmatprep.subr.mxu0 0.0
    %3346 = vmatpush1.msra.mxu0 0.0
    %3347 = vmatprep.subr.mxu0 0.0
    %3348 = vmatpush1.msra.mxu0 0.0
    %3349 = vmatprep.subr.mxu0 0.0
    %3350 = vmatpush1.msra.mxu0 0.0
    %3351 = vmatprep.subr.mxu0 0.0
    %3352 = vmatpush1.msra.mxu0 %v3228
    %3353 = vmatprep.subr.mxu0 0.0
    %3354 = vmatpush2.msra.mxu0 0.0
    %3355 = vmatprep.subr.mxu0 0.0
    %3356 = vmatpush2.msra.mxu0 0.0
    %3357 = vmatprep.subr.mxu0 0.0
    %3358 = vmatpush2.msra.mxu0 0.0
    %3359 = vmatprep.subr.mxu0 0.0
    %3360 = vmatpush2.msra.mxu0 0.0
    %3361 = vmatprep.subr.mxu0 0.0
    %3362 = vmatpush2.msra.mxu0 0.0
    %3363 = vmatprep.subr.mxu0 0.0
    %3364 = vmatpush2.msra.mxu0 0.0
    %3365 = vmatprep.subr.mxu0 0.0
    %3366 = vmatpush2.msra.mxu0 0.0
    %3367 = vmatprep.subr.mxu0 0.0
    %3368 = vmatpush2.msra.mxu0 0.0
    %3369 = vmatprep.subr.mxu0 0.0
    %3370 = vmatpush2.msra.mxu0 0.0
    %3371 = vmatprep.subr.mxu0 0.0
    %3372 = vmatpush2.msra.mxu0 0.0
    %3373 = vmatprep.subr.mxu0 0.0
    %3374 = vmatpush2.msra.mxu0 0.0
    %3375 = vmatprep.subr.mxu0 0.0
    %3376 = vmatpush2.msra.mxu0 0.0
    %3377 = vmatprep.subr.mxu0 0.0
    %3378 = vmatpush2.msra.mxu0 0.0
    %3379 = vmatprep.subr.mxu0 0.0
    %3380 = vmatpush2.msra.mxu0 0.0
    %3381 = vmatprep.subr.mxu0 0.0
    %3382 = vmatpush2.msra.mxu0 0.0
    %3383 = vmatprep.subr.mxu0 0.0
    %3384 = vmatpush2.msra.mxu0 0.0
    %3385 = vmatprep.mubr.f32.mxu0 0.0
    %3386 = vmatmul.mubr.f32.gmra.mxu0 %v3319
    %v3387 = vpop.f32.mrf.mxu0
    %v3388 = vadd.f32 %v511, %v3387
    %v3389 = vpop.f32.mrf.mxu0
    %3390 = vdwg.mxu0
    %v3391 = vsel %vm250, %v3388, 0.0
    %3392 = vadd.xlane.f32.xlu0 %v3391
    %v3393 = vpop.xlane.xlu0 %3392
    %v3394 = vmul.f32 %v3393, %v920
    %v3395 = vsub.f32 %v3388, %v3394
    %v3396 = vmul.f32 %v3395, %v3395
    %v3397 = vsel %vm250, %v3396, 0.0
    %3398 = vadd.xlane.f32.xlu0 %v3397
    %v3399 = vpop.xlane.xlu0 %3398
    %v3400 = vmul.f32 %v3399, %v920
    %v3401 = vadd.f32 %v3400, 1e-05
    %v3402 = vrsqrt.pop %v3401
    %v3403 = vmul.f32 %v3395, %v3402
    %v3404 = vmul.f32 %v3403, %v1799
    %v3405 = vadd.f32 %v3404, %v1805
    %v3407 = vsel %vm250, %v3405, 0
    %3409 = vmatprep.subr.mxu0 0.0
    %3410 = vmatpush1.msra.mxu0 0.0
    %3411 = vmatprep.subr.mxu0 0.0
    %3412 = vmatpush1.msra.mxu0 0.0
    %3413 = vmatprep.subr.mxu0 0.0
    %3414 = vmatpush1.msra.mxu0 0.0
    %3415 = vmatprep.subr.mxu0 0.0
    %3416 = vmatpush1.msra.mxu0 0.0
    %3417 = vmatprep.subr.mxu0 0.0
    %3418 = vmatpush1.msra.mxu0 0.0
    %3419 = vmatprep.subr.mxu0 0.0
    %3420 = vmatpush1.msra.mxu0 0.0
    %3421 = vmatprep.subr.mxu0 0.0
    %3422 = vmatpush1.msra.mxu0 0.0
    %3423 = vmatprep.subr.mxu0 0.0
    %3424 = vmatpush1.msra.mxu0 0.0
    %3425 = vmatprep.subr.mxu0 0.0
    %3426 = vmatpush1.msra.mxu0 0.0
    %3427 = vmatprep.subr.mxu0 0.0
    %3428 = vmatpush1.msra.mxu0 0.0
    %3429 = vmatprep.subr.mxu0 0.0
    %3430 = vmatpush1.msra.mxu0 0.0
    %3431 = vmatprep.subr.mxu0 0.0
    %3432 = vmatpush1.msra.mxu0 0.0
    %3433 = vmatprep.subr.mxu0 0.0
    %3434 = vmatpush1.msra.mxu0 %v1811
    %3435 = vmatprep.subr.mxu0 0.0
    %3436 = vmatpush1.msra.mxu0 %v1810
    %3437 = vmatprep.subr.mxu0 0.0
    %3438 = vmatpush1.msra.mxu0 %v1809
    %3439 = vmatprep.subr.mxu0 0.0
    %3440 = vmatpush1.msra.mxu0 %v1808
    %3441 = vmatprep.subr.mxu0 0.0
    %3442 = vmatpush2.msra.mxu0 0.0
    %3443 = vmatprep.subr.mxu0 0.0
    %3444 = vmatpush2.msra.mxu0 0.0
    %3445 = vmatprep.subr.mxu0 0.0
    %3446 = vmatpush2.msra.mxu0 0.0
    %3447 = vmatprep.subr.mxu0 0.0
    %3448 = vmatpush2.msra.mxu0 0.0
    %3449 = vmatprep.subr.mxu0 0.0
    %3450 = vmatpush2.msra.mxu0 0.0
    %3451 = vmatprep.subr.mxu0 0.0
    %3452 = vmatpush2.msra.mxu0 0.0
    %3453 = vmatprep.subr.mxu0 0.0
    %3454 = vmatpush2.msra.mxu0 0.0
    %3455 = vmatprep.subr.mxu0 0.0
    %3456 = vmatpush2.msra.mxu0 0.0
    %3457 = vmatprep.subr.mxu0 0.0
    %3458 = vmatpush2.msra.mxu0 0.0
    %3459 = vmatprep.subr.mxu0 0.0
    %3460 = vmatpush2.msra.mxu0 0.0
    %3461 = vmatprep.subr.mxu0 0.0
    %3462 = vmatpush2.msra.mxu0 0.0
    %3463 = vmatprep.subr.mxu0 0.0
    %3464 = vmatpush2.msra.mxu0 0.0
    %3465 = vmatprep.subr.mxu0 0.0
    %3466 = vmatpush2.msra.mxu0 0.0
    %3467 = vmatprep.subr.mxu0 0.0
    %3468 = vmatpush2.msra.mxu0 0.0
    %3469 = vmatprep.subr.mxu0 0.0
    %3470 = vmatpush2.msra.mxu0 0.0
    %3471 = vmatprep.subr.mxu0 0.0
    %3472 = vmatpush2.msra.mxu0 0.0
    %3473 = vmatprep.mubr.f32.mxu0 0.0
    %3474 = vmatmul.mubr.f32.gmra.mxu0 %v3407
    %v3475 = vpop.f32.mrf.mxu0
    %v3476 = vadd.f32 %v1817, %v3475
    %v3477 = vpop.f32.mrf.mxu0
    %3478 = vdwg.mxu0
    %3479 = vmatprep.subr.mxu0 0.0
    %3480 = vmatpush1.msra.mxu0 0.0
    %3481 = vmatprep.subr.mxu0 0.0
    %3482 = vmatpush1.msra.mxu0 0.0
    %3483 = vmatprep.subr.mxu0 0.0
    %3484 = vmatpush1.msra.mxu0 0.0
    %3485 = vmatprep.subr.mxu0 0.0
    %3486 = vmatpush1.msra.mxu0 0.0
    %3487 = vmatprep.subr.mxu0 0.0
    %3488 = vmatpush1.msra.mxu0 0.0
    %3489 = vmatprep.subr.mxu0 0.0
    %3490 = vmatpush1.msra.mxu0 0.0
    %3491 = vmatprep.subr.mxu0 0.0
    %3492 = vmatpush1.msra.mxu0 0.0
    %3493 = vmatprep.subr.mxu0 0.0
    %3494 = vmatpush1.msra.mxu0 0.0
    %3495 = vmatprep.subr.mxu0 0.0
    %3496 = vmatpush1.msra.mxu0 0.0
    %3497 = vmatprep.subr.mxu0 0.0
    %3498 = vmatpush1.msra.mxu0 0.0
    %3499 = vmatprep.subr.mxu0 0.0
    %3500 = vmatpush1.msra.mxu0 0.0
    %3501 = vmatprep.subr.mxu0 0.0
    %3502 = vmatpush1.msra.mxu0 0.0
    %3503 = vmatprep.subr.mxu0 0.0
    %3504 = vmatpush1.msra.mxu0 %v1895
    %3505 = vmatprep.subr.mxu0 0.0
    %3506 = vmatpush1.msra.mxu0 %v1894
    %3507 = vmatprep.subr.mxu0 0.0
    %3508 = vmatpush1.msra.mxu0 %v1893
    %3509 = vmatprep.subr.mxu0 0.0
    %3510 = vmatpush1.msra.mxu0 %v1892
    %3511 = vmatprep.subr.mxu0 0.0
    %3512 = vmatpush2.msra.mxu0 0.0
    %3513 = vmatprep.subr.mxu0 0.0
    %3514 = vmatpush2.msra.mxu0 0.0
    %3515 = vmatprep.subr.mxu0 0.0
    %3516 = vmatpush2.msra.mxu0 0.0
    %3517 = vmatprep.subr.mxu0 0.0
    %3518 = vmatpush2.msra.mxu0 0.0
    %3519 = vmatprep.subr.mxu0 0.0
    %3520 = vmatpush2.msra.mxu0 0.0
    %3521 = vmatprep.subr.mxu0 0.0
    %3522 = vmatpush2.msra.mxu0 0.0
    %3523 = vmatprep.subr.mxu0 0.0
    %3524 = vmatpush2.msra.mxu0 0.0
    %3525 = vmatprep.subr.mxu0 0.0
    %3526 = vmatpush2.msra.mxu0 0.0
    %3527 = vmatprep.subr.mxu0 0.0
    %3528 = vmatpush2.msra.mxu0 0.0
    %3529 = vmatprep.subr.mxu0 0.0
    %3530 = vmatpush2.msra.mxu0 0.0
    %3531 = vmatprep.subr.mxu0 0.0
    %3532 = vmatpush2.msra.mxu0 0.0
    %3533 = vmatprep.subr.mxu0 0.0
    %3534 = vmatpush2.msra.mxu0 0.0
    %3535 = vmatprep.subr.mxu0 0.0
    %3536 = vmatpush2.msra.mxu0 0.0
    %3537 = vmatprep.subr.mxu0 0.0
    %3538 = vmatpush2.msra.mxu0 0.0
    %3539 = vmatprep.subr.mxu0 0.0
    %3540 = vmatpush2.msra.mxu0 0.0
    %3541 = vmatprep.subr.mxu0 0.0
    %3542 = vmatpush2.msra.mxu0 0.0
    %3543 = vmatprep.mubr.f32.mxu0 0.0
    %3544 = vmatmul.mubr.f32.gmra.mxu0 %v3086
    %v3545 = vpop.f32.mrf.mxu0
    %v3546 = vadd.f32 %v1900, %v3545
    %v3547 = vpop.f32.mrf.mxu0
    %3548 = vdwg.mxu0
    %3549 = vmatprep.subr.mxu0 0.0
    %3550 = vmatpush1.msra.mxu0 0.0
    %3551 = vmatprep.subr.mxu0 0.0
    %3552 = vmatpush1.msra.mxu0 0.0
    %3553 = vmatprep.subr.mxu0 0.0
    %3554 = vmatpush1.msra.mxu0 0.0
    %3555 = vmatprep.subr.mxu0 0.0
    %3556 = vmatpush1.msra.mxu0 0.0
    %3557 = vmatprep.subr.mxu0 0.0
    %3558 = vmatpush1.msra.mxu0 0.0
    %3559 = vmatprep.subr.mxu0 0.0
    %3560 = vmatpush1.msra.mxu0 0.0
    %3561 = vmatprep.subr.mxu0 0.0
    %3562 = vmatpush1.msra.mxu0 0.0
    %3563 = vmatprep.subr.mxu0 0.0
    %3564 = vmatpush1.msra.mxu0 0.0
    %3565 = vmatprep.subr.mxu0 0.0
    %3566 = vmatpush1.msra.mxu0 0.0
    %3567 = vmatprep.subr.mxu0 0.0
    %3568 = vmatpush1.msra.mxu0 0.0
    %3569 = vmatprep.subr.mxu0 0.0
    %3570 = vmatpush1.msra.mxu0 0.0
    %3571 = vmatprep.subr.mxu0 0.0
    %3572 = vmatpush1.msra.mxu0 0.0
    %3573 = vmatprep.subr.mxu0 0.0
    %3574 = vmatpush1.msra.mxu0 %v1975
    %3575 = vmatprep.subr.mxu0 0.0
    %3576 = vmatpush1.msra.mxu0 %v1974
    %3577 = vmatprep.subr.mxu0 0.0
    %3578 = vmatpush1.msra.mxu0 %v1973
    %3579 = vmatprep.subr.mxu0 0.0
    %3580 = vmatpush1.msra.mxu0 %v1972
    %3581 = vmatprep.subr.mxu0 0.0
    %3582 = vmatpush2.msra.mxu0 0.0
    %3583 = vmatprep.subr.mxu0 0.0
    %3584 = vmatpush2.msra.mxu0 0.0
    %3585 = vmatprep.subr.mxu0 0.0
    %3586 = vmatpush2.msra.mxu0 0.0
    %3587 = vmatprep.subr.mxu0 0.0
    %3588 = vmatpush2.msra.mxu0 0.0
    %3589 = vmatprep.subr.mxu0 0.0
    %3590 = vmatpush2.msra.mxu0 0.0
    %3591 = vmatprep.subr.mxu0 0.0
    %3592 = vmatpush2.msra.mxu0 0.0
    %3593 = vmatprep.subr.mxu0 0.0
    %3594 = vmatpush2.msra.mxu0 0.0
    %3595 = vmatprep.subr.mxu0 0.0
    %3596 = vmatpush2.msra.mxu0 0.0
    %3597 = vmatprep.subr.mxu0 0.0
    %3598 = vmatpush2.msra.mxu0 0.0
    %3599 = vmatprep.subr.mxu0 0.0
    %3600 = vmatpush2.msra.mxu0 0.0
    %3601 = vmatprep.subr.mxu0 0.0
    %3602 = vmatpush2.msra.mxu0 0.0
    %3603 = vmatprep.subr.mxu0 0.0
    %3604 = vmatpush2.msra.mxu0 0.0
    %3605 = vmatprep.subr.mxu0 0.0
    %3606 = vmatpush2.msra.mxu0 0.0
    %3607 = vmatprep.subr.mxu0 0.0
    %3608 = vmatpush2.msra.mxu0 0.0
    %3609 = vmatprep.subr.mxu0 0.0
    %3610 = vmatpush2.msra.mxu0 0.0
    %3611 = vmatprep.subr.mxu0 0.0
    %3612 = vmatpush2.msra.mxu0 0.0
    %3613 = vmatprep.mubr.f32.mxu0 0.0
    %3614 = vmatmul.mubr.f32.gmra.mxu0 %v3159
    %v3615 = vpop.f32.mrf.mxu0
    %v3616 = vadd.f32 %v1980, %v3615
    %v3617 = vpop.f32.mrf.mxu0
    %3618 = vdwg.mxu0
    %v3620 = vsel %vm250, %v3476, 0
    %v3623 = vsel %vm250, %v3546, 0
    %3625 = vmatprep.subr.mxu0 0.0
    %3626 = vmatpush1.xpose.msra.mxu0 0.0
    %3627 = vmatprep.subr.mxu0 0.0
    %3628 = vmatpush1.xpose.msra.mxu0 0.0
    %3629 = vmatprep.subr.mxu0 0.0
    %3630 = vmatpush1.xpose.msra.mxu0 0.0
    %3631 = vmatprep.subr.mxu0 0.0
    %3632 = vmatpush1.xpose.msra.mxu0 0.0
    %3633 = vmatprep.subr.mxu0 0.0
    %3634 = vmatpush1.xpose.msra.mxu0 0.0
    %3635 = vmatprep.subr.mxu0 0.0
    %3636 = vmatpush1.xpose.msra.mxu0 0.0
    %3637 = vmatprep.subr.mxu0 0.0
    %3638 = vmatpush1.xpose.msra.mxu0 0.0
    %3639 = vmatprep.subr.mxu0 0.0
    %3640 = vmatpush1.xpose.msra.mxu0 0.0
    %3641 = vmatprep.subr.mxu0 0.0
    %3642 = vmatpush1.xpose.msra.mxu0 0.0
    %3643 = vmatprep.subr.mxu0 0.0
    %3644 = vmatpush1.xpose.msra.mxu0 0.0
    %3645 = vmatprep.subr.mxu0 0.0
    %3646 = vmatpush1.xpose.msra.mxu0 0.0
    %3647 = vmatprep.subr.mxu0 0.0
    %3648 = vmatpush1.xpose.msra.mxu0 0.0
    %3649 = vmatprep.subr.mxu0 0.0
    %3650 = vmatpush1.xpose.msra.mxu0 0.0
    %3651 = vmatprep.subr.mxu0 0.0
    %3652 = vmatpush1.xpose.msra.mxu0 0.0
    %3653 = vmatprep.subr.mxu0 0.0
    %3654 = vmatpush1.xpose.msra.mxu0 0.0
    %3655 = vmatprep.subr.mxu0 0.0
    %3656 = vmatpush1.xpose.msra.mxu0 %v3623
    %3657 = vmatprep.subr.mxu0 0.0
    %3658 = vmatpush2.xpose.msra.mxu0 0.0
    %3659 = vmatprep.subr.mxu0 0.0
    %3660 = vmatpush2.xpose.msra.mxu0 0.0
    %3661 = vmatprep.subr.mxu0 0.0
    %3662 = vmatpush2.xpose.msra.mxu0 0.0
    %3663 = vmatprep.subr.mxu0 0.0
    %3664 = vmatpush2.xpose.msra.mxu0 0.0
    %3665 = vmatprep.subr.mxu0 0.0
    %3666 = vmatpush2.xpose.msra.mxu0 0.0
    %3667 = vmatprep.subr.mxu0 0.0
    %3668 = vmatpush2.xpose.msra.mxu0 0.0
    %3669 = vmatprep.subr.mxu0 0.0
    %3670 = vmatpush2.xpose.msra.mxu0 0.0
    %3671 = vmatprep.subr.mxu0 0.0
    %3672 = vmatpush2.xpose.msra.mxu0 0.0
    %3673 = vmatprep.subr.mxu0 0.0
    %3674 = vmatpush2.xpose.msra.mxu0 0.0
    %3675 = vmatprep.subr.mxu0 0.0
    %3676 = vmatpush2.xpose.msra.mxu0 0.0
    %3677 = vmatprep.subr.mxu0 0.0
    %3678 = vmatpush2.xpose.msra.mxu0 0.0
    %3679 = vmatprep.subr.mxu0 0.0
    %3680 = vmatpush2.xpose.msra.mxu0 0.0
    %3681 = vmatprep.subr.mxu0 0.0
    %3682 = vmatpush2.xpose.msra.mxu0 0.0
    %3683 = vmatprep.subr.mxu0 0.0
    %3684 = vmatpush2.xpose.msra.mxu0 0.0
    %3685 = vmatprep.subr.mxu0 0.0
    %3686 = vmatpush2.xpose.msra.mxu0 0.0
    %3687 = vmatprep.subr.mxu0 0.0
    %3688 = vmatpush2.xpose.msra.mxu0 0.0
    %3689 = vmatprep.mubr.f32.mxu0 0.0
    %3690 = vmatmul.mubr.f32.gmra.mxu0 %v3620
    %v3691 = vpop.f32.mrf.mxu0
    %v3692 = vadd.f32 0.0, %v3691
    %v3693 = vpop.f32.mrf.mxu0
    %3694 = vdwg.mxu0
    %v3695 = vsel %vm832, %v3692, -inf
    %3696 = vmax.xlane.f32.xlu0 %v3695
    %v3697 = vpop.xlane.xlu0 %3696
    %v3698 = vsub.f32 %v3692, %v3697
    %v3699 = vmul.f32 %v3698, 1.442695
    %v3700 = vpow.pop %v3699
    %v3701 = vsel %vm832, %v3700, 0.0
    %3702 = vadd.xlane.f32.xlu0 %v3701
    %v3703 = vpop.xlane.xlu0 %3702
    %v3704 = vrcp.pop %v3703
    %v3705 = vmul.f32 %v3700, %v3704
    %v3707 = vsel %vm832, %v3705, 0
    %3709 = vmatprep.subr.mxu0 0.0
    %3710 = vmatpush1.msra.mxu0 0.0
    %3711 = vmatprep.subr.mxu0 0.0
    %3712 = vmatpush1.msra.mxu0 0.0
    %3713 = vmatprep.subr.mxu0 0.0
    %3714 = vmatpush1.msra.mxu0 0.0
    %3715 = vmatprep.subr.mxu0 0.0
    %3716 = vmatpush1.msra.mxu0 0.0
    %3717 = vmatprep.subr.mxu0 0.0
    %3718 = vmatpush1.msra.mxu0 0.0
    %3719 = vmatprep.subr.mxu0 0.0
    %3720 = vmatpush1.msra.mxu0 0.0
    %3721 = vmatprep.subr.mxu0 0.0
    %3722 = vmatpush1.msra.mxu0 0.0
    %3723 = vmatprep.subr.mxu0 0.0
    %3724 = vmatpush1.msra.mxu0 0.0
    %3725 = vmatprep.subr.mxu0 0.0
    %3726 = vmatpush1.msra.mxu0 0.0
    %3727 = vmatprep.subr.mxu0 0.0
    %3728 = vmatpush1.msra.mxu0 0.0
    %3729 = vmatprep.subr.mxu0 0.0
    %3730 = vmatpush1.msra.mxu0 0.0
    %3731 = vmatprep.subr.mxu0 0.0
    %3732 = vmatpush1.msra.mxu0 0.0
    %3733 = vmatprep.subr.mxu0 0.0
    %3734 = vmatpush1.msra.mxu0 0.0
    %3735 = vmatprep.subr.mxu0 0.0
    %3736 = vmatpush1.msra.mxu0 0.0
    %3737 = vmatprep.subr.mxu0 0.0
    %3738 = vmatpush1.msra.mxu0 0.0
    %3739 = vmatprep.subr.mxu0 0.0
    %3740 = vmatpush1.msra.mxu0 %v3616
    %3741 = vmatprep.subr.mxu0 0.0
    %3742 = vmatpush2.msra.mxu0 0.0
    %3743 = vmatprep.subr.mxu0 0.0
    %3744 = vmatpush2.msra.mxu0 0.0
    %3745 = vmatprep.subr.mxu0 0.0
    %3746 = vmatpush2.msra.mxu0 0.0
    %3747 = vmatprep.subr.mxu0 0.0
    %3748 = vmatpush2.msra.mxu0 0.0
    %3749 = vmatprep.subr.mxu0 0.0
    %3750 = vmatpush2.msra.mxu0 0.0
    %3751 = vmatprep.subr.mxu0 0.0
    %3752 = vmatpush2.msra.mxu0 0.0
    %3753 = vmatprep.subr.mxu0 0.0
    %3754 = vmatpush2.msra.mxu0 0.0
    %3755 = vmatprep.subr.mxu0 0.0
    %3756 = vmatpush2.msra.mxu0 0.0
    %3757 = vmatprep.subr.mxu0 0.0
    %3758 = vmatpush2.msra.mxu0 0.0
    %3759 = vmatprep.subr.mxu0 0.0
    %3760 = vmatpush2.msra.mxu0 0.0
    %3761 = vmatprep.subr.mxu0 0.0
    %3762 = vmatpush2.msra.mxu0 0.0
    %3763 = vmatprep.subr.mxu0 0.0
    %3764 = vmatpush2.msra.mxu0 0.0
    %3765 = vmatprep.subr.mxu0 0.0
    %3766 = vmatpush2.msra.mxu0 0.0
    %3767 = vmatprep.subr.mxu0 0.0
    %3768 = vmatpush2.msra.mxu0 0.0
    %3769 = vmatprep.subr.mxu0 0.0
    %3770 = vmatpush2.msra.mxu0 0.0
    %3771 = vmatprep.subr.mxu0 0.0
    %3772 = vmatpush2.msra.mxu0 0.0
    %3773 = vmatprep.mubr.f32.mxu0 0.0
    %3774 = vmatmul.mubr.f32.gmra.mxu0 %v3707
    %v3775 = vpop.f32.mrf.mxu0
    %v3776 = vadd.f32 %v3405, %v3775
    %v3777 = vpop.f32.mrf.mxu0
    %3778 = vdwg.mxu0
    %v3779 = vsel %vm250, %v3776, 0.0
    %3780 = vadd.xlane.f32.xlu0 %v3779
    %v3781 = vpop.xlane.xlu0 %3780
    %v3782 = vmul.f32 %v3781, %v920
    %v3783 = vsub.f32 %v3776, %v3782
    %v3784 = vmul.f32 %v3783, %v3783
    %v3785 = vsel %vm250, %v3784, 0.0
    %3786 = vadd.xlane.f32.xlu0 %v3785
    %v3787 = vpop.xlane.xlu0 %3786
    %v3788 = vmul.f32 %v3787, %v920
    %v3789 = vadd.f32 %v3788, 1e-05
    %v3790 = vrsqrt.pop %v3789
    %v3791 = vmul.f32 %v3783, %v3790
    %v3792 = vmul.f32 %v3791, %v2228
    %v3793 = vadd.f32 %v3792, %v2234
    %3794 = vst.msk [vmem:[#allocation5] sm:$0xff] %vm250, %v2235
    %3795 = vst.msk [vmem:[#allocation5 + $0x8] sm:$0xff] %vm250, %v3793
    // Predicated region
    $region42: #{tpu_custom_call.1} parent=1 // pred_check
      _
    $region43: #{tpu_custom_call.1} parent=1 // pred_check_branch
      %3797 = sbr.rel (0) target = $region45
    $region44: #{tpu_custom_call.1} parent=1 // pred_region
      %s3799 = ssub.s32 256, 256
      %3800 = vsyncadd [#allocation4], %s3799
      %s3801 = sshll.u32 [#allocation5], 4
      %s3802 = int_to_ptr.vmem [resolvable:$true] %s3801
      %3807 = dma.vmem_to_hbm [thread:$0]  %s3802, 256, %s9, [#allocation4], 128, 128, 8
    $region45: #{tpu_custom_call.1} parent=1 // pred_fallthru
      _
    // Predicated region
    $region46: #{tpu_custom_call.1} parent=1 // pred_check
      _
    $region47: #{tpu_custom_call.1} parent=1 // pred_check_branch
      %3809 = sbr.rel (0) target = $region49
    $region48: #{tpu_custom_call.1} parent=1 // pred_region
      %3810 = dma.done [#allocation4], 256
    $region49: #{tpu_custom_call.1} parent=1 // pred_fallthru
      _
    %3811 = vsyncpa [#allocation3], 1
    %3812 = vsyncpa [#allocation4], 1

</llo_original>
